<compile_context>
chip_gen: v7x
topology: tpu7x:2x2x1
jax: 0.10.0
libtpu: 0.0.40
codegen_flags: <defaults>
</compile_context>

<pallas_src>
import functools
import math

import jax
import jax.numpy as jnp
from jax.experimental import pallas as pl
from jax.experimental.pallas import tpu as pltpu


# ----------------------------------------------------------------------------
# K-tile selection (budget driven)
# ----------------------------------------------------------------------------
_VMEM_BUDGET = 40 * 1024 * 1024   # conservative: fits v7x's 64 MiB physical VMEM


def _pick_k_tile(K, per_k_bytes, avail_bytes, align=256):
    """Largest `align`-aligned divisor of K whose double-buffered (x + w_fc1)
    K-tile fits `avail_bytes`; prefer >= 2 grid steps so the weight DMA of
    step k+1 overlaps the matmul of step k."""
    cands = [d for d in range(align, K + 1, align) if K % d == 0]
    if not cands:
        cands = [K]
    cands.sort(reverse=True)
    fitting = [t for t in cands if 2 * t * per_k_bytes <= avail_bytes]
    if not fitting:
        return cands[-1]                     # smallest aligned divisor
    multi = [t for t in fitting if K // t >= 2]
    return multi[0] if multi else fitting[0]


# ----------------------------------------------------------------------------
# Fused Pallas kernel
# ----------------------------------------------------------------------------
def _hhn_mlp_kernel(f_ref, x_ref, w1_ref, b1_ref, *rest,
                    n_hidden, n_dims, n_units, eps):
    """Fused HHN MLP forward.

    f_ref : (D,)           SMEM  softmaxed hyper factors
    x_ref : (B, tk)        VMEM  K-tile of flattened input (f32)
    w1_ref: (tk, D*N)      VMEM  K-tile of interleaved fc1 weights (bf16)
    b1_ref: (D, 1, N)      VMEM  (f32)
    wh_ref: (L, D, N, N)   VMEM  hidden weight stacks (bf16, resident)
    bh_ref: (L, D, 1, N)   VMEM
    g_ref : (L, 1, N)      VMEM  BatchNorm gamma
    be_ref: (L, 1, N)      VMEM  BatchNorm beta
    w2_ref: (D, N, Cp)     VMEM  (bf16)
    b2_ref: (D, 1, Cp)     VMEM
    o_ref : (B, Cp)        VMEM  logits (lane-padded)
    acc_ref: (B, D*N) f32  VMEM scratch accumulated across the K grid
    """
    if n_hidden > 0:
        (wh_ref, bh_ref, g_ref, be_ref, w2_ref, b2_ref, o_ref, acc_ref) = rest
    else:
        (w2_ref, b2_ref, o_ref, acc_ref) = rest
        wh_ref = bh_ref = g_ref = be_ref = None

    k = pl.program_id(0)
    D, N = n_dims, n_units

    @pl.when(k == 0)
    def _init():
        acc_ref[...] = jnp.zeros_like(acc_ref)

    # One lane-dense MXU matmul per grid step; weights upcast bf16 -> f32 so
    # accumulation stays f32 (the DMA stream stays bf16).
    acc_ref[...] += jnp.dot(
        x_ref[...], w1_ref[...].astype(jnp.float32),
        preferred_element_type=jnp.float32)

    @pl.when(k == pl.num_programs(0) - 1)
    def _finalize():
        def mix_bias(b):                       # (D, 1, M) -> (1, M)
            out = f_ref[0] * b[0]
            for d in range(1, D):
                out = out + f_ref[d] * b[d]
            return out

        def mixed_linear(h, w, b):             # w: (D, Kin, Mout) bf16
            y = f_ref[0] * jnp.dot(h, w[0].astype(jnp.float32),
                                   preferred_element_type=jnp.float32)
            for d in range(1, D):
                y = y + f_ref[d] * jnp.dot(h, w[d].astype(jnp.float32),
                                           preferred_element_type=jnp.float32)
            return y + mix_bias(b)

        # fc1: un-interleave the (B, D*N) accumulator with the hyper factors
        # (D static lane-slice adds, done once), add mixed bias, ReLU.
        acc = acc_ref[...]
        h = f_ref[0] * acc[:, 0:N]
        for d in range(1, D):
            h = h + f_ref[d] * acc[:, d * N:(d + 1) * N]
        h = jnp.maximum(h + mix_bias(b1_ref), 0.0)

        # Hidden layers: weighted Linear -> BatchNorm1d (training-mode batch
        # stats + affine) -> ReLU, on the resident (B, N) block.
        for l in range(n_hidden):
            y = mixed_linear(h, wh_ref[l], bh_ref[l])
            mean = jnp.mean(y, axis=0, keepdims=True)
            var = jnp.mean((y - mean) ** 2, axis=0, keepdims=True)   # biased
            yhat = (y - mean) * jax.lax.rsqrt(var + eps)
            h = jnp.maximum(yhat * g_ref[l] + be_ref[l], 0.0)
            # TODO(synk): BatchNorm running-stat updates not materialized.

        # fc2 (no activation); output lane-padded -> full-width vst.
        o_ref[...] = mixed_linear(h, w2_ref, b2_ref)


def hhn_mlp_fused(f, x, w_fc1, b_fc1, w_hidden, b_hidden, bn_gamma, bn_beta,
                  w_fc2, b_fc2, *, eps=1e-5):
    """f (D,), x (B,K) f32, w_fc1 (K, D*N) bf16 interleaved,
    w_hidden (L,D,N,N) bf16 or None, w_fc2 (D,N,C) bf16 -> logits (B,C) f32."""
    B, K = x.shape
    D = b_fc1.shape[0]
    N = b_fc1.shape[-1]
    C = w_fc2.shape[-1]
    L = 0 if w_hidden is None else w_hidden.shape[0]

    # ---- robustness: pad K to the tile alignment (no-op for 96*96*n_channels)
    K_ALIGN = 256
    K_pad = ((K + K_ALIGN - 1) // K_ALIGN) * K_ALIGN
    if K_pad != K:
        x = jnp.pad(x, ((0, 0), (0, K_pad - K)))
        w_fc1 = jnp.pad(w_fc1, ((0, K_pad - K), (0, 0)))

    # ---- pad the class dim to a full 128-lane width (unmasked final store)
    C_pad = ((C + 127) // 128) * 128
    if C_pad != C:
        w_fc2 = jnp.pad(w_fc2, ((0, 0), (0, 0), (0, C_pad - C)))
        b_fc2 = jnp.pad(b_fc2, ((0, 0), (0, 0), (0, C_pad - C)))

    # ---- VMEM-budget-driven K tile
    w_itemsize = w_fc1.dtype.itemsize                       # 2 (bf16)
    per_k_bytes = D * N * w_itemsize + B * x.dtype.itemsize  # fc1 row + x col
    resident = 0
    if L > 0:
        resident += L * D * N * N * w_hidden.dtype.itemsize  # hidden weights
        resident += (L * D * N + 2 * L * N) * 4               # hidden bias + bn
    resident += D * N * C_pad * w_fc2.dtype.itemsize          # fc2 weights
    resident += (D * N + D * C_pad) * 4                       # fc1/fc2 bias
    resident += (B * D * N + B * C_pad) * 4                   # acc scratch + out
    tk = _pick_k_tile(K_pad, per_k_bytes, _VMEM_BUDGET - 2 * resident, K_ALIGN)
    nk = K_pad // tk

    est = 2 * tk * per_k_bytes + 2 * resident + (4 << 20)     # + f32 upcast temp
    vmem_limit = int(min(max(2 * est, 32 << 20), 56 << 20))

    in_specs = [
        pl.BlockSpec(memory_space=pltpu.MemorySpace.SMEM),            # f
        pl.BlockSpec((B, tk), lambda k: (0, k)),                      # x
        pl.BlockSpec((tk, D * N), lambda k: (k, 0)),                  # w_fc1
        pl.BlockSpec((D, 1, N), lambda k: (0, 0, 0)),                 # b_fc1
    ]
    args = [f, x, w_fc1, b_fc1]
    if L > 0:
        in_specs += [
            pl.BlockSpec((L, D, N, N), lambda k: (0, 0, 0, 0)),       # w_hidden
            pl.BlockSpec((L, D, 1, N), lambda k: (0, 0, 0, 0)),       # b_hidden
            pl.BlockSpec((L, 1, N), lambda k: (0, 0, 0)),             # bn gamma
            pl.BlockSpec((L, 1, N), lambda k: (0, 0, 0)),             # bn beta
        ]
        args += [w_hidden, b_hidden, bn_gamma, bn_beta]
    in_specs += [
        pl.BlockSpec((D, N, C_pad), lambda k: (0, 0, 0)),             # w_fc2
        pl.BlockSpec((D, 1, C_pad), lambda k: (0, 0, 0)),             # b_fc2
    ]
    args += [w_fc2, b_fc2]

    kernel = functools.partial(_hhn_mlp_kernel, n_hidden=L, n_dims=D,
                               n_units=N, eps=eps)
    out = pl.pallas_call(
        kernel,
        out_shape=jax.ShapeDtypeStruct((B, C_pad), jnp.float32),
        grid_spec=pltpu.PrefetchScalarGridSpec(
            num_scalar_prefetch=0,
            grid=(nk,),                                    # K reduction axis
            in_specs=in_specs,
            out_specs=pl.BlockSpec((B, C_pad), lambda k: (0, 0)),
            scratch_shapes=[pltpu.VMEM((B, D * N), jnp.float32)],
        ),
        compiler_params=pltpu.CompilerParams(
            dimension_semantics=("arbitrary",),
            vmem_limit_bytes=vmem_limit,
        ),
    )(*args)
    return out[:, :C]


# ----------------------------------------------------------------------------
# Parameter construction (deterministic, mirrors the PyTorch __init__ shapes;
# weight stacks are stored transposed (in, out), interleaved for fc1, bf16).
# ----------------------------------------------------------------------------
def _linear_init(key, out_features, in_features):
    """kaiming_uniform_(a=sqrt(5)) -> U(-1/sqrt(fan_in), 1/sqrt(fan_in))."""
    kw, kb = jax.random.split(key)
    bound = 1.0 / math.sqrt(in_features)
    w = jax.random.uniform(kw, (out_features, in_features), jnp.float32,
                           -bound, bound)
    b = jax.random.uniform(kb, (out_features,), jnp.float32, -bound, bound)
    return w, b


def _param_combination(key, dimensions, in_features, out_features):
    keys = jax.random.split(key, dimensions)
    ws, bs = [], []
    for k in keys:
        w, b = _linear_init(k, out_features, in_features)
        ws.append(w.T)                                  # store as (in, out)
        bs.append(b)
    return jnp.stack(ws), jnp.stack(bs)[:, None, :]     # (D,in,out), (D,1,out)


def init_hhn_mlpb_params(key, hin, dimensions, n_layers, n_units, n_channels,
                         n_classes=10):
    in_features = 96 * 96 * n_channels
    keys = jax.random.split(key, 4 + max(n_layers - 1, 0))
    hyper_w1, hyper_b1 = _linear_init(keys[0], 64, hin)
    hyper_w2, hyper_b2 = _linear_init(keys[1], dimensions, 64)

    w1_stack, b_fc1 = _param_combination(keys[2], dimensions, in_features,
                                         n_units)
    # Interleaved MXU-native HBM layout (K, D*N); bf16 halves the weight stream.
    w_fc1 = jnp.transpose(w1_stack, (1, 0, 2)).reshape(
        in_features, dimensions * n_units).astype(jnp.bfloat16)

    L = max(n_layers - 1, 0)
    if L > 0:
        ws, bs = [], []
        for i in range(L):
            w, b = _param_combination(keys[4 + i], dimensions, n_units, n_units)
            ws.append(w)
            bs.append(b)
        w_hidden = jnp.stack(ws).astype(jnp.bfloat16)   # (L, D, N, N)
        b_hidden = jnp.stack(bs)                        # (L, D, 1, N)
        bn_gamma = jnp.ones((L, 1, n_units), jnp.float32)
        bn_beta = jnp.zeros((L, 1, n_units), jnp.float32)
    else:
        w_hidden = b_hidden = bn_gamma = bn_beta = None

    w2_stack, b_fc2 = _param_combination(keys[3], dimensions, n_units,
                                         n_classes)
    w_fc2 = w2_stack.astype(jnp.bfloat16)               # (D, N, C)

    return dict(
        hyper_w1=hyper_w1, hyper_b1=hyper_b1,
        hyper_w2=hyper_w2, hyper_b2=hyper_b2,
        w_fc1=w_fc1, b_fc1=b_fc1,
        w_hidden=w_hidden, b_hidden=b_hidden,
        bn_gamma=bn_gamma, bn_beta=bn_beta,
        w_fc2=w_fc2, b_fc2=b_fc2,
    )


# ----------------------------------------------------------------------------
# Forward pass (single fused Pallas kernel + plain-JAX glue for hyper stack)
# ----------------------------------------------------------------------------
def hhn_mlpb_forward(params, x, hyper_x, eps=1e-5):
    # hyper_stack: Linear -> ReLU -> Linear -> Softmax(dim=0)  (tiny; JAX glue)
    h = jnp.maximum(hyper_x @ params["hyper_w1"].T + params["hyper_b1"], 0.0)
    f = jax.nn.softmax(h @ params["hyper_w2"].T + params["hyper_b2"], axis=0)

    z = x.reshape(x.shape[0], -1)            # row-major == torch.flatten
    return hhn_mlp_fused(f, z,
                         params["w_fc1"], params["b_fc1"],
                         params["w_hidden"], params["b_hidden"],
                         params["bn_gamma"], params["bn_beta"],
                         params["w_fc2"], params["b_fc2"], eps=eps)


# Pure-JAX reference (correctness check only; uses the same bf16-stored weights).
def hhn_mlpb_forward_ref(params, x, hyper_x, eps=1e-5):
    h = jnp.maximum(hyper_x @ params["hyper_w1"].T + params["hyper_b1"], 0.0)
    f = jax.nn.softmax(h @ params["hyper_w2"].T + params["hyper_b2"], axis=0)

    def wsum(stack):
        return jnp.tensordot(f, stack, axes=1)

    z = x.reshape(x.shape[0], -1)
    K = z.shape[1]
    D = params["b_fc1"].shape[0]
    N = params["b_fc1"].shape[-1]
    w1 = params["w_fc1"].astype(jnp.float32).reshape(K, D, N).transpose(1, 0, 2)
    z = jnp.maximum(z @ wsum(w1) + wsum(params["b_fc1"])[0], 0.0)

    L = 0 if params["w_hidden"] is None else params["w_hidden"].shape[0]
    for l in range(L):
        wl = params["w_hidden"][l].astype(jnp.float32)
        z = z @ wsum(wl) + wsum(params["b_hidden"][l])[0]
        mean = z.mean(axis=0, keepdims=True)
        var = ((z - mean) ** 2).mean(axis=0, keepdims=True)
        z = (z - mean) / jnp.sqrt(var + eps)
        z = jnp.maximum(z * params["bn_gamma"][l] + params["bn_beta"][l], 0.0)

    w2 = params["w_fc2"].astype(jnp.float32)
    return z @ wsum(w2) + wsum(params["b_fc2"])[0]


if __name__ == "__main__":
    # Small config consistent with the module: 96x96 images (the module
    # hard-codes 96*96*n_channels input features), 1 channel, batch 2.
    hin, dimensions, n_layers, n_units, n_channels, n_classes = 8, 4, 3, 32, 1, 10

    key = jax.random.PRNGKey(0)
    k_params, k_x, k_h = jax.random.split(key, 3)
    params = init_hhn_mlpb_params(k_params, hin, dimensions, n_layers,
                                  n_units, n_channels, n_classes)

    x = jax.random.normal(k_x, (2, n_channels, 96, 96), jnp.float32)   # NCHW
    hyper_x = jax.random.normal(k_h, (hin,), jnp.float32)

    out = jax.block_until_ready(hhn_mlpb_forward(params, x, hyper_x))
    ref = jax.block_until_ready(hhn_mlpb_forward_ref(params, x, hyper_x))

    assert out.shape == (2, n_classes), out.shape
    assert jnp.allclose(out, ref, rtol=1e-2, atol=1e-2), (out, ref)

    print("KERNEL_OK")
</pallas_src>

<mosaic_0001>
module attributes {stable_mosaic.version = 11 : i64} {
  func.func @_hhn_mlp_kernel(%arg0: i32, %arg1: memref<4xf32, #tpu.memory_space<smem>>, %arg2: memref<2x4608xf32, #tpu.memory_space<vmem>>, %arg3: memref<4608x128xbf16, #tpu.memory_space<vmem>>, %arg4: memref<4x1x32xf32, #tpu.memory_space<vmem>>, %arg5: memref<2x4x32x32xbf16, #tpu.memory_space<vmem>>, %arg6: memref<2x4x1x32xf32, #tpu.memory_space<vmem>>, %arg7: memref<2x1x32xf32, #tpu.memory_space<vmem>>, %arg8: memref<2x1x32xf32, #tpu.memory_space<vmem>>, %arg9: memref<4x32x128xbf16, #tpu.memory_space<vmem>>, %arg10: memref<4x1x128xf32, #tpu.memory_space<vmem>>, %arg11: memref<2x128xf32, #tpu.memory_space<vmem>>, %arg12: memref<2x128xf32, #tpu.memory_space<vmem>>) attributes {dimension_semantics = [#tpu.dimension_semantics<arbitrary>], iteration_bounds = array<i64: 2>, scalar_prefetch = 0 : i64, scratch_operands = 1 : i64, tpu.core_type = #tpu.core_type<tc>, window_params = [{transform_indices = @transform_0, window_bounds = array<i64: 4>}, {transform_indices = @transform_1, window_bounds = array<i64: 2, 4608>}, {transform_indices = @transform_2, window_bounds = array<i64: 4608, 128>}, {pipeline_mode = #tpu.pipeline_mode<synchronous>, transform_indices = @transform_3, window_bounds = array<i64: 4, 1, 32>}, {pipeline_mode = #tpu.pipeline_mode<synchronous>, transform_indices = @transform_4, window_bounds = array<i64: 2, 4, 32, 32>}, {pipeline_mode = #tpu.pipeline_mode<synchronous>, transform_indices = @transform_5, window_bounds = array<i64: 2, 4, 1, 32>}, {pipeline_mode = #tpu.pipeline_mode<synchronous>, transform_indices = @transform_6, window_bounds = array<i64: 2, 1, 32>}, {pipeline_mode = #tpu.pipeline_mode<synchronous>, transform_indices = @transform_7, window_bounds = array<i64: 2, 1, 32>}, {pipeline_mode = #tpu.pipeline_mode<synchronous>, transform_indices = @transform_8, window_bounds = array<i64: 4, 32, 128>}, {pipeline_mode = #tpu.pipeline_mode<synchronous>, transform_indices = @transform_9, window_bounds = array<i64: 4, 1, 128>}, {pipeline_mode = #tpu.pipeline_mode<synchronous>, transform_indices = @transform_10, window_bounds = array<i64: 2, 128>}]} {
    %c0_i32 = arith.constant 0 : i32
    %0 = arith.cmpi eq, %arg0, %c0_i32 : i32
    %1 = arith.extui %0 : i1 to i32
    %c0_i32_0 = arith.constant 0 : i32
    %2 = arith.cmpi ne, %1, %c0_i32_0 : i32
    scf.if %2 {
      %cst_9 = arith.constant 0.000000e+00 : f32
      %13 = vector.broadcast %cst_9 : f32 to vector<2x128xf32>
      %c0_10 = arith.constant 0 : index
      %c0_11 = arith.constant 0 : index
      %14 = vector.load %arg12[%c0_10, %c0_11] : memref<2x128xf32, #tpu.memory_space<vmem>>, vector<2x128xf32>
      tpu.vector_store %arg12[%c0_10, %c0_11], %13 {strides = array<i32>} : memref<2x128xf32, #tpu.memory_space<vmem>>, vector<2x128xf32>,
    } else {
    }
    %c0 = arith.constant 0 : index
    %c0_1 = arith.constant 0 : index
    %3 = vector.load %arg12[%c0, %c0_1] : memref<2x128xf32, #tpu.memory_space<vmem>>, vector<2x128xf32>
    %c0_2 = arith.constant 0 : index
    %c0_3 = arith.constant 0 : index
    %4 = vector.load %arg2[%c0_2, %c0_3] : memref<2x4608xf32, #tpu.memory_space<vmem>>, vector<2x4608xf32>
    %c0_4 = arith.constant 0 : index
    %c0_5 = arith.constant 0 : index
    %5 = vector.load %arg3[%c0_4, %c0_5] : memref<4608x128xbf16, #tpu.memory_space<vmem>>, vector<4608x128xbf16>
    %6 = arith.extf %5 : vector<4608x128xbf16> to vector<4608x128xf32>
    %cst = arith.constant dense<0.000000e+00> : vector<2x128xf32>
    %7 = tpu.matmul %4, %6, %cst {dimension_numbers = #tpu.dot_dimension_numbers<[1], [0], [0], [1], [0, 0, 1, 1], [], []>} : vector<2x4608xf32>, vector<4608x128xf32>, vector<2x128xf32> -> vector<2x128xf32>
    %8 = arith.addf %3, %7 : vector<2x128xf32>
    %c0_6 = arith.constant 0 : index
    %c0_7 = arith.constant 0 : index
    %9 = vector.load %arg12[%c0_6, %c0_7] : memref<2x128xf32, #tpu.memory_space<vmem>>, vector<2x128xf32>
    tpu.vector_store %arg12[%c0_6, %c0_7], %8 {strides = array<i32>} : memref<2x128xf32, #tpu.memory_space<vmem>>, vector<2x128xf32>,
    %c1_i32 = arith.constant 1 : i32
    %10 = arith.cmpi eq, %arg0, %c1_i32 : i32
    %11 = arith.extui %10 : i1 to i32
    %c0_i32_8 = arith.constant 0 : i32
    %12 = arith.cmpi ne, %11, %c0_i32_8 : i32
    scf.if %12 {
      %c0_9 = arith.constant 0 : index
      %c0_10 = arith.constant 0 : index
      %13 = vector.load %arg12[%c0_9, %c0_10] : memref<2x128xf32, #tpu.memory_space<vmem>>, vector<2x128xf32>
      %c0_11 = arith.constant 0 : index
      %14 = memref.load %arg1[%c0_11] : memref<4xf32, #tpu.memory_space<smem>>
      %15 = vector.extract_strided_slice %13 {offsets = [0, 0], sizes = [2, 32], strides = [1, 1]} : vector<2x128xf32> to vector<2x32xf32>
      %16 = vector.broadcast %14 : f32 to vector<2x32xf32>
      %17 = arith.mulf %16, %15 : vector<2x32xf32>
      %c1 = arith.constant 1 : index
      %18 = memref.load %arg1[%c1] : memref<4xf32, #tpu.memory_space<smem>>
      %19 = vector.extract_strided_slice %13 {offsets = [0, 32], sizes = [2, 32], strides = [1, 1]} : vector<2x128xf32> to vector<2x32xf32>
      %20 = vector.broadcast %18 : f32 to vector<2x32xf32>
      %21 = arith.mulf %20, %19 : vector<2x32xf32>
      %22 = arith.addf %17, %21 : vector<2x32xf32>
      %c2 = arith.constant 2 : index
      %23 = memref.load %arg1[%c2] : memref<4xf32, #tpu.memory_space<smem>>
      %24 = vector.extract_strided_slice %13 {offsets = [0, 64], sizes = [2, 32], strides = [1, 1]} : vector<2x128xf32> to vector<2x32xf32>
      %25 = vector.broadcast %23 : f32 to vector<2x32xf32>
      %26 = arith.mulf %25, %24 : vector<2x32xf32>
      %27 = arith.addf %22, %26 : vector<2x32xf32>
      %c3 = arith.constant 3 : index
      %28 = memref.load %arg1[%c3] : memref<4xf32, #tpu.memory_space<smem>>
      %29 = vector.extract_strided_slice %13 {offsets = [0, 96], sizes = [2, 32], strides = [1, 1]} : vector<2x128xf32> to vector<2x32xf32>
      %30 = vector.broadcast %28 : f32 to vector<2x32xf32>
      %31 = arith.mulf %30, %29 : vector<2x32xf32>
      %32 = arith.addf %27, %31 : vector<2x32xf32>
      %c0_12 = arith.constant 0 : index
      %33 = memref.load %arg1[%c0_12] : memref<4xf32, #tpu.memory_space<smem>>
      %c0_13 = arith.constant 0 : index
      %c0_14 = arith.constant 0 : index
      %c0_15 = arith.constant 0 : index
      %34 = vector.load %arg4[%c0_13, %c0_14, %c0_15] : memref<4x1x32xf32, #tpu.memory_space<vmem>>, vector<1x1x32xf32>
      %35 = vector.shape_cast %34 : vector<1x1x32xf32> to vector<1x32xf32>
      %36 = vector.broadcast %33 : f32 to vector<1x32xf32>
      %37 = arith.mulf %36, %35 : vector<1x32xf32>
      %c1_16 = arith.constant 1 : index
      %38 = memref.load %arg1[%c1_16] : memref<4xf32, #tpu.memory_space<smem>>
      %c1_17 = arith.constant 1 : index
      %c0_18 = arith.constant 0 : index
      %c0_19 = arith.constant 0 : index
      %39 = vector.load %arg4[%c1_17, %c0_18, %c0_19] : memref<4x1x32xf32, #tpu.memory_space<vmem>>, vector<1x1x32xf32>
      %40 = vector.shape_cast %39 : vector<1x1x32xf32> to vector<1x32xf32>
      %41 = vector.broadcast %38 : f32 to vector<1x32xf32>
      %42 = arith.mulf %41, %40 : vector<1x32xf32>
      %43 = arith.addf %37, %42 : vector<1x32xf32>
      %c2_20 = arith.constant 2 : index
      %44 = memref.load %arg1[%c2_20] : memref<4xf32, #tpu.memory_space<smem>>
      %c2_21 = arith.constant 2 : index
      %c0_22 = arith.constant 0 : index
      %c0_23 = arith.constant 0 : index
      %45 = vector.load %arg4[%c2_21, %c0_22, %c0_23] : memref<4x1x32xf32, #tpu.memory_space<vmem>>, vector<1x1x32xf32>
      %46 = vector.shape_cast %45 : vector<1x1x32xf32> to vector<1x32xf32>
      %47 = vector.broadcast %44 : f32 to vector<1x32xf32>
      %48 = arith.mulf %47, %46 : vector<1x32xf32>
      %49 = arith.addf %43, %48 : vector<1x32xf32>
      %c3_24 = arith.constant 3 : index
      %50 = memref.load %arg1[%c3_24] : memref<4xf32, #tpu.memory_space<smem>>
      %c3_25 = arith.constant 3 : index
      %c0_26 = arith.constant 0 : index
      %c0_27 = arith.constant 0 : index
      %51 = vector.load %arg4[%c3_25, %c0_26, %c0_27] : memref<4x1x32xf32, #tpu.memory_space<vmem>>, vector<1x1x32xf32>
      %52 = vector.shape_cast %51 : vector<1x1x32xf32> to vector<1x32xf32>
      %53 = vector.broadcast %50 : f32 to vector<1x32xf32>
      %54 = arith.mulf %53, %52 : vector<1x32xf32>
      %55 = arith.addf %49, %54 : vector<1x32xf32>
      %56 = vector.broadcast %55 : vector<1x32xf32> to vector<2x32xf32>
      %57 = arith.addf %32, %56 : vector<2x32xf32>
      %cst_28 = arith.constant 0.000000e+00 : f32
      %58 = vector.broadcast %cst_28 : f32 to vector<2x32xf32>
      %59 = arith.maximumf %57, %58 : vector<2x32xf32>
      %c0_29 = arith.constant 0 : index
      %c0_30 = arith.constant 0 : index
      %c0_31 = arith.constant 0 : index
      %c0_32 = arith.constant 0 : index
      %60 = vector.load %arg5[%c0_29, %c0_30, %c0_31, %c0_32] : memref<2x4x32x32xbf16, #tpu.memory_space<vmem>>, vector<1x4x32x32xbf16>
      %61 = vector.shape_cast %60 : vector<1x4x32x32xbf16> to vector<4x32x32xbf16>
      %c0_33 = arith.constant 0 : index
      %c0_34 = arith.constant 0 : index
      %c0_35 = arith.constant 0 : index
      %c0_36 = arith.constant 0 : index
      %62 = vector.load %arg6[%c0_33, %c0_34, %c0_35, %c0_36] : memref<2x4x1x32xf32, #tpu.memory_space<vmem>>, vector<1x4x1x32xf32>
      %63 = vector.shape_cast %62 : vector<1x4x1x32xf32> to vector<4x1x32xf32>
      %c0_37 = arith.constant 0 : index
      %64 = memref.load %arg1[%c0_37] : memref<4xf32, #tpu.memory_space<smem>>
      %65 = vector.extract_strided_slice %61 {offsets = [0, 0, 0], sizes = [1, 32, 32], strides = [1, 1, 1]} : vector<4x32x32xbf16> to vector<1x32x32xbf16>
      %66 = vector.shape_cast %65 : vector<1x32x32xbf16> to vector<32x32xbf16>
      %67 = arith.extf %66 : vector<32x32xbf16> to vector<32x32xf32>
      %cst_38 = arith.constant dense<0.000000e+00> : vector<2x32xf32>
      %68 = tpu.matmul %59, %67, %cst_38 {dimension_numbers = #tpu.dot_dimension_numbers<[1], [0], [0], [1], [0, 0, 1, 1], [], []>} : vector<2x32xf32>, vector<32x32xf32>, vector<2x32xf32> -> vector<2x32xf32>
      %69 = vector.broadcast %64 : f32 to vector<2x32xf32>
      %70 = arith.mulf %69, %68 : vector<2x32xf32>
      %c1_39 = arith.constant 1 : index
      %71 = memref.load %arg1[%c1_39] : memref<4xf32, #tpu.memory_space<smem>>
      %72 = vector.extract_strided_slice %61 {offsets = [1, 0, 0], sizes = [1, 32, 32], strides = [1, 1, 1]} : vector<4x32x32xbf16> to vector<1x32x32xbf16>
      %73 = vector.shape_cast %72 : vector<1x32x32xbf16> to vector<32x32xbf16>
      %74 = arith.extf %73 : vector<32x32xbf16> to vector<32x32xf32>
      %cst_40 = arith.constant dense<0.000000e+00> : vector<2x32xf32>
      %75 = tpu.matmul %59, %74, %cst_40 {dimension_numbers = #tpu.dot_dimension_numbers<[1], [0], [0], [1], [0, 0, 1, 1], [], []>} : vector<2x32xf32>, vector<32x32xf32>, vector<2x32xf32> -> vector<2x32xf32>
      %76 = vector.broadcast %71 : f32 to vector<2x32xf32>
      %77 = arith.mulf %76, %75 : vector<2x32xf32>
      %78 = arith.addf %70, %77 : vector<2x32xf32>
      %c2_41 = arith.constant 2 : index
      %79 = memref.load %arg1[%c2_41] : memref<4xf32, #tpu.memory_space<smem>>
      %80 = vector.extract_strided_slice %61 {offsets = [2, 0, 0], sizes = [1, 32, 32], strides = [1, 1, 1]} : vector<4x32x32xbf16> to vector<1x32x32xbf16>
      %81 = vector.shape_cast %80 : vector<1x32x32xbf16> to vector<32x32xbf16>
      %82 = arith.extf %81 : vector<32x32xbf16> to vector<32x32xf32>
      %cst_42 = arith.constant dense<0.000000e+00> : vector<2x32xf32>
      %83 = tpu.matmul %59, %82, %cst_42 {dimension_numbers = #tpu.dot_dimension_numbers<[1], [0], [0], [1], [0, 0, 1, 1], [], []>} : vector<2x32xf32>, vector<32x32xf32>, vector<2x32xf32> -> vector<2x32xf32>
      %84 = vector.broadcast %79 : f32 to vector<2x32xf32>
      %85 = arith.mulf %84, %83 : vector<2x32xf32>
      %86 = arith.addf %78, %85 : vector<2x32xf32>
      %c3_43 = arith.constant 3 : index
      %87 = memref.load %arg1[%c3_43] : memref<4xf32, #tpu.memory_space<smem>>
      %88 = vector.extract_strided_slice %61 {offsets = [3, 0, 0], sizes = [1, 32, 32], strides = [1, 1, 1]} : vector<4x32x32xbf16> to vector<1x32x32xbf16>
      %89 = vector.shape_cast %88 : vector<1x32x32xbf16> to vector<32x32xbf16>
      %90 = arith.extf %89 : vector<32x32xbf16> to vector<32x32xf32>
      %cst_44 = arith.constant dense<0.000000e+00> : vector<2x32xf32>
      %91 = tpu.matmul %59, %90, %cst_44 {dimension_numbers = #tpu.dot_dimension_numbers<[1], [0], [0], [1], [0, 0, 1, 1], [], []>} : vector<2x32xf32>, vector<32x32xf32>, vector<2x32xf32> -> vector<2x32xf32>
      %92 = vector.broadcast %87 : f32 to vector<2x32xf32>
      %93 = arith.mulf %92, %91 : vector<2x32xf32>
      %94 = arith.addf %86, %93 : vector<2x32xf32>
      %c0_45 = arith.constant 0 : index
      %95 = memref.load %arg1[%c0_45] : memref<4xf32, #tpu.memory_space<smem>>
      %96 = vector.extract_strided_slice %63 {offsets = [0, 0, 0], sizes = [1, 1, 32], strides = [1, 1, 1]} : vector<4x1x32xf32> to vector<1x1x32xf32>
      %97 = vector.shape_cast %96 : vector<1x1x32xf32> to vector<1x32xf32>
      %98 = vector.broadcast %95 : f32 to vector<1x32xf32>
      %99 = arith.mulf %98, %97 : vector<1x32xf32>
      %c1_46 = arith.constant 1 : index
      %100 = memref.load %arg1[%c1_46] : memref<4xf32, #tpu.memory_space<smem>>
      %101 = vector.extract_strided_slice %63 {offsets = [1, 0, 0], sizes = [1, 1, 32], strides = [1, 1, 1]} : vector<4x1x32xf32> to vector<1x1x32xf32>
      %102 = vector.shape_cast %101 : vector<1x1x32xf32> to vector<1x32xf32>
      %103 = vector.broadcast %100 : f32 to vector<1x32xf32>
      %104 = arith.mulf %103, %102 : vector<1x32xf32>
      %105 = arith.addf %99, %104 : vector<1x32xf32>
      %c2_47 = arith.constant 2 : index
      %106 = memref.load %arg1[%c2_47] : memref<4xf32, #tpu.memory_space<smem>>
      %107 = vector.extract_strided_slice %63 {offsets = [2, 0, 0], sizes = [1, 1, 32], strides = [1, 1, 1]} : vector<4x1x32xf32> to vector<1x1x32xf32>
      %108 = vector.shape_cast %107 : vector<1x1x32xf32> to vector<1x32xf32>
      %109 = vector.broadcast %106 : f32 to vector<1x32xf32>
      %110 = arith.mulf %109, %108 : vector<1x32xf32>
      %111 = arith.addf %105, %110 : vector<1x32xf32>
      %c3_48 = arith.constant 3 : index
      %112 = memref.load %arg1[%c3_48] : memref<4xf32, #tpu.memory_space<smem>>
      %113 = vector.extract_strided_slice %63 {offsets = [3, 0, 0], sizes = [1, 1, 32], strides = [1, 1, 1]} : vector<4x1x32xf32> to vector<1x1x32xf32>
      %114 = vector.shape_cast %113 : vector<1x1x32xf32> to vector<1x32xf32>
      %115 = vector.broadcast %112 : f32 to vector<1x32xf32>
      %116 = arith.mulf %115, %114 : vector<1x32xf32>
      %117 = arith.addf %111, %116 : vector<1x32xf32>
      %118 = vector.broadcast %117 : vector<1x32xf32> to vector<2x32xf32>
      %119 = arith.addf %94, %118 : vector<2x32xf32>
      %cst_49 = arith.constant dense<0.000000e+00> : vector<32xf32>
      %120 = vector.multi_reduction <add>, %119, %cst_49 [0] : vector<2x32xf32> to vector<32xf32>
      %121 = vector.shape_cast %120 : vector<32xf32> to vector<1x32xf32>
      %cst_50 = arith.constant 2.000000e+00 : f32
      %122 = vector.broadcast %cst_50 : f32 to vector<1x32xf32>
      %123 = arith.divf %121, %122 : vector<1x32xf32>
      %124 = vector.broadcast %123 : vector<1x32xf32> to vector<2x32xf32>
      %125 = arith.subf %119, %124 : vector<2x32xf32>
      %126 = arith.mulf %125, %125 : vector<2x32xf32>
      %cst_51 = arith.constant dense<0.000000e+00> : vector<32xf32>
      %127 = vector.multi_reduction <add>, %126, %cst_51 [0] : vector<2x32xf32> to vector<32xf32>
      %128 = vector.shape_cast %127 : vector<32xf32> to vector<1x32xf32>
      %cst_52 = arith.constant 2.000000e+00 : f32
      %129 = vector.broadcast %cst_52 : f32 to vector<1x32xf32>
      %130 = arith.divf %128, %129 : vector<1x32xf32>
      %131 = vector.broadcast %123 : vector<1x32xf32> to vector<2x32xf32>
      %132 = arith.subf %119, %131 : vector<2x32xf32>
      %cst_53 = arith.constant 9.99999974E-6 : f32
      %133 = vector.broadcast %cst_53 : f32 to vector<1x32xf32>
      %134 = arith.addf %130, %133 : vector<1x32xf32>
      %135 = math.rsqrt %134 : vector<1x32xf32>
      %136 = vector.broadcast %135 : vector<1x32xf32> to vector<2x32xf32>
      %137 = arith.mulf %132, %136 : vector<2x32xf32>
      %c0_54 = arith.constant 0 : index
      %c0_55 = arith.constant 0 : index
      %c0_56 = arith.constant 0 : index
      %138 = vector.load %arg7[%c0_54, %c0_55, %c0_56] : memref<2x1x32xf32, #tpu.memory_space<vmem>>, vector<1x1x32xf32>
      %139 = vector.shape_cast %138 : vector<1x1x32xf32> to vector<1x32xf32>
      %140 = vector.broadcast %139 : vector<1x32xf32> to vector<2x32xf32>
      %141 = arith.mulf %137, %140 : vector<2x32xf32>
      %c0_57 = arith.constant 0 : index
      %c0_58 = arith.constant 0 : index
      %c0_59 = arith.constant 0 : index
      %142 = vector.load %arg8[%c0_57, %c0_58, %c0_59] : memref<2x1x32xf32, #tpu.memory_space<vmem>>, vector<1x1x32xf32>
      %143 = vector.shape_cast %142 : vector<1x1x32xf32> to vector<1x32xf32>
      %144 = vector.broadcast %143 : vector<1x32xf32> to vector<2x32xf32>
      %145 = arith.addf %141, %144 : vector<2x32xf32>
      %cst_60 = arith.constant 0.000000e+00 : f32
      %146 = vector.broadcast %cst_60 : f32 to vector<2x32xf32>
      %147 = arith.maximumf %145, %146 : vector<2x32xf32>
      %c1_61 = arith.constant 1 : index
      %c0_62 = arith.constant 0 : index
      %c0_63 = arith.constant 0 : index
      %c0_64 = arith.constant 0 : index
      %148 = vector.load %arg5[%c1_61, %c0_62, %c0_63, %c0_64] : memref<2x4x32x32xbf16, #tpu.memory_space<vmem>>, vector<1x4x32x32xbf16>
      %149 = vector.shape_cast %148 : vector<1x4x32x32xbf16> to vector<4x32x32xbf16>
      %c1_65 = arith.constant 1 : index
      %c0_66 = arith.constant 0 : index
      %c0_67 = arith.constant 0 : index
      %c0_68 = arith.constant 0 : index
      %150 = vector.load %arg6[%c1_65, %c0_66, %c0_67, %c0_68] : memref<2x4x1x32xf32, #tpu.memory_space<vmem>>, vector<1x4x1x32xf32>
      %151 = vector.shape_cast %150 : vector<1x4x1x32xf32> to vector<4x1x32xf32>
      %c0_69 = arith.constant 0 : index
      %152 = memref.load %arg1[%c0_69] : memref<4xf32, #tpu.memory_space<smem>>
      %153 = vector.extract_strided_slice %149 {offsets = [0, 0, 0], sizes = [1, 32, 32], strides = [1, 1, 1]} : vector<4x32x32xbf16> to vector<1x32x32xbf16>
      %154 = vector.shape_cast %153 : vector<1x32x32xbf16> to vector<32x32xbf16>
      %155 = arith.extf %154 : vector<32x32xbf16> to vector<32x32xf32>
      %cst_70 = arith.constant dense<0.000000e+00> : vector<2x32xf32>
      %156 = tpu.matmul %147, %155, %cst_70 {dimension_numbers = #tpu.dot_dimension_numbers<[1], [0], [0], [1], [0, 0, 1, 1], [], []>} : vector<2x32xf32>, vector<32x32xf32>, vector<2x32xf32> -> vector<2x32xf32>
      %157 = vector.broadcast %152 : f32 to vector<2x32xf32>
      %158 = arith.mulf %157, %156 : vector<2x32xf32>
      %c1_71 = arith.constant 1 : index
      %159 = memref.load %arg1[%c1_71] : memref<4xf32, #tpu.memory_space<smem>>
      %160 = vector.extract_strided_slice %149 {offsets = [1, 0, 0], sizes = [1, 32, 32], strides = [1, 1, 1]} : vector<4x32x32xbf16> to vector<1x32x32xbf16>
      %161 = vector.shape_cast %160 : vector<1x32x32xbf16> to vector<32x32xbf16>
      %162 = arith.extf %161 : vector<32x32xbf16> to vector<32x32xf32>
      %cst_72 = arith.constant dense<0.000000e+00> : vector<2x32xf32>
      %163 = tpu.matmul %147, %162, %cst_72 {dimension_numbers = #tpu.dot_dimension_numbers<[1], [0], [0], [1], [0, 0, 1, 1], [], []>} : vector<2x32xf32>, vector<32x32xf32>, vector<2x32xf32> -> vector<2x32xf32>
      %164 = vector.broadcast %159 : f32 to vector<2x32xf32>
      %165 = arith.mulf %164, %163 : vector<2x32xf32>
      %166 = arith.addf %158, %165 : vector<2x32xf32>
      %c2_73 = arith.constant 2 : index
      %167 = memref.load %arg1[%c2_73] : memref<4xf32, #tpu.memory_space<smem>>
      %168 = vector.extract_strided_slice %149 {offsets = [2, 0, 0], sizes = [1, 32, 32], strides = [1, 1, 1]} : vector<4x32x32xbf16> to vector<1x32x32xbf16>
      %169 = vector.shape_cast %168 : vector<1x32x32xbf16> to vector<32x32xbf16>
      %170 = arith.extf %169 : vector<32x32xbf16> to vector<32x32xf32>
      %cst_74 = arith.constant dense<0.000000e+00> : vector<2x32xf32>
      %171 = tpu.matmul %147, %170, %cst_74 {dimension_numbers = #tpu.dot_dimension_numbers<[1], [0], [0], [1], [0, 0, 1, 1], [], []>} : vector<2x32xf32>, vector<32x32xf32>, vector<2x32xf32> -> vector<2x32xf32>
      %172 = vector.broadcast %167 : f32 to vector<2x32xf32>
      %173 = arith.mulf %172, %171 : vector<2x32xf32>
      %174 = arith.addf %166, %173 : vector<2x32xf32>
      %c3_75 = arith.constant 3 : index
      %175 = memref.load %arg1[%c3_75] : memref<4xf32, #tpu.memory_space<smem>>
      %176 = vector.extract_strided_slice %149 {offsets = [3, 0, 0], sizes = [1, 32, 32], strides = [1, 1, 1]} : vector<4x32x32xbf16> to vector<1x32x32xbf16>
      %177 = vector.shape_cast %176 : vector<1x32x32xbf16> to vector<32x32xbf16>
      %178 = arith.extf %177 : vector<32x32xbf16> to vector<32x32xf32>
      %cst_76 = arith.constant dense<0.000000e+00> : vector<2x32xf32>
      %179 = tpu.matmul %147, %178, %cst_76 {dimension_numbers = #tpu.dot_dimension_numbers<[1], [0], [0], [1], [0, 0, 1, 1], [], []>} : vector<2x32xf32>, vector<32x32xf32>, vector<2x32xf32> -> vector<2x32xf32>
      %180 = vector.broadcast %175 : f32 to vector<2x32xf32>
      %181 = arith.mulf %180, %179 : vector<2x32xf32>
      %182 = arith.addf %174, %181 : vector<2x32xf32>
      %c0_77 = arith.constant 0 : index
      %183 = memref.load %arg1[%c0_77] : memref<4xf32, #tpu.memory_space<smem>>
      %184 = vector.extract_strided_slice %151 {offsets = [0, 0, 0], sizes = [1, 1, 32], strides = [1, 1, 1]} : vector<4x1x32xf32> to vector<1x1x32xf32>
      %185 = vector.shape_cast %184 : vector<1x1x32xf32> to vector<1x32xf32>
      %186 = vector.broadcast %183 : f32 to vector<1x32xf32>
      %187 = arith.mulf %186, %185 : vector<1x32xf32>
      %c1_78 = arith.constant 1 : index
      %188 = memref.load %arg1[%c1_78] : memref<4xf32, #tpu.memory_space<smem>>
      %189 = vector.extract_strided_slice %151 {offsets = [1, 0, 0], sizes = [1, 1, 32], strides = [1, 1, 1]} : vector<4x1x32xf32> to vector<1x1x32xf32>
      %190 = vector.shape_cast %189 : vector<1x1x32xf32> to vector<1x32xf32>
      %191 = vector.broadcast %188 : f32 to vector<1x32xf32>
      %192 = arith.mulf %191, %190 : vector<1x32xf32>
      %193 = arith.addf %187, %192 : vector<1x32xf32>
      %c2_79 = arith.constant 2 : index
      %194 = memref.load %arg1[%c2_79] : memref<4xf32, #tpu.memory_space<smem>>
      %195 = vector.extract_strided_slice %151 {offsets = [2, 0, 0], sizes = [1, 1, 32], strides = [1, 1, 1]} : vector<4x1x32xf32> to vector<1x1x32xf32>
      %196 = vector.shape_cast %195 : vector<1x1x32xf32> to vector<1x32xf32>
      %197 = vector.broadcast %194 : f32 to vector<1x32xf32>
      %198 = arith.mulf %197, %196 : vector<1x32xf32>
      %199 = arith.addf %193, %198 : vector<1x32xf32>
      %c3_80 = arith.constant 3 : index
      %200 = memref.load %arg1[%c3_80] : memref<4xf32, #tpu.memory_space<smem>>
      %201 = vector.extract_strided_slice %151 {offsets = [3, 0, 0], sizes = [1, 1, 32], strides = [1, 1, 1]} : vector<4x1x32xf32> to vector<1x1x32xf32>
      %202 = vector.shape_cast %201 : vector<1x1x32xf32> to vector<1x32xf32>
      %203 = vector.broadcast %200 : f32 to vector<1x32xf32>
      %204 = arith.mulf %203, %202 : vector<1x32xf32>
      %205 = arith.addf %199, %204 : vector<1x32xf32>
      %206 = vector.broadcast %205 : vector<1x32xf32> to vector<2x32xf32>
      %207 = arith.addf %182, %206 : vector<2x32xf32>
      %cst_81 = arith.constant dense<0.000000e+00> : vector<32xf32>
      %208 = vector.multi_reduction <add>, %207, %cst_81 [0] : vector<2x32xf32> to vector<32xf32>
      %209 = vector.shape_cast %208 : vector<32xf32> to vector<1x32xf32>
      %cst_82 = arith.constant 2.000000e+00 : f32
      %210 = vector.broadcast %cst_82 : f32 to vector<1x32xf32>
      %211 = arith.divf %209, %210 : vector<1x32xf32>
      %212 = vector.broadcast %211 : vector<1x32xf32> to vector<2x32xf32>
      %213 = arith.subf %207, %212 : vector<2x32xf32>
      %214 = arith.mulf %213, %213 : vector<2x32xf32>
      %cst_83 = arith.constant dense<0.000000e+00> : vector<32xf32>
      %215 = vector.multi_reduction <add>, %214, %cst_83 [0] : vector<2x32xf32> to vector<32xf32>
      %216 = vector.shape_cast %215 : vector<32xf32> to vector<1x32xf32>
      %cst_84 = arith.constant 2.000000e+00 : f32
      %217 = vector.broadcast %cst_84 : f32 to vector<1x32xf32>
      %218 = arith.divf %216, %217 : vector<1x32xf32>
      %219 = vector.broadcast %211 : vector<1x32xf32> to vector<2x32xf32>
      %220 = arith.subf %207, %219 : vector<2x32xf32>
      %cst_85 = arith.constant 9.99999974E-6 : f32
      %221 = vector.broadcast %cst_85 : f32 to vector<1x32xf32>
      %222 = arith.addf %218, %221 : vector<1x32xf32>
      %223 = math.rsqrt %222 : vector<1x32xf32>
      %224 = vector.broadcast %223 : vector<1x32xf32> to vector<2x32xf32>
      %225 = arith.mulf %220, %224 : vector<2x32xf32>
      %c1_86 = arith.constant 1 : index
      %c0_87 = arith.constant 0 : index
      %c0_88 = arith.constant 0 : index
      %226 = vector.load %arg7[%c1_86, %c0_87, %c0_88] : memref<2x1x32xf32, #tpu.memory_space<vmem>>, vector<1x1x32xf32>
      %227 = vector.shape_cast %226 : vector<1x1x32xf32> to vector<1x32xf32>
      %228 = vector.broadcast %227 : vector<1x32xf32> to vector<2x32xf32>
      %229 = arith.mulf %225, %228 : vector<2x32xf32>
      %c1_89 = arith.constant 1 : index
      %c0_90 = arith.constant 0 : index
      %c0_91 = arith.constant 0 : index
      %230 = vector.load %arg8[%c1_89, %c0_90, %c0_91] : memref<2x1x32xf32, #tpu.memory_space<vmem>>, vector<1x1x32xf32>
      %231 = vector.shape_cast %230 : vector<1x1x32xf32> to vector<1x32xf32>
      %232 = vector.broadcast %231 : vector<1x32xf32> to vector<2x32xf32>
      %233 = arith.addf %229, %232 : vector<2x32xf32>
      %cst_92 = arith.constant 0.000000e+00 : f32
      %234 = vector.broadcast %cst_92 : f32 to vector<2x32xf32>
      %235 = arith.maximumf %233, %234 : vector<2x32xf32>
      %c0_93 = arith.constant 0 : index
      %236 = memref.load %arg1[%c0_93] : memref<4xf32, #tpu.memory_space<smem>>
      %c0_94 = arith.constant 0 : index
      %c0_95 = arith.constant 0 : index
      %c0_96 = arith.constant 0 : index
      %237 = vector.load %arg9[%c0_94, %c0_95, %c0_96] : memref<4x32x128xbf16, #tpu.memory_space<vmem>>, vector<1x32x128xbf16>
      %238 = vector.shape_cast %237 : vector<1x32x128xbf16> to vector<32x128xbf16>
      %239 = arith.extf %238 : vector<32x128xbf16> to vector<32x128xf32>
      %cst_97 = arith.constant dense<0.000000e+00> : vector<2x128xf32>
      %240 = tpu.matmul %235, %239, %cst_97 {dimension_numbers = #tpu.dot_dimension_numbers<[1], [0], [0], [1], [0, 0, 1, 1], [], []>} : vector<2x32xf32>, vector<32x128xf32>, vector<2x128xf32> -> vector<2x128xf32>
      %241 = vector.broadcast %236 : f32 to vector<2x128xf32>
      %242 = arith.mulf %241, %240 : vector<2x128xf32>
      %c1_98 = arith.constant 1 : index
      %243 = memref.load %arg1[%c1_98] : memref<4xf32, #tpu.memory_space<smem>>
      %c1_99 = arith.constant 1 : index
      %c0_100 = arith.constant 0 : index
      %c0_101 = arith.constant 0 : index
      %244 = vector.load %arg9[%c1_99, %c0_100, %c0_101] : memref<4x32x128xbf16, #tpu.memory_space<vmem>>, vector<1x32x128xbf16>
      %245 = vector.shape_cast %244 : vector<1x32x128xbf16> to vector<32x128xbf16>
      %246 = arith.extf %245 : vector<32x128xbf16> to vector<32x128xf32>
      %cst_102 = arith.constant dense<0.000000e+00> : vector<2x128xf32>
      %247 = tpu.matmul %235, %246, %cst_102 {dimension_numbers = #tpu.dot_dimension_numbers<[1], [0], [0], [1], [0, 0, 1, 1], [], []>} : vector<2x32xf32>, vector<32x128xf32>, vector<2x128xf32> -> vector<2x128xf32>
      %248 = vector.broadcast %243 : f32 to vector<2x128xf32>
      %249 = arith.mulf %248, %247 : vector<2x128xf32>
      %250 = arith.addf %242, %249 : vector<2x128xf32>
      %c2_103 = arith.constant 2 : index
      %251 = memref.load %arg1[%c2_103] : memref<4xf32, #tpu.memory_space<smem>>
      %c2_104 = arith.constant 2 : index
      %c0_105 = arith.constant 0 : index
      %c0_106 = arith.constant 0 : index
      %252 = vector.load %arg9[%c2_104, %c0_105, %c0_106] : memref<4x32x128xbf16, #tpu.memory_space<vmem>>, vector<1x32x128xbf16>
      %253 = vector.shape_cast %252 : vector<1x32x128xbf16> to vector<32x128xbf16>
      %254 = arith.extf %253 : vector<32x128xbf16> to vector<32x128xf32>
      %cst_107 = arith.constant dense<0.000000e+00> : vector<2x128xf32>
      %255 = tpu.matmul %235, %254, %cst_107 {dimension_numbers = #tpu.dot_dimension_numbers<[1], [0], [0], [1], [0, 0, 1, 1], [], []>} : vector<2x32xf32>, vector<32x128xf32>, vector<2x128xf32> -> vector<2x128xf32>
      %256 = vector.broadcast %251 : f32 to vector<2x128xf32>
      %257 = arith.mulf %256, %255 : vector<2x128xf32>
      %258 = arith.addf %250, %257 : vector<2x128xf32>
      %c3_108 = arith.constant 3 : index
      %259 = memref.load %arg1[%c3_108] : memref<4xf32, #tpu.memory_space<smem>>
      %c3_109 = arith.constant 3 : index
      %c0_110 = arith.constant 0 : index
      %c0_111 = arith.constant 0 : index
      %260 = vector.load %arg9[%c3_109, %c0_110, %c0_111] : memref<4x32x128xbf16, #tpu.memory_space<vmem>>, vector<1x32x128xbf16>
      %261 = vector.shape_cast %260 : vector<1x32x128xbf16> to vector<32x128xbf16>
      %262 = arith.extf %261 : vector<32x128xbf16> to vector<32x128xf32>
      %cst_112 = arith.constant dense<0.000000e+00> : vector<2x128xf32>
      %263 = tpu.matmul %235, %262, %cst_112 {dimension_numbers = #tpu.dot_dimension_numbers<[1], [0], [0], [1], [0, 0, 1, 1], [], []>} : vector<2x32xf32>, vector<32x128xf32>, vector<2x128xf32> -> vector<2x128xf32>
      %264 = vector.broadcast %259 : f32 to vector<2x128xf32>
      %265 = arith.mulf %264, %263 : vector<2x128xf32>
      %266 = arith.addf %258, %265 : vector<2x128xf32>
      %c0_113 = arith.constant 0 : index
      %267 = memref.load %arg1[%c0_113] : memref<4xf32, #tpu.memory_space<smem>>
      %c0_114 = arith.constant 0 : index
      %c0_115 = arith.constant 0 : index
      %c0_116 = arith.constant 0 : index
      %268 = vector.load %arg10[%c0_114, %c0_115, %c0_116] : memref<4x1x128xf32, #tpu.memory_space<vmem>>, vector<1x1x128xf32>
      %269 = vector.shape_cast %268 : vector<1x1x128xf32> to vector<1x128xf32>
      %270 = vector.broadcast %267 : f32 to vector<1x128xf32>
      %271 = arith.mulf %270, %269 : vector<1x128xf32>
      %c1_117 = arith.constant 1 : index
      %272 = memref.load %arg1[%c1_117] : memref<4xf32, #tpu.memory_space<smem>>
      %c1_118 = arith.constant 1 : index
      %c0_119 = arith.constant 0 : index
      %c0_120 = arith.constant 0 : index
      %273 = vector.load %arg10[%c1_118, %c0_119, %c0_120] : memref<4x1x128xf32, #tpu.memory_space<vmem>>, vector<1x1x128xf32>
      %274 = vector.shape_cast %273 : vector<1x1x128xf32> to vector<1x128xf32>
      %275 = vector.broadcast %272 : f32 to vector<1x128xf32>
      %276 = arith.mulf %275, %274 : vector<1x128xf32>
      %277 = arith.addf %271, %276 : vector<1x128xf32>
      %c2_121 = arith.constant 2 : index
      %278 = memref.load %arg1[%c2_121] : memref<4xf32, #tpu.memory_space<smem>>
      %c2_122 = arith.constant 2 : index
      %c0_123 = arith.constant 0 : index
      %c0_124 = arith.constant 0 : index
      %279 = vector.load %arg10[%c2_122, %c0_123, %c0_124] : memref<4x1x128xf32, #tpu.memory_space<vmem>>, vector<1x1x128xf32>
      %280 = vector.shape_cast %279 : vector<1x1x128xf32> to vector<1x128xf32>
      %281 = vector.broadcast %278 : f32 to vector<1x128xf32>
      %282 = arith.mulf %281, %280 : vector<1x128xf32>
      %283 = arith.addf %277, %282 : vector<1x128xf32>
      %c3_125 = arith.constant 3 : index
      %284 = memref.load %arg1[%c3_125] : memref<4xf32, #tpu.memory_space<smem>>
      %c3_126 = arith.constant 3 : index
      %c0_127 = arith.constant 0 : index
      %c0_128 = arith.constant 0 : index
      %285 = vector.load %arg10[%c3_126, %c0_127, %c0_128] : memref<4x1x128xf32, #tpu.memory_space<vmem>>, vector<1x1x128xf32>
      %286 = vector.shape_cast %285 : vector<1x1x128xf32> to vector<1x128xf32>
      %287 = vector.broadcast %284 : f32 to vector<1x128xf32>
      %288 = arith.mulf %287, %286 : vector<1x128xf32>
      %289 = arith.addf %283, %288 : vector<1x128xf32>
      %290 = vector.broadcast %289 : vector<1x128xf32> to vector<2x128xf32>
      %291 = arith.addf %266, %290 : vector<2x128xf32>
      %c0_129 = arith.constant 0 : index
      %c0_130 = arith.constant 0 : index
      %292 = vector.load %arg11[%c0_129, %c0_130] : memref<2x128xf32, #tpu.memory_space<vmem>>, vector<2x128xf32>
      tpu.vector_store %arg11[%c0_129, %c0_130], %291 {strides = array<i32>} : memref<2x128xf32, #tpu.memory_space<vmem>>, vector<2x128xf32>,
    } else {
    }
    return
  }
  func.func @transform_0(%arg0: i32) -> i32 {
    %c0_i32 = arith.constant 0 : i32
    %c0_i32_0 = arith.constant 0 : i32
    return %c0_i32 : i32
  }
  func.func @transform_1(%arg0: i32) -> (i32, i32) {
    %c0_i32 = arith.constant 0 : i32
    %c0_i32_0 = arith.constant 0 : i32
    return %c0_i32, %arg0 : i32, i32
  }
  func.func @transform_2(%arg0: i32) -> (i32, i32) {
    %c0_i32 = arith.constant 0 : i32
    %c0_i32_0 = arith.constant 0 : i32
    return %arg0, %c0_i32 : i32, i32
  }
  func.func @transform_3(%arg0: i32) -> (i32, i32, i32) {
    %c0_i32 = arith.constant 0 : i32
    %c0_i32_0 = arith.constant 0 : i32
    %c0_i32_1 = arith.constant 0 : i32
    %c0_i32_2 = arith.constant 0 : i32
    return %c0_i32, %c0_i32_0, %c0_i32_1 : i32, i32, i32
  }
  func.func @transform_4(%arg0: i32) -> (i32, i32, i32, i32) {
    %c0_i32 = arith.constant 0 : i32
    %c0_i32_0 = arith.constant 0 : i32
    %c0_i32_1 = arith.constant 0 : i32
    %c0_i32_2 = arith.constant 0 : i32
    %c0_i32_3 = arith.constant 0 : i32
    return %c0_i32, %c0_i32_0, %c0_i32_1, %c0_i32_2 : i32, i32, i32, i32
  }
  func.func @transform_5(%arg0: i32) -> (i32, i32, i32, i32) {
    %c0_i32 = arith.constant 0 : i32
    %c0_i32_0 = arith.constant 0 : i32
    %c0_i32_1 = arith.constant 0 : i32
    %c0_i32_2 = arith.constant 0 : i32
    %c0_i32_3 = arith.constant 0 : i32
    return %c0_i32, %c0_i32_0, %c0_i32_1, %c0_i32_2 : i32, i32, i32, i32
  }
  func.func @transform_6(%arg0: i32) -> (i32, i32, i32) {
    %c0_i32 = arith.constant 0 : i32
    %c0_i32_0 = arith.constant 0 : i32
    %c0_i32_1 = arith.constant 0 : i32
    %c0_i32_2 = arith.constant 0 : i32
    return %c0_i32, %c0_i32_0, %c0_i32_1 : i32, i32, i32
  }
  func.func @transform_7(%arg0: i32) -> (i32, i32, i32) {
    %c0_i32 = arith.constant 0 : i32
    %c0_i32_0 = arith.constant 0 : i32
    %c0_i32_1 = arith.constant 0 : i32
    %c0_i32_2 = arith.constant 0 : i32
    return %c0_i32, %c0_i32_0, %c0_i32_1 : i32, i32, i32
  }
  func.func @transform_8(%arg0: i32) -> (i32, i32, i32) {
    %c0_i32 = arith.constant 0 : i32
    %c0_i32_0 = arith.constant 0 : i32
    %c0_i32_1 = arith.constant 0 : i32
    %c0_i32_2 = arith.constant 0 : i32
    return %c0_i32, %c0_i32_0, %c0_i32_1 : i32, i32, i32
  }
  func.func @transform_9(%arg0: i32) -> (i32, i32, i32) {
    %c0_i32 = arith.constant 0 : i32
    %c0_i32_0 = arith.constant 0 : i32
    %c0_i32_1 = arith.constant 0 : i32
    %c0_i32_2 = arith.constant 0 : i32
    return %c0_i32, %c0_i32_0, %c0_i32_1 : i32, i32, i32
  }
  func.func @transform_10(%arg0: i32) -> (i32, i32) {
    %c0_i32 = arith.constant 0 : i32
    %c0_i32_0 = arith.constant 0 : i32
    %c0_i32_1 = arith.constant 0 : i32
    return %c0_i32, %c0_i32_0 : i32, i32
  }
}

</mosaic_0001>

<llo_original>
// kernel: tpu_custom_call.1
$region0: #{tpu_custom_call.1}
  #allocation0 [shape = 'u32[]', space=smem, size = 0x4, offset = 0x4, fixed_abs, tag = 'smem constant byte address 0x4 - core index']
  #allocation1 [shape = 'u32[144,128]{1,0:T(1,128)}', space=vmem, size = 0x12000, scoped, tag = 'internal scratch']
  #allocation2 [shape = 'f32[2,128]{1,0:T(2,128)}', space=vmem, size = 0x400, scoped, tag = 'scratch operand']
  %s0 = inlined_call_operand.hbm [shape: f32[4], index: 0, kind: input, shape index: {}]
  %s1 = inlined_call_operand.hbm [shape: f32[2,9216], index: 1, kind: input, shape index: {}]
  %s2 = inlined_call_operand.hbm [shape: bf16[9216,128], index: 2, kind: input, shape index: {}]
  %s3 = inlined_call_operand.hbm [shape: f32[4,1,32], index: 3, kind: input, shape index: {}]
  %s4 = inlined_call_operand.hbm [shape: bf16[2,4,32,32], index: 4, kind: input, shape index: {}]
  %s5 = inlined_call_operand.hbm [shape: f32[2,4,1,32], index: 5, kind: input, shape index: {}]
  %s6 = inlined_call_operand.hbm [shape: f32[2,1,32], index: 6, kind: input, shape index: {}]
  %s7 = inlined_call_operand.hbm [shape: f32[2,1,32], index: 7, kind: input, shape index: {}]
  %s8 = inlined_call_operand.hbm [shape: bf16[4,32,128], index: 8, kind: input, shape index: {}]
  %s9 = inlined_call_operand.hbm [shape: f32[4,1,128], index: 9, kind: input, shape index: {}]
  %s10 = inlined_call_operand.hbm [shape: f32[2,128], index: 10, kind: output, shape index: {}]
  %s11 = sld [smem:[#allocation0]]
  $region121: #{tpu_custom_call.1} parent=0
    _
  %s13 = ssub.s32 1, %s11
  %s14 = scalar_select 0, %s13, %s11
  $region1: #{tpu_custom_call.1} parent=0
    #allocation3 [shape = 'u8[512]{0}', space=smem, size = 0x200, scoped, tag = 'input window, operand 0, single buffered']
    #allocation4 [shape = 's32[2]{0}', space=sflag, size = 0x8, scoped, tag = 'scoped memory for tpu_custom_call.1']
    #allocation5 [shape = 's32[2]{0}', space=sflag, size = 0x8, scoped, tag = 'scoped memory for tpu_custom_call.1']
    #allocation6 [shape = 's32[2]{0}', space=sflag, size = 0x8, scoped, tag = 'scoped memory for tpu_custom_call.1']
    #allocation7 [shape = 'u8[73728]{0}', space=vmem, size = 0x12000, scoped, tag = 'input window, operand 1']
    #allocation8 [shape = 'u8[2359296]{0}', space=vmem, size = 0x240000, scoped, tag = 'input window, operand 2']
    #allocation9 [shape = 's32[2]{0}', space=sflag, size = 0x8, scoped, tag = 'scoped memory for tpu_custom_call.1']
    #allocation10 [shape = 'u8[2048]{0}', space=vmem, size = 0x800, scoped, tag = 'input window, operand 3, single buffered']
    #allocation11 [shape = 'u8[65536]{0}', space=vmem, size = 0x10000, scoped, tag = 'input window, operand 4, single buffered']
    #allocation12 [shape = 's32[1]{0}', space=sflag, size = 0x4, scoped, tag = 'scoped memory for tpu_custom_call.1']
    #allocation13 [shape = 'u8[4096]{0}', space=vmem, size = 0x1000, scoped, tag = 'input window, operand 5, single buffered']
    #allocation14 [shape = 'u8[1024]{0}', space=vmem, size = 0x400, scoped, tag = 'input window, operand 6, single buffered']
    #allocation15 [shape = 's32[1]{0}', space=sflag, size = 0x4, scoped, tag = 'scoped memory for tpu_custom_call.1']
    #allocation16 [shape = 'u8[1024]{0}', space=vmem, size = 0x400, scoped, tag = 'input window, operand 7, single buffered']
    #allocation17 [shape = 'u8[32768]{0}', space=vmem, size = 0x8000, scoped, tag = 'input window, operand 8, single buffered']
    #allocation18 [shape = 's32[1]{0}', space=sflag, size = 0x4, scoped, tag = 'scoped memory for tpu_custom_call.1']
    #allocation19 [shape = 'u8[2048]{0}', space=vmem, size = 0x800, scoped, tag = 'input window, operand 9, single buffered']
    #allocation20 [shape = 'u8[1024]{0}', space=vmem, size = 0x400, scoped, tag = 'output window, operand 0, single buffered']
    %15 = vsyncpa [#allocation6], 0
    %16 = vsyncpa [#allocation4], 0
    %s17 = scalar_lea.sflag [#allocation4], 1
    %18 = vsyncpa %s17, 0
    %19 = vsyncpa [#allocation9], 0
    %s20 = scalar_lea.sflag [#allocation9], 1
    %21 = vsyncpa %s20, 0
    %22 = vsyncpa [#allocation12], 0
    %23 = vsyncpa [#allocation15], 0
    %24 = vsyncpa [#allocation18], 0
    %25 = vsyncpa [#allocation5], 0
    loop: start=0, step=1, limit=4
    $region2: #{tpu_custom_call.1} parent=1 // loop_pre_header
      _
    $region3: #{tpu_custom_call.1} parent=1 // loop_header
      %s27 = sphi 0, %s31
      %p28 = scmp.ge.s32.totalorder %s27, 4
      %s35 = sphi 0, %s35
      %s37 = sphi 0, %s35
      %s38 = sphi 0, %s37
      %s52 = sphi 0, %s38
      %s58 = sphi 0, %s60
      %s61 = sphi 0, %s58
      %s62 = sphi 0, %s61
      %s78 = sphi 0, %s62
      %s84 = sphi 0, %s86
      %s87 = sphi 0, %s84
      %s88 = sphi 0, %s87
      %s104 = sphi 0, %s88
      %s108 = sphi 0, %s108
      %s110 = sphi 0, %s108
      %s111 = sphi 0, %s110
      %s125 = sphi 0, %s111
      %s129 = sphi 0, %s129
      %s131 = sphi 0, %s129
      %s132 = sphi 0, %s131
      %s146 = sphi 0, %s132
      %s150 = sphi 0, %s150
      %s152 = sphi 0, %s150
      %s153 = sphi 0, %s152
      %s167 = sphi 0, %s153
      %s171 = sphi 0, %s171
      %s173 = sphi 0, %s171
      %s174 = sphi 0, %s173
      %s188 = sphi 0, %s174
      %s192 = sphi 0, %s192
      %s194 = sphi 0, %s192
      %s195 = sphi 0, %s194
      %s209 = sphi 0, %s195
      %s213 = sphi 0, %s213
      %s215 = sphi 0, %s213
      %s216 = sphi 0, %s215
      %s230 = sphi 0, %s216
      %s234 = sphi 0, %s234
      %s236 = sphi 0, %s234
      %s237 = sphi 0, %s236
      %s251 = sphi 0, %s237
      %s255 = sphi 0, %s255
      %s257 = sphi 0, %s255
      %s258 = sphi 0, %s257
      %s272 = sphi 0, %s258
    $region4: #{tpu_custom_call.1} parent=1 // loop_header_branch
      %30 = sbr.rel (%p28) target = $region8
    $region5: #{tpu_custom_call.1} parent=1 // loop_body
      %s32 = ssub.s32 %s27, 1
      %s33 = ssub.s32 %s27, 2
      %s34 = sadd.s32 %s27, 1
      %s36 = sadd.s32 %s35, 1
      %p39 = scmp.eq.s32.totalorder %s27, 1
      %p40 = scmp.ne.s32.totalorder %s35, %s37
      %p41 = scmp.eq.s32.totalorder %s27, 0
      %p42 = por %p40, %p41
      %p43 = scmp.ne.s32.totalorder %s35, %s37
      %p44 = scmp.eq.s32.totalorder %s32, 1
      %p45 = por %p43, %p44
      %p46 = scmp.ne.s32.totalorder %s37, %s38
      %p47 = scmp.eq.s32.totalorder %s32, 0
      %p48 = por %p46, %p47
      %p49 = scmp.ne.s32.totalorder %s37, %s38
      %p50 = scmp.eq.s32.totalorder %s33, 1
      %p51 = por %p49, %p50
      %p53 = scmp.ne.s32.totalorder %s38, %s52
      %p54 = scmp.eq.s32.totalorder %s33, 0
      %p55 = por %p53, %p54
      %s56 = ssub.s32 %s27, %s34
      %p57 = scmp.eq.s32.totalorder %s56, 0
      %s59 = sadd.s32 %s58, 1
      %s60 = scalar_select %p57, %s58, %s59
      %p63 = pneg %p57
      %p64 = scmp.eq.s32.totalorder %s27, 1
      %p65 = por %p63, %p64
      %p66 = scmp.ne.s32.totalorder %s58, %s61
      %p67 = scmp.eq.s32.totalorder %s27, 0
      %p68 = por %p66, %p67
      %p69 = scmp.ne.s32.totalorder %s58, %s61
      %p70 = scmp.eq.s32.totalorder %s32, 1
      %p71 = por %p69, %p70
      %p72 = scmp.ne.s32.totalorder %s61, %s62
      %p73 = scmp.eq.s32.totalorder %s32, 0
      %p74 = por %p72, %p73
      %p75 = scmp.ne.s32.totalorder %s61, %s62
      %p76 = scmp.eq.s32.totalorder %s33, 1
      %p77 = por %p75, %p76
      %p79 = scmp.ne.s32.totalorder %s62, %s78
      %p80 = scmp.eq.s32.totalorder %s33, 0
      %p81 = por %p79, %p80
      %s82 = ssub.s32 %s27, %s34
      %p83 = scmp.eq.s32.totalorder %s82, 0
      %s85 = sadd.s32 %s84, 1
      %s86 = scalar_select %p83, %s84, %s85
      %p89 = pneg %p83
      %p90 = scmp.eq.s32.totalorder %s27, 1
      %p91 = por %p89, %p90
      %p92 = scmp.ne.s32.totalorder %s84, %s87
      %p93 = scmp.eq.s32.totalorder %s27, 0
      %p94 = por %p92, %p93
      %p95 = scmp.ne.s32.totalorder %s84, %s87
      %p96 = scmp.eq.s32.totalorder %s32, 1
      %p97 = por %p95, %p96
      %p98 = scmp.ne.s32.totalorder %s87, %s88
      %p99 = scmp.eq.s32.totalorder %s32, 0
      %p100 = por %p98, %p99
      %p101 = scmp.ne.s32.totalorder %s87, %s88
      %p102 = scmp.eq.s32.totalorder %s33, 1
      %p103 = por %p101, %p102
      %p105 = scmp.ne.s32.totalorder %s88, %s104
      %p106 = scmp.eq.s32.totalorder %s33, 0
      %p107 = por %p105, %p106
      %s109 = sadd.s32 %s108, 1
      %p112 = scmp.eq.s32.totalorder %s27, 1
      %p113 = scmp.ne.s32.totalorder %s108, %s110
      %p114 = scmp.eq.s32.totalorder %s27, 0
      %p115 = por %p113, %p114
      %p116 = scmp.ne.s32.totalorder %s108, %s110
      %p117 = scmp.eq.s32.totalorder %s32, 1
      %p118 = por %p116, %p117
      %p119 = scmp.ne.s32.totalorder %s110, %s111
      %p120 = scmp.eq.s32.totalorder %s32, 0
      %p121 = por %p119, %p120
      %p122 = scmp.ne.s32.totalorder %s110, %s111
      %p123 = scmp.eq.s32.totalorder %s33, 1
      %p124 = por %p122, %p123
      %p126 = scmp.ne.s32.totalorder %s111, %s125
      %p127 = scmp.eq.s32.totalorder %s33, 0
      %p128 = por %p126, %p127
      %s130 = sadd.s32 %s129, 1
      %p133 = scmp.eq.s32.totalorder %s27, 1
      %p134 = scmp.ne.s32.totalorder %s129, %s131
      %p135 = scmp.eq.s32.totalorder %s27, 0
      %p136 = por %p134, %p135
      %p137 = scmp.ne.s32.totalorder %s129, %s131
      %p138 = scmp.eq.s32.totalorder %s32, 1
      %p139 = por %p137, %p138
      %p140 = scmp.ne.s32.totalorder %s131, %s132
      %p141 = scmp.eq.s32.totalorder %s32, 0
      %p142 = por %p140, %p141
      %p143 = scmp.ne.s32.totalorder %s131, %s132
      %p144 = scmp.eq.s32.totalorder %s33, 1
      %p145 = por %p143, %p144
      %p147 = scmp.ne.s32.totalorder %s132, %s146
      %p148 = scmp.eq.s32.totalorder %s33, 0
      %p149 = por %p147, %p148
      %s151 = sadd.s32 %s150, 1
      %p154 = scmp.eq.s32.totalorder %s27, 1
      %p155 = scmp.ne.s32.totalorder %s150, %s152
      %p156 = scmp.eq.s32.totalorder %s27, 0
      %p157 = por %p155, %p156
      %p158 = scmp.ne.s32.totalorder %s150, %s152
      %p159 = scmp.eq.s32.totalorder %s32, 1
      %p160 = por %p158, %p159
      %p161 = scmp.ne.s32.totalorder %s152, %s153
      %p162 = scmp.eq.s32.totalorder %s32, 0
      %p163 = por %p161, %p162
      %p164 = scmp.ne.s32.totalorder %s152, %s153
      %p165 = scmp.eq.s32.totalorder %s33, 1
      %p166 = por %p164, %p165
      %p168 = scmp.ne.s32.totalorder %s153, %s167
      %p169 = scmp.eq.s32.totalorder %s33, 0
      %p170 = por %p168, %p169
      %s172 = sadd.s32 %s171, 1
      %p175 = scmp.eq.s32.totalorder %s27, 1
      %p176 = scmp.ne.s32.totalorder %s171, %s173
      %p177 = scmp.eq.s32.totalorder %s27, 0
      %p178 = por %p176, %p177
      %p179 = scmp.ne.s32.totalorder %s171, %s173
      %p180 = scmp.eq.s32.totalorder %s32, 1
      %p181 = por %p179, %p180
      %p182 = scmp.ne.s32.totalorder %s173, %s174
      %p183 = scmp.eq.s32.totalorder %s32, 0
      %p184 = por %p182, %p183
      %p185 = scmp.ne.s32.totalorder %s173, %s174
      %p186 = scmp.eq.s32.totalorder %s33, 1
      %p187 = por %p185, %p186
      %p189 = scmp.ne.s32.totalorder %s174, %s188
      %p190 = scmp.eq.s32.totalorder %s33, 0
      %p191 = por %p189, %p190
      %s193 = sadd.s32 %s192, 1
      %p196 = scmp.eq.s32.totalorder %s27, 1
      %p197 = scmp.ne.s32.totalorder %s192, %s194
      %p198 = scmp.eq.s32.totalorder %s27, 0
      %p199 = por %p197, %p198
      %p200 = scmp.ne.s32.totalorder %s192, %s194
      %p201 = scmp.eq.s32.totalorder %s32, 1
      %p202 = por %p200, %p201
      %p203 = scmp.ne.s32.totalorder %s194, %s195
      %p204 = scmp.eq.s32.totalorder %s32, 0
      %p205 = por %p203, %p204
      %p206 = scmp.ne.s32.totalorder %s194, %s195
      %p207 = scmp.eq.s32.totalorder %s33, 1
      %p208 = por %p206, %p207
      %p210 = scmp.ne.s32.totalorder %s195, %s209
      %p211 = scmp.eq.s32.totalorder %s33, 0
      %p212 = por %p210, %p211
      %s214 = sadd.s32 %s213, 1
      %p217 = scmp.eq.s32.totalorder %s27, 1
      %p218 = scmp.ne.s32.totalorder %s213, %s215
      %p219 = scmp.eq.s32.totalorder %s27, 0
      %p220 = por %p218, %p219
      %p221 = scmp.ne.s32.totalorder %s213, %s215
      %p222 = scmp.eq.s32.totalorder %s32, 1
      %p223 = por %p221, %p222
      %p224 = scmp.ne.s32.totalorder %s215, %s216
      %p225 = scmp.eq.s32.totalorder %s32, 0
      %p226 = por %p224, %p225
      %p227 = scmp.ne.s32.totalorder %s215, %s216
      %p228 = scmp.eq.s32.totalorder %s33, 1
      %p229 = por %p227, %p228
      %p231 = scmp.ne.s32.totalorder %s216, %s230
      %p232 = scmp.eq.s32.totalorder %s33, 0
      %p233 = por %p231, %p232
      %s235 = sadd.s32 %s234, 1
      %p238 = scmp.eq.s32.totalorder %s27, 1
      %p239 = scmp.ne.s32.totalorder %s234, %s236
      %p240 = scmp.eq.s32.totalorder %s27, 0
      %p241 = por %p239, %p240
      %p242 = scmp.ne.s32.totalorder %s234, %s236
      %p243 = scmp.eq.s32.totalorder %s32, 1
      %p244 = por %p242, %p243
      %p245 = scmp.ne.s32.totalorder %s236, %s237
      %p246 = scmp.eq.s32.totalorder %s32, 0
      %p247 = por %p245, %p246
      %p248 = scmp.ne.s32.totalorder %s236, %s237
      %p249 = scmp.eq.s32.totalorder %s33, 1
      %p250 = por %p248, %p249
      %p252 = scmp.ne.s32.totalorder %s237, %s251
      %p253 = scmp.eq.s32.totalorder %s33, 0
      %p254 = por %p252, %p253
      %s256 = sadd.s32 %s255, 1
      %p259 = scmp.eq.s32.totalorder %s27, 1
      %p260 = scmp.ne.s32.totalorder %s255, %s257
      %p261 = scmp.eq.s32.totalorder %s27, 0
      %p262 = por %p260, %p261
      %p263 = scmp.ne.s32.totalorder %s255, %s257
      %p264 = scmp.eq.s32.totalorder %s32, 1
      %p265 = por %p263, %p264
      %p266 = scmp.ne.s32.totalorder %s257, %s258
      %p267 = scmp.eq.s32.totalorder %s32, 0
      %p268 = por %p266, %p267
      %p269 = scmp.ne.s32.totalorder %s257, %s258
      %p270 = scmp.eq.s32.totalorder %s33, 1
      %p271 = por %p269, %p270
      %p273 = scmp.ne.s32.totalorder %s258, %s272
      %p274 = scmp.eq.s32.totalorder %s33, 0
      %p275 = por %p273, %p274
      %p276 = scmp.le.s32.totalorder 1, %s27
      %p277 = scmp.lt.s32.totalorder %s27, 3
      %p278 = pnand %p276, %p277
      %p279 = pneg %p278
      // Predicated region
      $region9: #{tpu_custom_call.1} parent=5 // pred_check
        _
      $region10: #{tpu_custom_call.1} parent=5 // pred_check_branch
        %281 = sbr.rel (%p278) target = $region12
      $region11: #{tpu_custom_call.1} parent=5 // pred_region
        %s282 = ssub.s32 %s27, 1
        // Predicated region
        $region13: #{tpu_custom_call.1} parent=11 // pred_check
          %p283 = pneg %p48
        $region14: #{tpu_custom_call.1} parent=11 // pred_check_branch
          %285 = sbr.rel (%p283) target = $region16
        $region15: #{tpu_custom_call.1} parent=11 // pred_region
          %s287 = ssub.s32 16, 16
          %288 = vsyncadd [#allocation6], %s287
          %291 = dma.hbm_to_smem %s0, 16, [#allocation3], [#allocation6]
        $region16: #{tpu_custom_call.1} parent=11 // pred_fallthru
          _
        // Predicated region
        $region17: #{tpu_custom_call.1} parent=11 // pred_check
          %p292 = pneg %p121
        $region18: #{tpu_custom_call.1} parent=11 // pred_check_branch
          %294 = sbr.rel (%p292) target = $region20
        $region19: #{tpu_custom_call.1} parent=11 // pred_region
          %s296 = ssub.s32 64, 64
          %297 = vsyncadd [#allocation9], %s296
          %s298 = sshll.u32 [#allocation10], 4
          %s299 = int_to_ptr.vmem [resolvable:$true] %s298
          %304 = dma.hbm_to_vmem [thread:$0]  %s3, 64, %s299, [#allocation9], 16, 16, 1
        $region20: #{tpu_custom_call.1} parent=11 // pred_fallthru
          _
        // Predicated region
        $region21: #{tpu_custom_call.1} parent=11 // pred_check
          %p305 = pneg %p142
        $region22: #{tpu_custom_call.1} parent=11 // pred_check_branch
          %307 = sbr.rel (%p305) target = $region24
        $region23: #{tpu_custom_call.1} parent=11 // pred_region
          %s309 = ssub.s32 2048, 2048
          %310 = vsyncadd [#allocation12], %s309
          %s311 = sshll.u32 [#allocation11], 4
          %s312 = int_to_ptr.vmem [resolvable:$true] %s311
          %317 = dma.hbm_to_vmem [thread:$0]  %s4, 2048, %s312, [#allocation12], 64, 64, 4
        $region24: #{tpu_custom_call.1} parent=11 // pred_fallthru
          _
        // Predicated region
        $region25: #{tpu_custom_call.1} parent=11 // pred_check
          %p318 = pneg %p163
        $region26: #{tpu_custom_call.1} parent=11 // pred_check_branch
          %320 = sbr.rel (%p318) target = $region28
        $region27: #{tpu_custom_call.1} parent=11 // pred_region
          %s322 = ssub.s32 128, 128
          %323 = vsyncadd [#allocation12], %s322
          %s324 = sshll.u32 [#allocation13], 4
          %s325 = int_to_ptr.vmem [resolvable:$true] %s324
          %330 = dma.hbm_to_vmem [thread:$0]  %s5, 128, %s325, [#allocation12], 16, 16, 1
        $region28: #{tpu_custom_call.1} parent=11 // pred_fallthru
          _
        // Predicated region
        $region29: #{tpu_custom_call.1} parent=11 // pred_check
          %p331 = pneg %p184
        $region30: #{tpu_custom_call.1} parent=11 // pred_check_branch
          %333 = sbr.rel (%p331) target = $region32
        $region31: #{tpu_custom_call.1} parent=11 // pred_region
          %s335 = ssub.s32 32, 32
          %336 = vsyncadd [#allocation15], %s335
          %s337 = sshll.u32 [#allocation14], 4
          %s338 = int_to_ptr.vmem [resolvable:$true] %s337
          %343 = dma.hbm_to_vmem [thread:$0]  %s6, 32, %s338, [#allocation15], 16, 16, 1
        $region32: #{tpu_custom_call.1} parent=11 // pred_fallthru
          _
        // Predicated region
        $region33: #{tpu_custom_call.1} parent=11 // pred_check
          %p344 = pneg %p205
        $region34: #{tpu_custom_call.1} parent=11 // pred_check_branch
          %346 = sbr.rel (%p344) target = $region36
        $region35: #{tpu_custom_call.1} parent=11 // pred_region
          %s348 = ssub.s32 32, 32
          %349 = vsyncadd [#allocation15], %s348
          %s350 = sshll.u32 [#allocation16], 4
          %s351 = int_to_ptr.vmem [resolvable:$true] %s350
          %356 = dma.hbm_to_vmem [thread:$0]  %s7, 32, %s351, [#allocation15], 16, 16, 1
        $region36: #{tpu_custom_call.1} parent=11 // pred_fallthru
          _
        // Predicated region
        $region37: #{tpu_custom_call.1} parent=11 // pred_check
          %p357 = pneg %p226
        $region38: #{tpu_custom_call.1} parent=11 // pred_check_branch
          %359 = sbr.rel (%p357) target = $region40
        $region39: #{tpu_custom_call.1} parent=11 // pred_region
          %s361 = ssub.s32 1024, 1024
          %362 = vsyncadd [#allocation18], %s361
          %s363 = sshll.u32 [#allocation17], 4
          %s364 = int_to_ptr.vmem [resolvable:$true] %s363
          %369 = dma.hbm_to_vmem [thread:$0]  %s8, 1024, %s364, [#allocation18], 64, 64, 4
        $region40: #{tpu_custom_call.1} parent=11 // pred_fallthru
          _
        // Predicated region
        $region41: #{tpu_custom_call.1} parent=11 // pred_check
          %p370 = pneg %p247
        $region42: #{tpu_custom_call.1} parent=11 // pred_check_branch
          %372 = sbr.rel (%p370) target = $region44
        $region43: #{tpu_custom_call.1} parent=11 // pred_region
          %s374 = ssub.s32 64, 64
          %375 = vsyncadd [#allocation18], %s374
          %s376 = sshll.u32 [#allocation19], 4
          %s377 = int_to_ptr.vmem [resolvable:$true] %s376
          %382 = dma.hbm_to_vmem [thread:$0]  %s9, 64, %s377, [#allocation18], 16, 16, 1
        $region44: #{tpu_custom_call.1} parent=11 // pred_fallthru
          _
      $region12: #{tpu_custom_call.1} parent=5 // pred_fallthru
        _
      %p383 = scmp.lt.s32.totalorder %s27, 2
      // Predicated region
      $region45: #{tpu_custom_call.1} parent=5 // pred_check
        %p384 = pneg %p383
      $region46: #{tpu_custom_call.1} parent=5 // pred_check_branch
        %386 = sbr.rel (%p384) target = $region48
      $region47: #{tpu_custom_call.1} parent=5 // pred_region
        // Predicated region
        $region49: #{tpu_custom_call.1} parent=47 // pred_check
          %p387 = pneg %p68
        $region50: #{tpu_custom_call.1} parent=47 // pred_check_branch
          %389 = sbr.rel (%p387) target = $region52
        $region51: #{tpu_custom_call.1} parent=47 // pred_region
          %s390 = sand.u32 %s58, 1
          %s391 = scalar_lea.sflag [#allocation4], %s390
          %s392 = sand.u32 %s58, 1
          %s393 = smul.addr %s392, 72
          %s394 = scalar_lea.vmem [#allocation7], %s393
          %s395 = smul.u32 36, %s27
          %s397 = ssub.s32 1152, 1152
          %398 = vsyncadd %s391, %s397
          %s399 = smul.addr %s395, 32
          %s400 = scalar_lea.hbm %s1, %s399
          %s402 = sshll.u32 %s394, 4
          %s403 = int_to_ptr.vmem [resolvable:$true] %s402
          %405 = dma.hbm_to_vmem [thread:$0]  %s400, 1152, %s403, %s391
        $region52: #{tpu_custom_call.1} parent=47 // pred_fallthru
          _
        // Predicated region
        $region53: #{tpu_custom_call.1} parent=47 // pred_check
          %p406 = pneg %p94
        $region54: #{tpu_custom_call.1} parent=47 // pred_check_branch
          %408 = sbr.rel (%p406) target = $region56
        $region55: #{tpu_custom_call.1} parent=47 // pred_region
          %s409 = sand.u32 %s27, 1
          %s410 = scalar_lea.sflag [#allocation9], %s409
          %s411 = sand.u32 %s84, 1
          %s412 = smul.addr %s411, 2304
          %s413 = scalar_lea.vmem [#allocation8], %s412
          %s414 = smul.u32 576, %s27
          %s416 = ssub.s32 36864, 36864
          %417 = vsyncadd %s410, %s416
          %s418 = smul.addr %s414, 64
          %s419 = scalar_lea.hbm %s2, %s418
          %s420 = sshll.u32 %s413, 4
          %s421 = int_to_ptr.vmem [resolvable:$true] %s420
          %426 = dma.hbm_to_vmem [thread:$0]  %s419, 36864, %s421, %s410, 64, 64, 4
        $region56: #{tpu_custom_call.1} parent=47 // pred_fallthru
          _
      $region48: #{tpu_custom_call.1} parent=5 // pred_fallthru
        _
      %p427 = scmp.le.s32.totalorder 1, %s27
      %p428 = scmp.lt.s32.totalorder %s27, 3
      %p429 = pnand %p427, %p428
      %p430 = pneg %p429
      // Predicated region
      $region57: #{tpu_custom_call.1} parent=5 // pred_check
        _
      $region58: #{tpu_custom_call.1} parent=5 // pred_check_branch
        %432 = sbr.rel (%p429) target = $region60
      $region59: #{tpu_custom_call.1} parent=5 // pred_region
        %s433 = ssub.s32 %s27, 1
        // Predicated region
        $region61: #{tpu_custom_call.1} parent=59 // pred_check
          %p434 = pneg %p48
        $region62: #{tpu_custom_call.1} parent=59 // pred_check_branch
          %436 = sbr.rel (%p434) target = $region64
        $region63: #{tpu_custom_call.1} parent=59 // pred_region
          %437 = dma.done [#allocation6], 16
        $region64: #{tpu_custom_call.1} parent=59 // pred_fallthru
          _
        %s438 = sand.u32 %s61, 1
        %s439 = scalar_lea.sflag [#allocation4], %s438
        %s440 = sand.u32 %s61, 1
        %s441 = smul.addr %s440, 72
        %s442 = scalar_lea.vmem [#allocation7], %s441
        // Predicated region
        $region65: #{tpu_custom_call.1} parent=59 // pred_check
          %p443 = pneg %p74
        $region66: #{tpu_custom_call.1} parent=59 // pred_check_branch
          %445 = sbr.rel (%p443) target = $region68
        $region67: #{tpu_custom_call.1} parent=59 // pred_region
          %446 = dma.done %s439, 1152
        $region68: #{tpu_custom_call.1} parent=59 // pred_fallthru
          _
        %s447 = sand.u32 %s32, 1
        %s448 = scalar_lea.sflag [#allocation9], %s447
        %s449 = sand.u32 %s87, 1
        %s450 = smul.addr %s449, 2304
        %s451 = scalar_lea.vmem [#allocation8], %s450
        // Predicated region
        $region69: #{tpu_custom_call.1} parent=59 // pred_check
          %p452 = pneg %p100
        $region70: #{tpu_custom_call.1} parent=59 // pred_check_branch
          %454 = sbr.rel (%p452) target = $region72
        $region71: #{tpu_custom_call.1} parent=59 // pred_region
          %455 = dma.done %s448, 36864
        $region72: #{tpu_custom_call.1} parent=59 // pred_fallthru
          _
        // Predicated region
        $region73: #{tpu_custom_call.1} parent=59 // pred_check
          %p456 = pneg %p121
        $region74: #{tpu_custom_call.1} parent=59 // pred_check_branch
          %458 = sbr.rel (%p456) target = $region76
        $region75: #{tpu_custom_call.1} parent=59 // pred_region
          %459 = dma.done [#allocation9], 64
        $region76: #{tpu_custom_call.1} parent=59 // pred_fallthru
          _
        // Predicated region
        $region77: #{tpu_custom_call.1} parent=59 // pred_check
          %p460 = pneg %p142
        $region78: #{tpu_custom_call.1} parent=59 // pred_check_branch
          %462 = sbr.rel (%p460) target = $region80
        $region79: #{tpu_custom_call.1} parent=59 // pred_region
          %463 = dma.done [#allocation12], 2048
        $region80: #{tpu_custom_call.1} parent=59 // pred_fallthru
          _
        // Predicated region
        $region81: #{tpu_custom_call.1} parent=59 // pred_check
          %p464 = pneg %p163
        $region82: #{tpu_custom_call.1} parent=59 // pred_check_branch
          %466 = sbr.rel (%p464) target = $region84
        $region83: #{tpu_custom_call.1} parent=59 // pred_region
          %467 = dma.done [#allocation12], 128
        $region84: #{tpu_custom_call.1} parent=59 // pred_fallthru
          _
        // Predicated region
        $region85: #{tpu_custom_call.1} parent=59 // pred_check
          %p468 = pneg %p184
        $region86: #{tpu_custom_call.1} parent=59 // pred_check_branch
          %470 = sbr.rel (%p468) target = $region88
        $region87: #{tpu_custom_call.1} parent=59 // pred_region
          %471 = dma.done [#allocation15], 32
        $region88: #{tpu_custom_call.1} parent=59 // pred_fallthru
          _
        // Predicated region
        $region89: #{tpu_custom_call.1} parent=59 // pred_check
          %p472 = pneg %p205
        $region90: #{tpu_custom_call.1} parent=59 // pred_check_branch
          %474 = sbr.rel (%p472) target = $region92
        $region91: #{tpu_custom_call.1} parent=59 // pred_region
          %475 = dma.done [#allocation15], 32
        $region92: #{tpu_custom_call.1} parent=59 // pred_fallthru
          _
        // Predicated region
        $region93: #{tpu_custom_call.1} parent=59 // pred_check
          %p476 = pneg %p226
        $region94: #{tpu_custom_call.1} parent=59 // pred_check_branch
          %478 = sbr.rel (%p476) target = $region96
        $region95: #{tpu_custom_call.1} parent=59 // pred_region
          %479 = dma.done [#allocation18], 1024
        $region96: #{tpu_custom_call.1} parent=59 // pred_fallthru
          _
        // Predicated region
        $region97: #{tpu_custom_call.1} parent=59 // pred_check
          %p480 = pneg %p247
        $region98: #{tpu_custom_call.1} parent=59 // pred_check_branch
          %482 = sbr.rel (%p480) target = $region100
        $region99: #{tpu_custom_call.1} parent=59 // pred_region
          %483 = dma.done [#allocation18], 64
        $region100: #{tpu_custom_call.1} parent=59 // pred_fallthru
          _
        %484 = sfence
        %p485 = pneg %p48
        %p486 = pneg %p45
        %s487 = sand.u32 %s61, 1
        %s488 = scalar_lea.sflag [#allocation4], %s487
        %s489 = sand.u32 %s61, 1
        %s490 = smul.addr %s489, 72
        %s491 = scalar_lea.vmem [#allocation7], %s490
        %p492 = pneg %p74
        %p493 = pneg %p71
        %s494 = sand.u32 %s32, 1
        %s495 = scalar_lea.sflag [#allocation9], %s494
        %s496 = sand.u32 %s87, 1
        %s497 = smul.addr %s496, 2304
        %s498 = scalar_lea.vmem [#allocation8], %s497
        %p499 = pneg %p100
        %p500 = pneg %p97
        %p501 = pneg %p121
        %p502 = pneg %p118
        %p503 = pneg %p142
        %p504 = pneg %p139
        %p505 = pneg %p163
        %p506 = pneg %p160
        %p507 = pneg %p184
        %p508 = pneg %p181
        %p509 = pneg %p205
        %p510 = pneg %p202
        %p511 = pneg %p226
        %p512 = pneg %p223
        %p513 = pneg %p247
        %p514 = pneg %p244
        %p515 = pneg %p268
        %p516 = pneg %p265
        %s517 = smul.u32 36, %s32
        %s518 = smul.u32 576, %s32
        %p519 = scmp.eq.s32.totalorder %s32, 0
        // Predicated region
        $region101: #{tpu_custom_call.1} parent=59 // pred_check
          %p520 = pneg %p519
        $region102: #{tpu_custom_call.1} parent=59 // pred_check_branch
          %522 = sbr.rel (%p520) target = $region104
        $region103: #{tpu_custom_call.1} parent=59 // pred_region
          %523 = vst [vmem:[#allocation2] sm:$0x3] 0.0
        $region104: #{tpu_custom_call.1} parent=59 // pred_fallthru
          _
        %v524 = vld [vmem:[#allocation2] sm:$0x3]
        %v525 = vld [vmem:[%s442] sm:$0xff]
        %v526 = vld [vmem:[%s442 + $0x8] sm:$0xff]
        %v527 = vld [vmem:[%s442 + $0x10] sm:$0xff]
        %v528 = vld [vmem:[%s442 + $0x18] sm:$0xff]
        %v529 = vld [vmem:[%s442 + $0x20] sm:$0xff]
        %v530 = vld [vmem:[%s442 + $0x28] sm:$0xff]
        %v531 = vld [vmem:[%s442 + $0x30] sm:$0xff]
        %v532 = vld [vmem:[%s442 + $0x38] sm:$0xff]
        %v533 = vld [vmem:[%s442 + $0x40] sm:$0xff]
        %v534 = vld [vmem:[%s451] sm:$0xf]
        %v535 = vld [vmem:[%s451 + $0x4] sm:$0xf]
        %v536 = vld [vmem:[%s451 + $0x8] sm:$0xf]
        %v537 = vld [vmem:[%s451 + $0xc] sm:$0xf]
        %v538 = vld [vmem:[%s451 + $0x10] sm:$0xf]
        %v539 = vld [vmem:[%s451 + $0x14] sm:$0xf]
        %v540 = vld [vmem:[%s451 + $0x18] sm:$0xf]
        %v541 = vld [vmem:[%s451 + $0x1c] sm:$0xf]
        %v542 = vld [vmem:[%s451 + $0x20] sm:$0xf]
        %v543 = vld [vmem:[%s451 + $0x24] sm:$0xf]
        %v544 = vld [vmem:[%s451 + $0x28] sm:$0xf]
        %v545 = vld [vmem:[%s451 + $0x2c] sm:$0xf]
        %v546 = vld [vmem:[%s451 + $0x30] sm:$0xf]
        %v547 = vld [vmem:[%s451 + $0x34] sm:$0xf]
        %v548 = vld [vmem:[%s451 + $0x38] sm:$0xf]
        %v549 = vld [vmem:[%s451 + $0x3c] sm:$0xf]
        %v550 = vld [vmem:[%s451 + $0x40] sm:$0xf]
        %v551 = vld [vmem:[%s451 + $0x44] sm:$0xf]
        %v552 = vld [vmem:[%s451 + $0x48] sm:$0xf]
        %v553 = vld [vmem:[%s451 + $0x4c] sm:$0xf]
        %v554 = vld [vmem:[%s451 + $0x50] sm:$0xf]
        %v555 = vld [vmem:[%s451 + $0x54] sm:$0xf]
        %v556 = vld [vmem:[%s451 + $0x58] sm:$0xf]
        %v557 = vld [vmem:[%s451 + $0x5c] sm:$0xf]
        %v558 = vld [vmem:[%s451 + $0x60] sm:$0xf]
        %v559 = vld [vmem:[%s451 + $0x64] sm:$0xf]
        %v560 = vld [vmem:[%s451 + $0x68] sm:$0xf]
        %v561 = vld [vmem:[%s451 + $0x6c] sm:$0xf]
        %v562 = vld [vmem:[%s451 + $0x70] sm:$0xf]
        %v563 = vld [vmem:[%s451 + $0x74] sm:$0xf]
        %v564 = vld [vmem:[%s451 + $0x78] sm:$0xf]
        %v565 = vld [vmem:[%s451 + $0x7c] sm:$0xf]
        %v566 = vld [vmem:[%s451 + $0x80] sm:$0xf]
        %v567 = vld [vmem:[%s451 + $0x84] sm:$0xf]
        %v568 = vld [vmem:[%s451 + $0x88] sm:$0xf]
        %v569 = vld [vmem:[%s451 + $0x8c] sm:$0xf]
        %v570 = vld [vmem:[%s451 + $0x90] sm:$0xf]
        %v571 = vld [vmem:[%s451 + $0x94] sm:$0xf]
        %v572 = vld [vmem:[%s451 + $0x98] sm:$0xf]
        %v573 = vld [vmem:[%s451 + $0x9c] sm:$0xf]
        %v574 = vld [vmem:[%s451 + $0xa0] sm:$0xf]
        %v575 = vld [vmem:[%s451 + $0xa4] sm:$0xf]
        %v576 = vld [vmem:[%s451 + $0xa8] sm:$0xf]
        %v577 = vld [vmem:[%s451 + $0xac] sm:$0xf]
        %v578 = vld [vmem:[%s451 + $0xb0] sm:$0xf]
        %v579 = vld [vmem:[%s451 + $0xb4] sm:$0xf]
        %v580 = vld [vmem:[%s451 + $0xb8] sm:$0xf]
        %v581 = vld [vmem:[%s451 + $0xbc] sm:$0xf]
        %v582 = vld [vmem:[%s451 + $0xc0] sm:$0xf]
        %v583 = vld [vmem:[%s451 + $0xc4] sm:$0xf]
        %v584 = vld [vmem:[%s451 + $0xc8] sm:$0xf]
        %v585 = vld [vmem:[%s451 + $0xcc] sm:$0xf]
        %v586 = vld [vmem:[%s451 + $0xd0] sm:$0xf]
        %v587 = vld [vmem:[%s451 + $0xd4] sm:$0xf]
        %v588 = vld [vmem:[%s451 + $0xd8] sm:$0xf]
        %v589 = vld [vmem:[%s451 + $0xdc] sm:$0xf]
        %v590 = vld [vmem:[%s451 + $0xe0] sm:$0xf]
        %v591 = vld [vmem:[%s451 + $0xe4] sm:$0xf]
        %v592 = vld [vmem:[%s451 + $0xe8] sm:$0xf]
        %v593 = vld [vmem:[%s451 + $0xec] sm:$0xf]
        %v594 = vld [vmem:[%s451 + $0xf0] sm:$0xf]
        %v595 = vld [vmem:[%s451 + $0xf4] sm:$0xf]
        %v596 = vld [vmem:[%s451 + $0xf8] sm:$0xf]
        %v597 = vld [vmem:[%s451 + $0xfc] sm:$0xf]
        %v598 = vld [vmem:[%s451 + $0x100] sm:$0xf]
        %v599 = vld [vmem:[%s451 + $0x104] sm:$0xf]
        %v600 = vld [vmem:[%s451 + $0x108] sm:$0xf]
        %v601 = vld [vmem:[%s451 + $0x10c] sm:$0xf]
        %v602 = vld [vmem:[%s451 + $0x110] sm:$0xf]
        %v603 = vld [vmem:[%s451 + $0x114] sm:$0xf]
        %v604 = vld [vmem:[%s451 + $0x118] sm:$0xf]
        %v605 = vld [vmem:[%s451 + $0x11c] sm:$0xf]
        %v606 = vld [vmem:[%s451 + $0x120] sm:$0xf]
        %v607 = vld [vmem:[%s451 + $0x124] sm:$0xf]
        %v608 = vld [vmem:[%s451 + $0x128] sm:$0xf]
        %v609 = vld [vmem:[%s451 + $0x12c] sm:$0xf]
        %v610 = vld [vmem:[%s451 + $0x130] sm:$0xf]
        %v611 = vld [vmem:[%s451 + $0x134] sm:$0xf]
        %v612 = vld [vmem:[%s451 + $0x138] sm:$0xf]
        %v613 = vld [vmem:[%s451 + $0x13c] sm:$0xf]
        %v614 = vld [vmem:[%s451 + $0x140] sm:$0xf]
        %v615 = vld [vmem:[%s451 + $0x144] sm:$0xf]
        %v616 = vld [vmem:[%s451 + $0x148] sm:$0xf]
        %v617 = vld [vmem:[%s451 + $0x14c] sm:$0xf]
        %v618 = vld [vmem:[%s451 + $0x150] sm:$0xf]
        %v619 = vld [vmem:[%s451 + $0x154] sm:$0xf]
        %v620 = vld [vmem:[%s451 + $0x158] sm:$0xf]
        %v621 = vld [vmem:[%s451 + $0x15c] sm:$0xf]
        %v622 = vld [vmem:[%s451 + $0x160] sm:$0xf]
        %v623 = vld [vmem:[%s451 + $0x164] sm:$0xf]
        %v624 = vld [vmem:[%s451 + $0x168] sm:$0xf]
        %v625 = vld [vmem:[%s451 + $0x16c] sm:$0xf]
        %v626 = vld [vmem:[%s451 + $0x170] sm:$0xf]
        %v627 = vld [vmem:[%s451 + $0x174] sm:$0xf]
        %v628 = vld [vmem:[%s451 + $0x178] sm:$0xf]
        %v629 = vld [vmem:[%s451 + $0x17c] sm:$0xf]
        %v630 = vld [vmem:[%s451 + $0x180] sm:$0xf]
        %v631 = vld [vmem:[%s451 + $0x184] sm:$0xf]
        %v632 = vld [vmem:[%s451 + $0x188] sm:$0xf]
        %v633 = vld [vmem:[%s451 + $0x18c] sm:$0xf]
        %v634 = vld [vmem:[%s451 + $0x190] sm:$0xf]
        %v635 = vld [vmem:[%s451 + $0x194] sm:$0xf]
        %v636 = vld [vmem:[%s451 + $0x198] sm:$0xf]
        %v637 = vld [vmem:[%s451 + $0x19c] sm:$0xf]
        %v638 = vld [vmem:[%s451 + $0x1a0] sm:$0xf]
        %v639 = vld [vmem:[%s451 + $0x1a4] sm:$0xf]
        %v640 = vld [vmem:[%s451 + $0x1a8] sm:$0xf]
        %v641 = vld [vmem:[%s451 + $0x1ac] sm:$0xf]
        %v642 = vld [vmem:[%s451 + $0x1b0] sm:$0xf]
        %v643 = vld [vmem:[%s451 + $0x1b4] sm:$0xf]
        %v644 = vld [vmem:[%s451 + $0x1b8] sm:$0xf]
        %v645 = vld [vmem:[%s451 + $0x1bc] sm:$0xf]
        %v646 = vld [vmem:[%s451 + $0x1c0] sm:$0xf]
        %v647 = vld [vmem:[%s451 + $0x1c4] sm:$0xf]
        %v648 = vld [vmem:[%s451 + $0x1c8] sm:$0xf]
        %v649 = vld [vmem:[%s451 + $0x1cc] sm:$0xf]
        %v650 = vld [vmem:[%s451 + $0x1d0] sm:$0xf]
        %v651 = vld [vmem:[%s451 + $0x1d4] sm:$0xf]
        %v652 = vld [vmem:[%s451 + $0x1d8] sm:$0xf]
        %v653 = vld [vmem:[%s451 + $0x1dc] sm:$0xf]
        %v654 = vld [vmem:[%s451 + $0x1e0] sm:$0xf]
        %v655 = vld [vmem:[%s451 + $0x1e4] sm:$0xf]
        %v656 = vld [vmem:[%s451 + $0x1e8] sm:$0xf]
        %v657 = vld [vmem:[%s451 + $0x1ec] sm:$0xf]
        %v658 = vld [vmem:[%s451 + $0x1f0] sm:$0xf]
        %v659 = vld [vmem:[%s451 + $0x1f4] sm:$0xf]
        %v660 = vld [vmem:[%s451 + $0x1f8] sm:$0xf]
        %v661 = vld [vmem:[%s451 + $0x1fc] sm:$0xf]
        %v662 = vld [vmem:[%s451 + $0x200] sm:$0xf]
        %v663 = vld [vmem:[%s451 + $0x204] sm:$0xf]
        %v664 = vld [vmem:[%s451 + $0x208] sm:$0xf]
        %v665 = vld [vmem:[%s451 + $0x20c] sm:$0xf]
        %v666 = vld [vmem:[%s451 + $0x210] sm:$0xf]
        %v667 = vld [vmem:[%s451 + $0x214] sm:$0xf]
        %v668 = vld [vmem:[%s451 + $0x218] sm:$0xf]
        %v669 = vld [vmem:[%s451 + $0x21c] sm:$0xf]
        %v670 = vld [vmem:[%s451 + $0x220] sm:$0xf]
        %v671 = vld [vmem:[%s451 + $0x224] sm:$0xf]
        %v672 = vld [vmem:[%s451 + $0x228] sm:$0xf]
        %v673 = vld [vmem:[%s451 + $0x22c] sm:$0xf]
        %v674 = vld [vmem:[%s451 + $0x230] sm:$0xf]
        %v675 = vld [vmem:[%s451 + $0x234] sm:$0xf]
        %v676 = vld [vmem:[%s451 + $0x238] sm:$0xf]
        %v677 = vld [vmem:[%s451 + $0x23c] sm:$0xf]
        %v678 = vld [vmem:[%s451 + $0x240] sm:$0xf]
        %v679 = vld [vmem:[%s451 + $0x244] sm:$0xf]
        %v680 = vld [vmem:[%s451 + $0x248] sm:$0xf]
        %v681 = vld [vmem:[%s451 + $0x24c] sm:$0xf]
        %v682 = vld [vmem:[%s451 + $0x250] sm:$0xf]
        %v683 = vld [vmem:[%s451 + $0x254] sm:$0xf]
        %v684 = vld [vmem:[%s451 + $0x258] sm:$0xf]
        %v685 = vld [vmem:[%s451 + $0x25c] sm:$0xf]
        %v686 = vld [vmem:[%s451 + $0x260] sm:$0xf]
        %v687 = vld [vmem:[%s451 + $0x264] sm:$0xf]
        %v688 = vld [vmem:[%s451 + $0x268] sm:$0xf]
        %v689 = vld [vmem:[%s451 + $0x26c] sm:$0xf]
        %v690 = vld [vmem:[%s451 + $0x270] sm:$0xf]
        %v691 = vld [vmem:[%s451 + $0x274] sm:$0xf]
        %v692 = vld [vmem:[%s451 + $0x278] sm:$0xf]
        %v693 = vld [vmem:[%s451 + $0x27c] sm:$0xf]
        %v694 = vld [vmem:[%s451 + $0x280] sm:$0xf]
        %v695 = vld [vmem:[%s451 + $0x284] sm:$0xf]
        %v696 = vld [vmem:[%s451 + $0x288] sm:$0xf]
        %v697 = vld [vmem:[%s451 + $0x28c] sm:$0xf]
        %v698 = vld [vmem:[%s451 + $0x290] sm:$0xf]
        %v699 = vld [vmem:[%s451 + $0x294] sm:$0xf]
        %v700 = vld [vmem:[%s451 + $0x298] sm:$0xf]
        %v701 = vld [vmem:[%s451 + $0x29c] sm:$0xf]
        %v702 = vld [vmem:[%s451 + $0x2a0] sm:$0xf]
        %v703 = vld [vmem:[%s451 + $0x2a4] sm:$0xf]
        %v704 = vld [vmem:[%s451 + $0x2a8] sm:$0xf]
        %v705 = vld [vmem:[%s451 + $0x2ac] sm:$0xf]
        %v706 = vld [vmem:[%s451 + $0x2b0] sm:$0xf]
        %v707 = vld [vmem:[%s451 + $0x2b4] sm:$0xf]
        %v708 = vld [vmem:[%s451 + $0x2b8] sm:$0xf]
        %v709 = vld [vmem:[%s451 + $0x2bc] sm:$0xf]
        %v710 = vld [vmem:[%s451 + $0x2c0] sm:$0xf]
        %v711 = vld [vmem:[%s451 + $0x2c4] sm:$0xf]
        %v712 = vld [vmem:[%s451 + $0x2c8] sm:$0xf]
        %v713 = vld [vmem:[%s451 + $0x2cc] sm:$0xf]
        %v714 = vld [vmem:[%s451 + $0x2d0] sm:$0xf]
        %v715 = vld [vmem:[%s451 + $0x2d4] sm:$0xf]
        %v716 = vld [vmem:[%s451 + $0x2d8] sm:$0xf]
        %v717 = vld [vmem:[%s451 + $0x2dc] sm:$0xf]
        %v718 = vld [vmem:[%s451 + $0x2e0] sm:$0xf]
        %v719 = vld [vmem:[%s451 + $0x2e4] sm:$0xf]
        %v720 = vld [vmem:[%s451 + $0x2e8] sm:$0xf]
        %v721 = vld [vmem:[%s451 + $0x2ec] sm:$0xf]
        %v722 = vld [vmem:[%s451 + $0x2f0] sm:$0xf]
        %v723 = vld [vmem:[%s451 + $0x2f4] sm:$0xf]
        %v724 = vld [vmem:[%s451 + $0x2f8] sm:$0xf]
        %v725 = vld [vmem:[%s451 + $0x2fc] sm:$0xf]
        %v726 = vld [vmem:[%s451 + $0x300] sm:$0xf]
        %v727 = vld [vmem:[%s451 + $0x304] sm:$0xf]
        %v728 = vld [vmem:[%s451 + $0x308] sm:$0xf]
        %v729 = vld [vmem:[%s451 + $0x30c] sm:$0xf]
        %v730 = vld [vmem:[%s451 + $0x310] sm:$0xf]
        %v731 = vld [vmem:[%s451 + $0x314] sm:$0xf]
        %v732 = vld [vmem:[%s451 + $0x318] sm:$0xf]
        %v733 = vld [vmem:[%s451 + $0x31c] sm:$0xf]
        %v734 = vld [vmem:[%s451 + $0x320] sm:$0xf]
        %v735 = vld [vmem:[%s451 + $0x324] sm:$0xf]
        %v736 = vld [vmem:[%s451 + $0x328] sm:$0xf]
        %v737 = vld [vmem:[%s451 + $0x32c] sm:$0xf]
        %v738 = vld [vmem:[%s451 + $0x330] sm:$0xf]
        %v739 = vld [vmem:[%s451 + $0x334] sm:$0xf]
        %v740 = vld [vmem:[%s451 + $0x338] sm:$0xf]
        %v741 = vld [vmem:[%s451 + $0x33c] sm:$0xf]
        %v742 = vld [vmem:[%s451 + $0x340] sm:$0xf]
        %v743 = vld [vmem:[%s451 + $0x344] sm:$0xf]
        %v744 = vld [vmem:[%s451 + $0x348] sm:$0xf]
        %v745 = vld [vmem:[%s451 + $0x34c] sm:$0xf]
        %v746 = vld [vmem:[%s451 + $0x350] sm:$0xf]
        %v747 = vld [vmem:[%s451 + $0x354] sm:$0xf]
        %v748 = vld [vmem:[%s451 + $0x358] sm:$0xf]
        %v749 = vld [vmem:[%s451 + $0x35c] sm:$0xf]
        %v750 = vld [vmem:[%s451 + $0x360] sm:$0xf]
        %v751 = vld [vmem:[%s451 + $0x364] sm:$0xf]
        %v752 = vld [vmem:[%s451 + $0x368] sm:$0xf]
        %v753 = vld [vmem:[%s451 + $0x36c] sm:$0xf]
        %v754 = vld [vmem:[%s451 + $0x370] sm:$0xf]
        %v755 = vld [vmem:[%s451 + $0x374] sm:$0xf]
        %v756 = vld [vmem:[%s451 + $0x378] sm:$0xf]
        %v757 = vld [vmem:[%s451 + $0x37c] sm:$0xf]
        %v758 = vld [vmem:[%s451 + $0x380] sm:$0xf]
        %v759 = vld [vmem:[%s451 + $0x384] sm:$0xf]
        %v760 = vld [vmem:[%s451 + $0x388] sm:$0xf]
        %v761 = vld [vmem:[%s451 + $0x38c] sm:$0xf]
        %v762 = vld [vmem:[%s451 + $0x390] sm:$0xf]
        %v763 = vld [vmem:[%s451 + $0x394] sm:$0xf]
        %v764 = vld [vmem:[%s451 + $0x398] sm:$0xf]
        %v765 = vld [vmem:[%s451 + $0x39c] sm:$0xf]
        %v766 = vld [vmem:[%s451 + $0x3a0] sm:$0xf]
        %v767 = vld [vmem:[%s451 + $0x3a4] sm:$0xf]
        %v768 = vld [vmem:[%s451 + $0x3a8] sm:$0xf]
        %v769 = vld [vmem:[%s451 + $0x3ac] sm:$0xf]
        %v770 = vld [vmem:[%s451 + $0x3b0] sm:$0xf]
        %v771 = vld [vmem:[%s451 + $0x3b4] sm:$0xf]
        %v772 = vld [vmem:[%s451 + $0x3b8] sm:$0xf]
        %v773 = vld [vmem:[%s451 + $0x3bc] sm:$0xf]
        %v774 = vld [vmem:[%s451 + $0x3c0] sm:$0xf]
        %v775 = vld [vmem:[%s451 + $0x3c4] sm:$0xf]
        %v776 = vld [vmem:[%s451 + $0x3c8] sm:$0xf]
        %v777 = vld [vmem:[%s451 + $0x3cc] sm:$0xf]
        %v778 = vld [vmem:[%s451 + $0x3d0] sm:$0xf]
        %v779 = vld [vmem:[%s451 + $0x3d4] sm:$0xf]
        %v780 = vld [vmem:[%s451 + $0x3d8] sm:$0xf]
        %v781 = vld [vmem:[%s451 + $0x3dc] sm:$0xf]
        %v782 = vld [vmem:[%s451 + $0x3e0] sm:$0xf]
        %v783 = vld [vmem:[%s451 + $0x3e4] sm:$0xf]
        %v784 = vld [vmem:[%s451 + $0x3e8] sm:$0xf]
        %v785 = vld [vmem:[%s451 + $0x3ec] sm:$0xf]
        %v786 = vld [vmem:[%s451 + $0x3f0] sm:$0xf]
        %v787 = vld [vmem:[%s451 + $0x3f4] sm:$0xf]
        %v788 = vld [vmem:[%s451 + $0x3f8] sm:$0xf]
        %v789 = vld [vmem:[%s451 + $0x3fc] sm:$0xf]
        %v790 = vld [vmem:[%s451 + $0x400] sm:$0xf]
        %v791 = vld [vmem:[%s451 + $0x404] sm:$0xf]
        %v792 = vld [vmem:[%s451 + $0x408] sm:$0xf]
        %v793 = vld [vmem:[%s451 + $0x40c] sm:$0xf]
        %v794 = vld [vmem:[%s451 + $0x410] sm:$0xf]
        %v795 = vld [vmem:[%s451 + $0x414] sm:$0xf]
        %v796 = vld [vmem:[%s451 + $0x418] sm:$0xf]
        %v797 = vld [vmem:[%s451 + $0x41c] sm:$0xf]
        %v798 = vld [vmem:[%s451 + $0x420] sm:$0xf]
        %v799 = vld [vmem:[%s451 + $0x424] sm:$0xf]
        %v800 = vld [vmem:[%s451 + $0x428] sm:$0xf]
        %v801 = vld [vmem:[%s451 + $0x42c] sm:$0xf]
        %v802 = vld [vmem:[%s451 + $0x430] sm:$0xf]
        %v803 = vld [vmem:[%s451 + $0x434] sm:$0xf]
        %v804 = vld [vmem:[%s451 + $0x438] sm:$0xf]
        %v805 = vld [vmem:[%s451 + $0x43c] sm:$0xf]
        %v806 = vld [vmem:[%s451 + $0x440] sm:$0xf]
        %v807 = vld [vmem:[%s451 + $0x444] sm:$0xf]
        %v808 = vld [vmem:[%s451 + $0x448] sm:$0xf]
        %v809 = vld [vmem:[%s451 + $0x44c] sm:$0xf]
        %v810 = vld [vmem:[%s451 + $0x450] sm:$0xf]
        %v811 = vld [vmem:[%s451 + $0x454] sm:$0xf]
        %v812 = vld [vmem:[%s451 + $0x458] sm:$0xf]
        %v813 = vld [vmem:[%s451 + $0x45c] sm:$0xf]
        %v814 = vld [vmem:[%s451 + $0x460] sm:$0xf]
        %v815 = vld [vmem:[%s451 + $0x464] sm:$0xf]
        %v816 = vld [vmem:[%s451 + $0x468] sm:$0xf]
        %v817 = vld [vmem:[%s451 + $0x46c] sm:$0xf]
        %v818 = vld [vmem:[%s451 + $0x470] sm:$0xf]
        %v819 = vld [vmem:[%s451 + $0x474] sm:$0xf]
        %v820 = vld [vmem:[%s451 + $0x478] sm:$0xf]
        %v821 = vld [vmem:[%s451 + $0x47c] sm:$0xf]
        %v822 = vld [vmem:[%s451 + $0x480] sm:$0xf]
        %v823 = vld [vmem:[%s451 + $0x484] sm:$0xf]
        %v824 = vld [vmem:[%s451 + $0x488] sm:$0xf]
        %v825 = vld [vmem:[%s451 + $0x48c] sm:$0xf]
        %v826 = vld [vmem:[%s451 + $0x490] sm:$0xf]
        %v827 = vld [vmem:[%s451 + $0x494] sm:$0xf]
        %v828 = vld [vmem:[%s451 + $0x498] sm:$0xf]
        %v829 = vld [vmem:[%s451 + $0x49c] sm:$0xf]
        %v830 = vld [vmem:[%s451 + $0x4a0] sm:$0xf]
        %v831 = vld [vmem:[%s451 + $0x4a4] sm:$0xf]
        %v832 = vld [vmem:[%s451 + $0x4a8] sm:$0xf]
        %v833 = vld [vmem:[%s451 + $0x4ac] sm:$0xf]
        %v834 = vld [vmem:[%s451 + $0x4b0] sm:$0xf]
        %v835 = vld [vmem:[%s451 + $0x4b4] sm:$0xf]
        %v836 = vld [vmem:[%s451 + $0x4b8] sm:$0xf]
        %v837 = vld [vmem:[%s451 + $0x4bc] sm:$0xf]
        %v838 = vld [vmem:[%s451 + $0x4c0] sm:$0xf]
        %v839 = vld [vmem:[%s451 + $0x4c4] sm:$0xf]
        %v840 = vld [vmem:[%s451 + $0x4c8] sm:$0xf]
        %v841 = vld [vmem:[%s451 + $0x4cc] sm:$0xf]
        %v842 = vld [vmem:[%s451 + $0x4d0] sm:$0xf]
        %v843 = vld [vmem:[%s451 + $0x4d4] sm:$0xf]
        %v844 = vld [vmem:[%s451 + $0x4d8] sm:$0xf]
        %v845 = vld [vmem:[%s451 + $0x4dc] sm:$0xf]
        %v846 = vld [vmem:[%s451 + $0x4e0] sm:$0xf]
        %v847 = vld [vmem:[%s451 + $0x4e4] sm:$0xf]
        %v848 = vld [vmem:[%s451 + $0x4e8] sm:$0xf]
        %v849 = vld [vmem:[%s451 + $0x4ec] sm:$0xf]
        %v850 = vld [vmem:[%s451 + $0x4f0] sm:$0xf]
        %v851 = vld [vmem:[%s451 + $0x4f4] sm:$0xf]
        %v852 = vld [vmem:[%s451 + $0x4f8] sm:$0xf]
        %v853 = vld [vmem:[%s451 + $0x4fc] sm:$0xf]
        %v854 = vld [vmem:[%s451 + $0x500] sm:$0xf]
        %v855 = vld [vmem:[%s451 + $0x504] sm:$0xf]
        %v856 = vld [vmem:[%s451 + $0x508] sm:$0xf]
        %v857 = vld [vmem:[%s451 + $0x50c] sm:$0xf]
        %v858 = vld [vmem:[%s451 + $0x510] sm:$0xf]
        %v859 = vld [vmem:[%s451 + $0x514] sm:$0xf]
        %v860 = vld [vmem:[%s451 + $0x518] sm:$0xf]
        %v861 = vld [vmem:[%s451 + $0x51c] sm:$0xf]
        %v862 = vld [vmem:[%s451 + $0x520] sm:$0xf]
        %v863 = vld [vmem:[%s451 + $0x524] sm:$0xf]
        %v864 = vld [vmem:[%s451 + $0x528] sm:$0xf]
        %v865 = vld [vmem:[%s451 + $0x52c] sm:$0xf]
        %v866 = vld [vmem:[%s451 + $0x530] sm:$0xf]
        %v867 = vld [vmem:[%s451 + $0x534] sm:$0xf]
        %v868 = vld [vmem:[%s451 + $0x538] sm:$0xf]
        %v869 = vld [vmem:[%s451 + $0x53c] sm:$0xf]
        %v870 = vld [vmem:[%s451 + $0x540] sm:$0xf]
        %v871 = vld [vmem:[%s451 + $0x544] sm:$0xf]
        %v872 = vld [vmem:[%s451 + $0x548] sm:$0xf]
        %v873 = vld [vmem:[%s451 + $0x54c] sm:$0xf]
        %v874 = vld [vmem:[%s451 + $0x550] sm:$0xf]
        %v875 = vld [vmem:[%s451 + $0x554] sm:$0xf]
        %v876 = vld [vmem:[%s451 + $0x558] sm:$0xf]
        %v877 = vld [vmem:[%s451 + $0x55c] sm:$0xf]
        %v878 = vld [vmem:[%s451 + $0x560] sm:$0xf]
        %v879 = vld [vmem:[%s451 + $0x564] sm:$0xf]
        %v880 = vld [vmem:[%s451 + $0x568] sm:$0xf]
        %v881 = vld [vmem:[%s451 + $0x56c] sm:$0xf]
        %v882 = vld [vmem:[%s451 + $0x570] sm:$0xf]
        %v883 = vld [vmem:[%s451 + $0x574] sm:$0xf]
        %v884 = vld [vmem:[%s451 + $0x578] sm:$0xf]
        %v885 = vld [vmem:[%s451 + $0x57c] sm:$0xf]
        %v886 = vld [vmem:[%s451 + $0x580] sm:$0xf]
        %v887 = vld [vmem:[%s451 + $0x584] sm:$0xf]
        %v888 = vld [vmem:[%s451 + $0x588] sm:$0xf]
        %v889 = vld [vmem:[%s451 + $0x58c] sm:$0xf]
        %v890 = vld [vmem:[%s451 + $0x590] sm:$0xf]
        %v891 = vld [vmem:[%s451 + $0x594] sm:$0xf]
        %v892 = vld [vmem:[%s451 + $0x598] sm:$0xf]
        %v893 = vld [vmem:[%s451 + $0x59c] sm:$0xf]
        %v894 = vld [vmem:[%s451 + $0x5a0] sm:$0xf]
        %v895 = vld [vmem:[%s451 + $0x5a4] sm:$0xf]
        %v896 = vld [vmem:[%s451 + $0x5a8] sm:$0xf]
        %v897 = vld [vmem:[%s451 + $0x5ac] sm:$0xf]
        %v898 = vld [vmem:[%s451 + $0x5b0] sm:$0xf]
        %v899 = vld [vmem:[%s451 + $0x5b4] sm:$0xf]
        %v900 = vld [vmem:[%s451 + $0x5b8] sm:$0xf]
        %v901 = vld [vmem:[%s451 + $0x5bc] sm:$0xf]
        %v902 = vld [vmem:[%s451 + $0x5c0] sm:$0xf]
        %v903 = vld [vmem:[%s451 + $0x5c4] sm:$0xf]
        %v904 = vld [vmem:[%s451 + $0x5c8] sm:$0xf]
        %v905 = vld [vmem:[%s451 + $0x5cc] sm:$0xf]
        %v906 = vld [vmem:[%s451 + $0x5d0] sm:$0xf]
        %v907 = vld [vmem:[%s451 + $0x5d4] sm:$0xf]
        %v908 = vld [vmem:[%s451 + $0x5d8] sm:$0xf]
        %v909 = vld [vmem:[%s451 + $0x5dc] sm:$0xf]
        %v910 = vld [vmem:[%s451 + $0x5e0] sm:$0xf]
        %v911 = vld [vmem:[%s451 + $0x5e4] sm:$0xf]
        %v912 = vld [vmem:[%s451 + $0x5e8] sm:$0xf]
        %v913 = vld [vmem:[%s451 + $0x5ec] sm:$0xf]
        %v914 = vld [vmem:[%s451 + $0x5f0] sm:$0xf]
        %v915 = vld [vmem:[%s451 + $0x5f4] sm:$0xf]
        %v916 = vld [vmem:[%s451 + $0x5f8] sm:$0xf]
        %v917 = vld [vmem:[%s451 + $0x5fc] sm:$0xf]
        %v918 = vld [vmem:[%s451 + $0x600] sm:$0xf]
        %v919 = vld [vmem:[%s451 + $0x604] sm:$0xf]
        %v920 = vld [vmem:[%s451 + $0x608] sm:$0xf]
        %v921 = vld [vmem:[%s451 + $0x60c] sm:$0xf]
        %v922 = vld [vmem:[%s451 + $0x610] sm:$0xf]
        %v923 = vld [vmem:[%s451 + $0x614] sm:$0xf]
        %v924 = vld [vmem:[%s451 + $0x618] sm:$0xf]
        %v925 = vld [vmem:[%s451 + $0x61c] sm:$0xf]
        %v926 = vld [vmem:[%s451 + $0x620] sm:$0xf]
        %v927 = vld [vmem:[%s451 + $0x624] sm:$0xf]
        %v928 = vld [vmem:[%s451 + $0x628] sm:$0xf]
        %v929 = vld [vmem:[%s451 + $0x62c] sm:$0xf]
        %v930 = vld [vmem:[%s451 + $0x630] sm:$0xf]
        %v931 = vld [vmem:[%s451 + $0x634] sm:$0xf]
        %v932 = vld [vmem:[%s451 + $0x638] sm:$0xf]
        %v933 = vld [vmem:[%s451 + $0x63c] sm:$0xf]
        %v934 = vld [vmem:[%s451 + $0x640] sm:$0xf]
        %v935 = vld [vmem:[%s451 + $0x644] sm:$0xf]
        %v936 = vld [vmem:[%s451 + $0x648] sm:$0xf]
        %v937 = vld [vmem:[%s451 + $0x64c] sm:$0xf]
        %v938 = vld [vmem:[%s451 + $0x650] sm:$0xf]
        %v939 = vld [vmem:[%s451 + $0x654] sm:$0xf]
        %v940 = vld [vmem:[%s451 + $0x658] sm:$0xf]
        %v941 = vld [vmem:[%s451 + $0x65c] sm:$0xf]
        %v942 = vld [vmem:[%s451 + $0x660] sm:$0xf]
        %v943 = vld [vmem:[%s451 + $0x664] sm:$0xf]
        %v944 = vld [vmem:[%s451 + $0x668] sm:$0xf]
        %v945 = vld [vmem:[%s451 + $0x66c] sm:$0xf]
        %v946 = vld [vmem:[%s451 + $0x670] sm:$0xf]
        %v947 = vld [vmem:[%s451 + $0x674] sm:$0xf]
        %v948 = vld [vmem:[%s451 + $0x678] sm:$0xf]
        %v949 = vld [vmem:[%s451 + $0x67c] sm:$0xf]
        %v950 = vld [vmem:[%s451 + $0x680] sm:$0xf]
        %v951 = vld [vmem:[%s451 + $0x684] sm:$0xf]
        %v952 = vld [vmem:[%s451 + $0x688] sm:$0xf]
        %v953 = vld [vmem:[%s451 + $0x68c] sm:$0xf]
        %v954 = vld [vmem:[%s451 + $0x690] sm:$0xf]
        %v955 = vld [vmem:[%s451 + $0x694] sm:$0xf]
        %v956 = vld [vmem:[%s451 + $0x698] sm:$0xf]
        %v957 = vld [vmem:[%s451 + $0x69c] sm:$0xf]
        %v958 = vld [vmem:[%s451 + $0x6a0] sm:$0xf]
        %v959 = vld [vmem:[%s451 + $0x6a4] sm:$0xf]
        %v960 = vld [vmem:[%s451 + $0x6a8] sm:$0xf]
        %v961 = vld [vmem:[%s451 + $0x6ac] sm:$0xf]
        %v962 = vld [vmem:[%s451 + $0x6b0] sm:$0xf]
        %v963 = vld [vmem:[%s451 + $0x6b4] sm:$0xf]
        %v964 = vld [vmem:[%s451 + $0x6b8] sm:$0xf]
        %v965 = vld [vmem:[%s451 + $0x6bc] sm:$0xf]
        %v966 = vld [vmem:[%s451 + $0x6c0] sm:$0xf]
        %v967 = vld [vmem:[%s451 + $0x6c4] sm:$0xf]
        %v968 = vld [vmem:[%s451 + $0x6c8] sm:$0xf]
        %v969 = vld [vmem:[%s451 + $0x6cc] sm:$0xf]
        %v970 = vld [vmem:[%s451 + $0x6d0] sm:$0xf]
        %v971 = vld [vmem:[%s451 + $0x6d4] sm:$0xf]
        %v972 = vld [vmem:[%s451 + $0x6d8] sm:$0xf]
        %v973 = vld [vmem:[%s451 + $0x6dc] sm:$0xf]
        %v974 = vld [vmem:[%s451 + $0x6e0] sm:$0xf]
        %v975 = vld [vmem:[%s451 + $0x6e4] sm:$0xf]
        %v976 = vld [vmem:[%s451 + $0x6e8] sm:$0xf]
        %v977 = vld [vmem:[%s451 + $0x6ec] sm:$0xf]
        %v978 = vld [vmem:[%s451 + $0x6f0] sm:$0xf]
        %v979 = vld [vmem:[%s451 + $0x6f4] sm:$0xf]
        %v980 = vld [vmem:[%s451 + $0x6f8] sm:$0xf]
        %v981 = vld [vmem:[%s451 + $0x6fc] sm:$0xf]
        %v982 = vld [vmem:[%s451 + $0x700] sm:$0xf]
        %v983 = vld [vmem:[%s451 + $0x704] sm:$0xf]
        %v984 = vld [vmem:[%s451 + $0x708] sm:$0xf]
        %v985 = vld [vmem:[%s451 + $0x70c] sm:$0xf]
        %v986 = vld [vmem:[%s451 + $0x710] sm:$0xf]
        %v987 = vld [vmem:[%s451 + $0x714] sm:$0xf]
        %v988 = vld [vmem:[%s451 + $0x718] sm:$0xf]
        %v989 = vld [vmem:[%s451 + $0x71c] sm:$0xf]
        %v990 = vld [vmem:[%s451 + $0x720] sm:$0xf]
        %v991 = vld [vmem:[%s451 + $0x724] sm:$0xf]
        %v992 = vld [vmem:[%s451 + $0x728] sm:$0xf]
        %v993 = vld [vmem:[%s451 + $0x72c] sm:$0xf]
        %v994 = vld [vmem:[%s451 + $0x730] sm:$0xf]
        %v995 = vld [vmem:[%s451 + $0x734] sm:$0xf]
        %v996 = vld [vmem:[%s451 + $0x738] sm:$0xf]
        %v997 = vld [vmem:[%s451 + $0x73c] sm:$0xf]
        %v998 = vld [vmem:[%s451 + $0x740] sm:$0xf]
        %v999 = vld [vmem:[%s451 + $0x744] sm:$0xf]
        %v1000 = vld [vmem:[%s451 + $0x748] sm:$0xf]
        %v1001 = vld [vmem:[%s451 + $0x74c] sm:$0xf]
        %v1002 = vld [vmem:[%s451 + $0x750] sm:$0xf]
        %v1003 = vld [vmem:[%s451 + $0x754] sm:$0xf]
        %v1004 = vld [vmem:[%s451 + $0x758] sm:$0xf]
        %v1005 = vld [vmem:[%s451 + $0x75c] sm:$0xf]
        %v1006 = vld [vmem:[%s451 + $0x760] sm:$0xf]
        %v1007 = vld [vmem:[%s451 + $0x764] sm:$0xf]
        %v1008 = vld [vmem:[%s451 + $0x768] sm:$0xf]
        %v1009 = vld [vmem:[%s451 + $0x76c] sm:$0xf]
        %v1010 = vld [vmem:[%s451 + $0x770] sm:$0xf]
        %v1011 = vld [vmem:[%s451 + $0x774] sm:$0xf]
        %v1012 = vld [vmem:[%s451 + $0x778] sm:$0xf]
        %v1013 = vld [vmem:[%s451 + $0x77c] sm:$0xf]
        %v1014 = vld [vmem:[%s451 + $0x780] sm:$0xf]
        %v1015 = vld [vmem:[%s451 + $0x784] sm:$0xf]
        %v1016 = vld [vmem:[%s451 + $0x788] sm:$0xf]
        %v1017 = vld [vmem:[%s451 + $0x78c] sm:$0xf]
        %v1018 = vld [vmem:[%s451 + $0x790] sm:$0xf]
        %v1019 = vld [vmem:[%s451 + $0x794] sm:$0xf]
        %v1020 = vld [vmem:[%s451 + $0x798] sm:$0xf]
        %v1021 = vld [vmem:[%s451 + $0x79c] sm:$0xf]
        %v1022 = vld [vmem:[%s451 + $0x7a0] sm:$0xf]
        %v1023 = vld [vmem:[%s451 + $0x7a4] sm:$0xf]
        %v1024 = vld [vmem:[%s451 + $0x7a8] sm:$0xf]
        %v1025 = vld [vmem:[%s451 + $0x7ac] sm:$0xf]
        %v1026 = vld [vmem:[%s451 + $0x7b0] sm:$0xf]
        %v1027 = vld [vmem:[%s451 + $0x7b4] sm:$0xf]
        %v1028 = vld [vmem:[%s451 + $0x7b8] sm:$0xf]
        %v1029 = vld [vmem:[%s451 + $0x7bc] sm:$0xf]
        %v1030 = vld [vmem:[%s451 + $0x7c0] sm:$0xf]
        %v1031 = vld [vmem:[%s451 + $0x7c4] sm:$0xf]
        %v1032 = vld [vmem:[%s451 + $0x7c8] sm:$0xf]
        %v1033 = vld [vmem:[%s451 + $0x7cc] sm:$0xf]
        %v1034 = vld [vmem:[%s451 + $0x7d0] sm:$0xf]
        %v1035 = vld [vmem:[%s451 + $0x7d4] sm:$0xf]
        %v1036 = vld [vmem:[%s451 + $0x7d8] sm:$0xf]
        %v1037 = vld [vmem:[%s451 + $0x7dc] sm:$0xf]
        %v1038 = vld [vmem:[%s451 + $0x7e0] sm:$0xf]
        %v1039 = vld [vmem:[%s451 + $0x7e4] sm:$0xf]
        %v1040 = vld [vmem:[%s451 + $0x7e8] sm:$0xf]
        %v1041 = vld [vmem:[%s451 + $0x7ec] sm:$0xf]
        %v1042 = vld [vmem:[%s451 + $0x7f0] sm:$0xf]
        %v1043 = vld [vmem:[%s451 + $0x7f4] sm:$0xf]
        %v1044 = vld [vmem:[%s451 + $0x7f8] sm:$0xf]
        %v1045 = vld [vmem:[%s451 + $0x7fc] sm:$0xf]
        %v1046 = vld [vmem:[%s451 + $0x800] sm:$0xf]
        %v1047 = vld [vmem:[%s451 + $0x804] sm:$0xf]
        %v1048 = vld [vmem:[%s451 + $0x808] sm:$0xf]
        %v1049 = vld [vmem:[%s451 + $0x80c] sm:$0xf]
        %v1050 = vld [vmem:[%s451 + $0x810] sm:$0xf]
        %v1051 = vld [vmem:[%s451 + $0x814] sm:$0xf]
        %v1052 = vld [vmem:[%s451 + $0x818] sm:$0xf]
        %v1053 = vld [vmem:[%s451 + $0x81c] sm:$0xf]
        %v1054 = vld [vmem:[%s451 + $0x820] sm:$0xf]
        %v1055 = vld [vmem:[%s451 + $0x824] sm:$0xf]
        %v1056 = vld [vmem:[%s451 + $0x828] sm:$0xf]
        %v1057 = vld [vmem:[%s451 + $0x82c] sm:$0xf]
        %v1058 = vld [vmem:[%s451 + $0x830] sm:$0xf]
        %v1059 = vld [vmem:[%s451 + $0x834] sm:$0xf]
        %v1060 = vld [vmem:[%s451 + $0x838] sm:$0xf]
        %v1061 = vld [vmem:[%s451 + $0x83c] sm:$0xf]
        %v1062 = vld [vmem:[%s451 + $0x840] sm:$0xf]
        %v1063 = vld [vmem:[%s451 + $0x844] sm:$0xf]
        %v1064 = vld [vmem:[%s451 + $0x848] sm:$0xf]
        %v1065 = vld [vmem:[%s451 + $0x84c] sm:$0xf]
        %v1066 = vld [vmem:[%s451 + $0x850] sm:$0xf]
        %v1067 = vld [vmem:[%s451 + $0x854] sm:$0xf]
        %v1068 = vld [vmem:[%s451 + $0x858] sm:$0xf]
        %v1069 = vld [vmem:[%s451 + $0x85c] sm:$0xf]
        %v1070 = vld [vmem:[%s451 + $0x860] sm:$0xf]
        %v1071 = vld [vmem:[%s451 + $0x864] sm:$0xf]
        %v1072 = vld [vmem:[%s451 + $0x868] sm:$0xf]
        %v1073 = vld [vmem:[%s451 + $0x86c] sm:$0xf]
        %v1074 = vld [vmem:[%s451 + $0x870] sm:$0xf]
        %v1075 = vld [vmem:[%s451 + $0x874] sm:$0xf]
        %v1076 = vld [vmem:[%s451 + $0x878] sm:$0xf]
        %v1077 = vld [vmem:[%s451 + $0x87c] sm:$0xf]
        %v1078 = vld [vmem:[%s451 + $0x880] sm:$0xf]
        %v1079 = vld [vmem:[%s451 + $0x884] sm:$0xf]
        %v1080 = vld [vmem:[%s451 + $0x888] sm:$0xf]
        %v1081 = vld [vmem:[%s451 + $0x88c] sm:$0xf]
        %v1082 = vld [vmem:[%s451 + $0x890] sm:$0xf]
        %v1083 = vld [vmem:[%s451 + $0x894] sm:$0xf]
        %v1084 = vld [vmem:[%s451 + $0x898] sm:$0xf]
        %v1085 = vld [vmem:[%s451 + $0x89c] sm:$0xf]
        %v1086 = vld [vmem:[%s451 + $0x8a0] sm:$0xf]
        %v1087 = vld [vmem:[%s451 + $0x8a4] sm:$0xf]
        %v1088 = vld [vmem:[%s451 + $0x8a8] sm:$0xf]
        %v1089 = vld [vmem:[%s451 + $0x8ac] sm:$0xf]
        %v1090 = vld [vmem:[%s451 + $0x8b0] sm:$0xf]
        %v1091 = vld [vmem:[%s451 + $0x8b4] sm:$0xf]
        %v1092 = vld [vmem:[%s451 + $0x8b8] sm:$0xf]
        %v1093 = vld [vmem:[%s451 + $0x8bc] sm:$0xf]
        %v1094 = vld [vmem:[%s451 + $0x8c0] sm:$0xf]
        %v1095 = vld [vmem:[%s451 + $0x8c4] sm:$0xf]
        %v1096 = vld [vmem:[%s451 + $0x8c8] sm:$0xf]
        %v1097 = vld [vmem:[%s451 + $0x8cc] sm:$0xf]
        %v1098 = vld [vmem:[%s451 + $0x8d0] sm:$0xf]
        %v1099 = vld [vmem:[%s451 + $0x8d4] sm:$0xf]
        %v1100 = vld [vmem:[%s451 + $0x8d8] sm:$0xf]
        %v1101 = vld [vmem:[%s451 + $0x8dc] sm:$0xf]
        %v1102 = vld [vmem:[%s451 + $0x8e0] sm:$0xf]
        %v1103 = vld [vmem:[%s451 + $0x8e4] sm:$0xf]
        %v1104 = vld [vmem:[%s451 + $0x8e8] sm:$0xf]
        %v1105 = vld [vmem:[%s451 + $0x8ec] sm:$0xf]
        %v1106 = vld [vmem:[%s451 + $0x8f0] sm:$0xf]
        %v1107 = vld [vmem:[%s451 + $0x8f4] sm:$0xf]
        %v1108 = vld [vmem:[%s451 + $0x8f8] sm:$0xf]
        %v1109 = vld [vmem:[%s451 + $0x8fc] sm:$0xf]
        %v1110 = vunpack.c.l.bf16 %v534
        %v1111 = vunpack.c.l.bf16 %v535
        %v1112 = vunpack.c.l.bf16 %v536
        %v1113 = vunpack.c.l.bf16 %v537
        %v1114 = vunpack.c.l.bf16 %v538
        %v1115 = vunpack.c.l.bf16 %v539
        %v1116 = vunpack.c.l.bf16 %v540
        %v1117 = vunpack.c.l.bf16 %v541
        %v1118 = vunpack.c.l.bf16 %v542
        %v1119 = vunpack.c.l.bf16 %v543
        %v1120 = vunpack.c.l.bf16 %v544
        %v1121 = vunpack.c.l.bf16 %v545
        %v1122 = vunpack.c.l.bf16 %v546
        %v1123 = vunpack.c.l.bf16 %v547
        %v1124 = vunpack.c.l.bf16 %v548
        %v1125 = vunpack.c.l.bf16 %v549
        %v1126 = vunpack.c.l.bf16 %v550
        %v1127 = vunpack.c.l.bf16 %v551
        %v1128 = vunpack.c.l.bf16 %v552
        %v1129 = vunpack.c.l.bf16 %v553
        %v1130 = vunpack.c.l.bf16 %v554
        %v1131 = vunpack.c.l.bf16 %v555
        %v1132 = vunpack.c.l.bf16 %v556
        %v1133 = vunpack.c.l.bf16 %v557
        %v1134 = vunpack.c.l.bf16 %v558
        %v1135 = vunpack.c.l.bf16 %v559
        %v1136 = vunpack.c.l.bf16 %v560
        %v1137 = vunpack.c.l.bf16 %v561
        %v1138 = vunpack.c.l.bf16 %v562
        %v1139 = vunpack.c.l.bf16 %v563
        %v1140 = vunpack.c.l.bf16 %v564
        %v1141 = vunpack.c.l.bf16 %v565
        %v1142 = vunpack.c.l.bf16 %v566
        %v1143 = vunpack.c.l.bf16 %v567
        %v1144 = vunpack.c.l.bf16 %v568
        %v1145 = vunpack.c.l.bf16 %v569
        %v1146 = vunpack.c.l.bf16 %v570
        %v1147 = vunpack.c.l.bf16 %v571
        %v1148 = vunpack.c.l.bf16 %v572
        %v1149 = vunpack.c.l.bf16 %v573
        %v1150 = vunpack.c.l.bf16 %v574
        %v1151 = vunpack.c.l.bf16 %v575
        %v1152 = vunpack.c.l.bf16 %v576
        %v1153 = vunpack.c.l.bf16 %v577
        %v1154 = vunpack.c.l.bf16 %v578
        %v1155 = vunpack.c.l.bf16 %v579
        %v1156 = vunpack.c.l.bf16 %v580
        %v1157 = vunpack.c.l.bf16 %v581
        %v1158 = vunpack.c.l.bf16 %v582
        %v1159 = vunpack.c.l.bf16 %v583
        %v1160 = vunpack.c.l.bf16 %v584
        %v1161 = vunpack.c.l.bf16 %v585
        %v1162 = vunpack.c.l.bf16 %v586
        %v1163 = vunpack.c.l.bf16 %v587
        %v1164 = vunpack.c.l.bf16 %v588
        %v1165 = vunpack.c.l.bf16 %v589
        %v1166 = vunpack.c.l.bf16 %v590
        %v1167 = vunpack.c.l.bf16 %v591
        %v1168 = vunpack.c.l.bf16 %v592
        %v1169 = vunpack.c.l.bf16 %v593
        %v1170 = vunpack.c.l.bf16 %v594
        %v1171 = vunpack.c.l.bf16 %v595
        %v1172 = vunpack.c.l.bf16 %v596
        %v1173 = vunpack.c.l.bf16 %v597
        %v1174 = vunpack.c.l.bf16 %v598
        %v1175 = vunpack.c.l.bf16 %v599
        %v1176 = vunpack.c.l.bf16 %v600
        %v1177 = vunpack.c.l.bf16 %v601
        %v1178 = vunpack.c.l.bf16 %v602
        %v1179 = vunpack.c.l.bf16 %v603
        %v1180 = vunpack.c.l.bf16 %v604
        %v1181 = vunpack.c.l.bf16 %v605
        %v1182 = vunpack.c.l.bf16 %v606
        %v1183 = vunpack.c.l.bf16 %v607
        %v1184 = vunpack.c.l.bf16 %v608
        %v1185 = vunpack.c.l.bf16 %v609
        %v1186 = vunpack.c.l.bf16 %v610
        %v1187 = vunpack.c.l.bf16 %v611
        %v1188 = vunpack.c.l.bf16 %v612
        %v1189 = vunpack.c.l.bf16 %v613
        %v1190 = vunpack.c.l.bf16 %v614
        %v1191 = vunpack.c.l.bf16 %v615
        %v1192 = vunpack.c.l.bf16 %v616
        %v1193 = vunpack.c.l.bf16 %v617
        %v1194 = vunpack.c.l.bf16 %v618
        %v1195 = vunpack.c.l.bf16 %v619
        %v1196 = vunpack.c.l.bf16 %v620
        %v1197 = vunpack.c.l.bf16 %v621
        %v1198 = vunpack.c.l.bf16 %v622
        %v1199 = vunpack.c.l.bf16 %v623
        %v1200 = vunpack.c.l.bf16 %v624
        %v1201 = vunpack.c.l.bf16 %v625
        %v1202 = vunpack.c.l.bf16 %v626
        %v1203 = vunpack.c.l.bf16 %v627
        %v1204 = vunpack.c.l.bf16 %v628
        %v1205 = vunpack.c.l.bf16 %v629
        %v1206 = vunpack.c.l.bf16 %v630
        %v1207 = vunpack.c.l.bf16 %v631
        %v1208 = vunpack.c.l.bf16 %v632
        %v1209 = vunpack.c.l.bf16 %v633
        %v1210 = vunpack.c.l.bf16 %v634
        %v1211 = vunpack.c.l.bf16 %v635
        %v1212 = vunpack.c.l.bf16 %v636
        %v1213 = vunpack.c.l.bf16 %v637
        %v1214 = vunpack.c.l.bf16 %v638
        %v1215 = vunpack.c.l.bf16 %v639
        %v1216 = vunpack.c.l.bf16 %v640
        %v1217 = vunpack.c.l.bf16 %v641
        %v1218 = vunpack.c.l.bf16 %v642
        %v1219 = vunpack.c.l.bf16 %v643
        %v1220 = vunpack.c.l.bf16 %v644
        %v1221 = vunpack.c.l.bf16 %v645
        %v1222 = vunpack.c.l.bf16 %v646
        %v1223 = vunpack.c.l.bf16 %v647
        %v1224 = vunpack.c.l.bf16 %v648
        %v1225 = vunpack.c.l.bf16 %v649
        %v1226 = vunpack.c.l.bf16 %v650
        %v1227 = vunpack.c.l.bf16 %v651
        %v1228 = vunpack.c.l.bf16 %v652
        %v1229 = vunpack.c.l.bf16 %v653
        %v1230 = vunpack.c.l.bf16 %v654
        %v1231 = vunpack.c.l.bf16 %v655
        %v1232 = vunpack.c.l.bf16 %v656
        %v1233 = vunpack.c.l.bf16 %v657
        %v1234 = vunpack.c.l.bf16 %v658
        %v1235 = vunpack.c.l.bf16 %v659
        %v1236 = vunpack.c.l.bf16 %v660
        %v1237 = vunpack.c.l.bf16 %v661
        %v1238 = vunpack.c.l.bf16 %v662
        %v1239 = vunpack.c.l.bf16 %v663
        %v1240 = vunpack.c.l.bf16 %v664
        %v1241 = vunpack.c.l.bf16 %v665
        %v1242 = vunpack.c.l.bf16 %v666
        %v1243 = vunpack.c.l.bf16 %v667
        %v1244 = vunpack.c.l.bf16 %v668
        %v1245 = vunpack.c.l.bf16 %v669
        %v1246 = vunpack.c.l.bf16 %v670
        %v1247 = vunpack.c.l.bf16 %v671
        %v1248 = vunpack.c.l.bf16 %v672
        %v1249 = vunpack.c.l.bf16 %v673
        %v1250 = vunpack.c.l.bf16 %v674
        %v1251 = vunpack.c.l.bf16 %v675
        %v1252 = vunpack.c.l.bf16 %v676
        %v1253 = vunpack.c.l.bf16 %v677
        %v1254 = vunpack.c.l.bf16 %v678
        %v1255 = vunpack.c.l.bf16 %v679
        %v1256 = vunpack.c.l.bf16 %v680
        %v1257 = vunpack.c.l.bf16 %v681
        %v1258 = vunpack.c.l.bf16 %v682
        %v1259 = vunpack.c.l.bf16 %v683
        %v1260 = vunpack.c.l.bf16 %v684
        %v1261 = vunpack.c.l.bf16 %v685
        %v1262 = vunpack.c.l.bf16 %v686
        %v1263 = vunpack.c.l.bf16 %v687
        %v1264 = vunpack.c.l.bf16 %v688
        %v1265 = vunpack.c.l.bf16 %v689
        %v1266 = vunpack.c.l.bf16 %v690
        %v1267 = vunpack.c.l.bf16 %v691
        %v1268 = vunpack.c.l.bf16 %v692
        %v1269 = vunpack.c.l.bf16 %v693
        %v1270 = vunpack.c.l.bf16 %v694
        %v1271 = vunpack.c.l.bf16 %v695
        %v1272 = vunpack.c.l.bf16 %v696
        %v1273 = vunpack.c.l.bf16 %v697
        %v1274 = vunpack.c.l.bf16 %v698
        %v1275 = vunpack.c.l.bf16 %v699
        %v1276 = vunpack.c.l.bf16 %v700
        %v1277 = vunpack.c.l.bf16 %v701
        %v1278 = vunpack.c.l.bf16 %v702
        %v1279 = vunpack.c.l.bf16 %v703
        %v1280 = vunpack.c.l.bf16 %v704
        %v1281 = vunpack.c.l.bf16 %v705
        %v1282 = vunpack.c.l.bf16 %v706
        %v1283 = vunpack.c.l.bf16 %v707
        %v1284 = vunpack.c.l.bf16 %v708
        %v1285 = vunpack.c.l.bf16 %v709
        %v1286 = vunpack.c.l.bf16 %v710
        %v1287 = vunpack.c.l.bf16 %v711
        %v1288 = vunpack.c.l.bf16 %v712
        %v1289 = vunpack.c.l.bf16 %v713
        %v1290 = vunpack.c.l.bf16 %v714
        %v1291 = vunpack.c.l.bf16 %v715
        %v1292 = vunpack.c.l.bf16 %v716
        %v1293 = vunpack.c.l.bf16 %v717
        %v1294 = vunpack.c.l.bf16 %v718
        %v1295 = vunpack.c.l.bf16 %v719
        %v1296 = vunpack.c.l.bf16 %v720
        %v1297 = vunpack.c.l.bf16 %v721
        %v1298 = vunpack.c.l.bf16 %v722
        %v1299 = vunpack.c.l.bf16 %v723
        %v1300 = vunpack.c.l.bf16 %v724
        %v1301 = vunpack.c.l.bf16 %v725
        %v1302 = vunpack.c.l.bf16 %v726
        %v1303 = vunpack.c.l.bf16 %v727
        %v1304 = vunpack.c.l.bf16 %v728
        %v1305 = vunpack.c.l.bf16 %v729
        %v1306 = vunpack.c.l.bf16 %v730
        %v1307 = vunpack.c.l.bf16 %v731
        %v1308 = vunpack.c.l.bf16 %v732
        %v1309 = vunpack.c.l.bf16 %v733
        %v1310 = vunpack.c.l.bf16 %v734
        %v1311 = vunpack.c.l.bf16 %v735
        %v1312 = vunpack.c.l.bf16 %v736
        %v1313 = vunpack.c.l.bf16 %v737
        %v1314 = vunpack.c.l.bf16 %v738
        %v1315 = vunpack.c.l.bf16 %v739
        %v1316 = vunpack.c.l.bf16 %v740
        %v1317 = vunpack.c.l.bf16 %v741
        %v1318 = vunpack.c.l.bf16 %v742
        %v1319 = vunpack.c.l.bf16 %v743
        %v1320 = vunpack.c.l.bf16 %v744
        %v1321 = vunpack.c.l.bf16 %v745
        %v1322 = vunpack.c.l.bf16 %v746
        %v1323 = vunpack.c.l.bf16 %v747
        %v1324 = vunpack.c.l.bf16 %v748
        %v1325 = vunpack.c.l.bf16 %v749
        %v1326 = vunpack.c.l.bf16 %v750
        %v1327 = vunpack.c.l.bf16 %v751
        %v1328 = vunpack.c.l.bf16 %v752
        %v1329 = vunpack.c.l.bf16 %v753
        %v1330 = vunpack.c.l.bf16 %v754
        %v1331 = vunpack.c.l.bf16 %v755
        %v1332 = vunpack.c.l.bf16 %v756
        %v1333 = vunpack.c.l.bf16 %v757
        %v1334 = vunpack.c.l.bf16 %v758
        %v1335 = vunpack.c.l.bf16 %v759
        %v1336 = vunpack.c.l.bf16 %v760
        %v1337 = vunpack.c.l.bf16 %v761
        %v1338 = vunpack.c.l.bf16 %v762
        %v1339 = vunpack.c.l.bf16 %v763
        %v1340 = vunpack.c.l.bf16 %v764
        %v1341 = vunpack.c.l.bf16 %v765
        %v1342 = vunpack.c.l.bf16 %v766
        %v1343 = vunpack.c.l.bf16 %v767
        %v1344 = vunpack.c.l.bf16 %v768
        %v1345 = vunpack.c.l.bf16 %v769
        %v1346 = vunpack.c.l.bf16 %v770
        %v1347 = vunpack.c.l.bf16 %v771
        %v1348 = vunpack.c.l.bf16 %v772
        %v1349 = vunpack.c.l.bf16 %v773
        %v1350 = vunpack.c.l.bf16 %v774
        %v1351 = vunpack.c.l.bf16 %v775
        %v1352 = vunpack.c.l.bf16 %v776
        %v1353 = vunpack.c.l.bf16 %v777
        %v1354 = vunpack.c.l.bf16 %v778
        %v1355 = vunpack.c.l.bf16 %v779
        %v1356 = vunpack.c.l.bf16 %v780
        %v1357 = vunpack.c.l.bf16 %v781
        %v1358 = vunpack.c.l.bf16 %v782
        %v1359 = vunpack.c.l.bf16 %v783
        %v1360 = vunpack.c.l.bf16 %v784
        %v1361 = vunpack.c.l.bf16 %v785
        %v1362 = vunpack.c.l.bf16 %v786
        %v1363 = vunpack.c.l.bf16 %v787
        %v1364 = vunpack.c.l.bf16 %v788
        %v1365 = vunpack.c.l.bf16 %v789
        %v1366 = vunpack.c.l.bf16 %v790
        %v1367 = vunpack.c.l.bf16 %v791
        %v1368 = vunpack.c.l.bf16 %v792
        %v1369 = vunpack.c.l.bf16 %v793
        %v1370 = vunpack.c.l.bf16 %v794
        %v1371 = vunpack.c.l.bf16 %v795
        %v1372 = vunpack.c.l.bf16 %v796
        %v1373 = vunpack.c.l.bf16 %v797
        %v1374 = vunpack.c.l.bf16 %v798
        %v1375 = vunpack.c.l.bf16 %v799
        %v1376 = vunpack.c.l.bf16 %v800
        %v1377 = vunpack.c.l.bf16 %v801
        %v1378 = vunpack.c.l.bf16 %v802
        %v1379 = vunpack.c.l.bf16 %v803
        %v1380 = vunpack.c.l.bf16 %v804
        %v1381 = vunpack.c.l.bf16 %v805
        %v1382 = vunpack.c.l.bf16 %v806
        %v1383 = vunpack.c.l.bf16 %v807
        %v1384 = vunpack.c.l.bf16 %v808
        %v1385 = vunpack.c.l.bf16 %v809
        %v1386 = vunpack.c.l.bf16 %v810
        %v1387 = vunpack.c.l.bf16 %v811
        %v1388 = vunpack.c.l.bf16 %v812
        %v1389 = vunpack.c.l.bf16 %v813
        %v1390 = vunpack.c.l.bf16 %v814
        %v1391 = vunpack.c.l.bf16 %v815
        %v1392 = vunpack.c.l.bf16 %v816
        %v1393 = vunpack.c.l.bf16 %v817
        %v1394 = vunpack.c.l.bf16 %v818
        %v1395 = vunpack.c.l.bf16 %v819
        %v1396 = vunpack.c.l.bf16 %v820
        %v1397 = vunpack.c.l.bf16 %v821
        %v1398 = vunpack.c.l.bf16 %v822
        %v1399 = vunpack.c.l.bf16 %v823
        %v1400 = vunpack.c.l.bf16 %v824
        %v1401 = vunpack.c.l.bf16 %v825
        %v1402 = vunpack.c.l.bf16 %v826
        %v1403 = vunpack.c.l.bf16 %v827
        %v1404 = vunpack.c.l.bf16 %v828
        %v1405 = vunpack.c.l.bf16 %v829
        %v1406 = vunpack.c.l.bf16 %v830
        %v1407 = vunpack.c.l.bf16 %v831
        %v1408 = vunpack.c.l.bf16 %v832
        %v1409 = vunpack.c.l.bf16 %v833
        %v1410 = vunpack.c.l.bf16 %v834
        %v1411 = vunpack.c.l.bf16 %v835
        %v1412 = vunpack.c.l.bf16 %v836
        %v1413 = vunpack.c.l.bf16 %v837
        %v1414 = vunpack.c.l.bf16 %v838
        %v1415 = vunpack.c.l.bf16 %v839
        %v1416 = vunpack.c.l.bf16 %v840
        %v1417 = vunpack.c.l.bf16 %v841
        %v1418 = vunpack.c.l.bf16 %v842
        %v1419 = vunpack.c.l.bf16 %v843
        %v1420 = vunpack.c.l.bf16 %v844
        %v1421 = vunpack.c.l.bf16 %v845
        %v1422 = vunpack.c.l.bf16 %v846
        %v1423 = vunpack.c.l.bf16 %v847
        %v1424 = vunpack.c.l.bf16 %v848
        %v1425 = vunpack.c.l.bf16 %v849
        %v1426 = vunpack.c.l.bf16 %v850
        %v1427 = vunpack.c.l.bf16 %v851
        %v1428 = vunpack.c.l.bf16 %v852
        %v1429 = vunpack.c.l.bf16 %v853
        %v1430 = vunpack.c.l.bf16 %v854
        %v1431 = vunpack.c.l.bf16 %v855
        %v1432 = vunpack.c.l.bf16 %v856
        %v1433 = vunpack.c.l.bf16 %v857
        %v1434 = vunpack.c.l.bf16 %v858
        %v1435 = vunpack.c.l.bf16 %v859
        %v1436 = vunpack.c.l.bf16 %v860
        %v1437 = vunpack.c.l.bf16 %v861
        %v1438 = vunpack.c.l.bf16 %v862
        %v1439 = vunpack.c.l.bf16 %v863
        %v1440 = vunpack.c.l.bf16 %v864
        %v1441 = vunpack.c.l.bf16 %v865
        %v1442 = vunpack.c.l.bf16 %v866
        %v1443 = vunpack.c.l.bf16 %v867
        %v1444 = vunpack.c.l.bf16 %v868
        %v1445 = vunpack.c.l.bf16 %v869
        %v1446 = vunpack.c.l.bf16 %v870
        %v1447 = vunpack.c.l.bf16 %v871
        %v1448 = vunpack.c.l.bf16 %v872
        %v1449 = vunpack.c.l.bf16 %v873
        %v1450 = vunpack.c.l.bf16 %v874
        %v1451 = vunpack.c.l.bf16 %v875
        %v1452 = vunpack.c.l.bf16 %v876
        %v1453 = vunpack.c.l.bf16 %v877
        %v1454 = vunpack.c.l.bf16 %v878
        %v1455 = vunpack.c.l.bf16 %v879
        %v1456 = vunpack.c.l.bf16 %v880
        %v1457 = vunpack.c.l.bf16 %v881
        %v1458 = vunpack.c.l.bf16 %v882
        %v1459 = vunpack.c.l.bf16 %v883
        %v1460 = vunpack.c.l.bf16 %v884
        %v1461 = vunpack.c.l.bf16 %v885
        %v1462 = vunpack.c.l.bf16 %v886
        %v1463 = vunpack.c.l.bf16 %v887
        %v1464 = vunpack.c.l.bf16 %v888
        %v1465 = vunpack.c.l.bf16 %v889
        %v1466 = vunpack.c.l.bf16 %v890
        %v1467 = vunpack.c.l.bf16 %v891
        %v1468 = vunpack.c.l.bf16 %v892
        %v1469 = vunpack.c.l.bf16 %v893
        %v1470 = vunpack.c.l.bf16 %v894
        %v1471 = vunpack.c.l.bf16 %v895
        %v1472 = vunpack.c.l.bf16 %v896
        %v1473 = vunpack.c.l.bf16 %v897
        %v1474 = vunpack.c.l.bf16 %v898
        %v1475 = vunpack.c.l.bf16 %v899
        %v1476 = vunpack.c.l.bf16 %v900
        %v1477 = vunpack.c.l.bf16 %v901
        %v1478 = vunpack.c.l.bf16 %v902
        %v1479 = vunpack.c.l.bf16 %v903
        %v1480 = vunpack.c.l.bf16 %v904
        %v1481 = vunpack.c.l.bf16 %v905
        %v1482 = vunpack.c.l.bf16 %v906
        %v1483 = vunpack.c.l.bf16 %v907
        %v1484 = vunpack.c.l.bf16 %v908
        %v1485 = vunpack.c.l.bf16 %v909
        %v1486 = vunpack.c.l.bf16 %v910
        %v1487 = vunpack.c.l.bf16 %v911
        %v1488 = vunpack.c.l.bf16 %v912
        %v1489 = vunpack.c.l.bf16 %v913
        %v1490 = vunpack.c.l.bf16 %v914
        %v1491 = vunpack.c.l.bf16 %v915
        %v1492 = vunpack.c.l.bf16 %v916
        %v1493 = vunpack.c.l.bf16 %v917
        %v1494 = vunpack.c.l.bf16 %v918
        %v1495 = vunpack.c.l.bf16 %v919
        %v1496 = vunpack.c.l.bf16 %v920
        %v1497 = vunpack.c.l.bf16 %v921
        %v1498 = vunpack.c.l.bf16 %v922
        %v1499 = vunpack.c.l.bf16 %v923
        %v1500 = vunpack.c.l.bf16 %v924
        %v1501 = vunpack.c.l.bf16 %v925
        %v1502 = vunpack.c.l.bf16 %v926
        %v1503 = vunpack.c.l.bf16 %v927
        %v1504 = vunpack.c.l.bf16 %v928
        %v1505 = vunpack.c.l.bf16 %v929
        %v1506 = vunpack.c.l.bf16 %v930
        %v1507 = vunpack.c.l.bf16 %v931
        %v1508 = vunpack.c.l.bf16 %v932
        %v1509 = vunpack.c.l.bf16 %v933
        %v1510 = vunpack.c.l.bf16 %v934
        %v1511 = vunpack.c.l.bf16 %v935
        %v1512 = vunpack.c.l.bf16 %v936
        %v1513 = vunpack.c.l.bf16 %v937
        %v1514 = vunpack.c.l.bf16 %v938
        %v1515 = vunpack.c.l.bf16 %v939
        %v1516 = vunpack.c.l.bf16 %v940
        %v1517 = vunpack.c.l.bf16 %v941
        %v1518 = vunpack.c.l.bf16 %v942
        %v1519 = vunpack.c.l.bf16 %v943
        %v1520 = vunpack.c.l.bf16 %v944
        %v1521 = vunpack.c.l.bf16 %v945
        %v1522 = vunpack.c.l.bf16 %v946
        %v1523 = vunpack.c.l.bf16 %v947
        %v1524 = vunpack.c.l.bf16 %v948
        %v1525 = vunpack.c.l.bf16 %v949
        %v1526 = vunpack.c.l.bf16 %v950
        %v1527 = vunpack.c.l.bf16 %v951
        %v1528 = vunpack.c.l.bf16 %v952
        %v1529 = vunpack.c.l.bf16 %v953
        %v1530 = vunpack.c.l.bf16 %v954
        %v1531 = vunpack.c.l.bf16 %v955
        %v1532 = vunpack.c.l.bf16 %v956
        %v1533 = vunpack.c.l.bf16 %v957
        %v1534 = vunpack.c.l.bf16 %v958
        %v1535 = vunpack.c.l.bf16 %v959
        %v1536 = vunpack.c.l.bf16 %v960
        %v1537 = vunpack.c.l.bf16 %v961
        %v1538 = vunpack.c.l.bf16 %v962
        %v1539 = vunpack.c.l.bf16 %v963
        %v1540 = vunpack.c.l.bf16 %v964
        %v1541 = vunpack.c.l.bf16 %v965
        %v1542 = vunpack.c.l.bf16 %v966
        %v1543 = vunpack.c.l.bf16 %v967
        %v1544 = vunpack.c.l.bf16 %v968
        %v1545 = vunpack.c.l.bf16 %v969
        %v1546 = vunpack.c.l.bf16 %v970
        %v1547 = vunpack.c.l.bf16 %v971
        %v1548 = vunpack.c.l.bf16 %v972
        %v1549 = vunpack.c.l.bf16 %v973
        %v1550 = vunpack.c.l.bf16 %v974
        %v1551 = vunpack.c.l.bf16 %v975
        %v1552 = vunpack.c.l.bf16 %v976
        %v1553 = vunpack.c.l.bf16 %v977
        %v1554 = vunpack.c.l.bf16 %v978
        %v1555 = vunpack.c.l.bf16 %v979
        %v1556 = vunpack.c.l.bf16 %v980
        %v1557 = vunpack.c.l.bf16 %v981
        %v1558 = vunpack.c.l.bf16 %v982
        %v1559 = vunpack.c.l.bf16 %v983
        %v1560 = vunpack.c.l.bf16 %v984
        %v1561 = vunpack.c.l.bf16 %v985
        %v1562 = vunpack.c.l.bf16 %v986
        %v1563 = vunpack.c.l.bf16 %v987
        %v1564 = vunpack.c.l.bf16 %v988
        %v1565 = vunpack.c.l.bf16 %v989
        %v1566 = vunpack.c.l.bf16 %v990
        %v1567 = vunpack.c.l.bf16 %v991
        %v1568 = vunpack.c.l.bf16 %v992
        %v1569 = vunpack.c.l.bf16 %v993
        %v1570 = vunpack.c.l.bf16 %v994
        %v1571 = vunpack.c.l.bf16 %v995
        %v1572 = vunpack.c.l.bf16 %v996
        %v1573 = vunpack.c.l.bf16 %v997
        %v1574 = vunpack.c.l.bf16 %v998
        %v1575 = vunpack.c.l.bf16 %v999
        %v1576 = vunpack.c.l.bf16 %v1000
        %v1577 = vunpack.c.l.bf16 %v1001
        %v1578 = vunpack.c.l.bf16 %v1002
        %v1579 = vunpack.c.l.bf16 %v1003
        %v1580 = vunpack.c.l.bf16 %v1004
        %v1581 = vunpack.c.l.bf16 %v1005
        %v1582 = vunpack.c.l.bf16 %v1006
        %v1583 = vunpack.c.l.bf16 %v1007
        %v1584 = vunpack.c.l.bf16 %v1008
        %v1585 = vunpack.c.l.bf16 %v1009
        %v1586 = vunpack.c.l.bf16 %v1010
        %v1587 = vunpack.c.l.bf16 %v1011
        %v1588 = vunpack.c.l.bf16 %v1012
        %v1589 = vunpack.c.l.bf16 %v1013
        %v1590 = vunpack.c.l.bf16 %v1014
        %v1591 = vunpack.c.l.bf16 %v1015
        %v1592 = vunpack.c.l.bf16 %v1016
        %v1593 = vunpack.c.l.bf16 %v1017
        %v1594 = vunpack.c.l.bf16 %v1018
        %v1595 = vunpack.c.l.bf16 %v1019
        %v1596 = vunpack.c.l.bf16 %v1020
        %v1597 = vunpack.c.l.bf16 %v1021
        %v1598 = vunpack.c.l.bf16 %v1022
        %v1599 = vunpack.c.l.bf16 %v1023
        %v1600 = vunpack.c.l.bf16 %v1024
        %v1601 = vunpack.c.l.bf16 %v1025
        %v1602 = vunpack.c.l.bf16 %v1026
        %v1603 = vunpack.c.l.bf16 %v1027
        %v1604 = vunpack.c.l.bf16 %v1028
        %v1605 = vunpack.c.l.bf16 %v1029
        %v1606 = vunpack.c.l.bf16 %v1030
        %v1607 = vunpack.c.l.bf16 %v1031
        %v1608 = vunpack.c.l.bf16 %v1032
        %v1609 = vunpack.c.l.bf16 %v1033
        %v1610 = vunpack.c.l.bf16 %v1034
        %v1611 = vunpack.c.l.bf16 %v1035
        %v1612 = vunpack.c.l.bf16 %v1036
        %v1613 = vunpack.c.l.bf16 %v1037
        %v1614 = vunpack.c.l.bf16 %v1038
        %v1615 = vunpack.c.l.bf16 %v1039
        %v1616 = vunpack.c.l.bf16 %v1040
        %v1617 = vunpack.c.l.bf16 %v1041
        %v1618 = vunpack.c.l.bf16 %v1042
        %v1619 = vunpack.c.l.bf16 %v1043
        %v1620 = vunpack.c.l.bf16 %v1044
        %v1621 = vunpack.c.l.bf16 %v1045
        %v1622 = vunpack.c.l.bf16 %v1046
        %v1623 = vunpack.c.l.bf16 %v1047
        %v1624 = vunpack.c.l.bf16 %v1048
        %v1625 = vunpack.c.l.bf16 %v1049
        %v1626 = vunpack.c.l.bf16 %v1050
        %v1627 = vunpack.c.l.bf16 %v1051
        %v1628 = vunpack.c.l.bf16 %v1052
        %v1629 = vunpack.c.l.bf16 %v1053
        %v1630 = vunpack.c.l.bf16 %v1054
        %v1631 = vunpack.c.l.bf16 %v1055
        %v1632 = vunpack.c.l.bf16 %v1056
        %v1633 = vunpack.c.l.bf16 %v1057
        %v1634 = vunpack.c.l.bf16 %v1058
        %v1635 = vunpack.c.l.bf16 %v1059
        %v1636 = vunpack.c.l.bf16 %v1060
        %v1637 = vunpack.c.l.bf16 %v1061
        %v1638 = vunpack.c.l.bf16 %v1062
        %v1639 = vunpack.c.l.bf16 %v1063
        %v1640 = vunpack.c.l.bf16 %v1064
        %v1641 = vunpack.c.l.bf16 %v1065
        %v1642 = vunpack.c.l.bf16 %v1066
        %v1643 = vunpack.c.l.bf16 %v1067
        %v1644 = vunpack.c.l.bf16 %v1068
        %v1645 = vunpack.c.l.bf16 %v1069
        %v1646 = vunpack.c.l.bf16 %v1070
        %v1647 = vunpack.c.l.bf16 %v1071
        %v1648 = vunpack.c.l.bf16 %v1072
        %v1649 = vunpack.c.l.bf16 %v1073
        %v1650 = vunpack.c.l.bf16 %v1074
        %v1651 = vunpack.c.l.bf16 %v1075
        %v1652 = vunpack.c.l.bf16 %v1076
        %v1653 = vunpack.c.l.bf16 %v1077
        %v1654 = vunpack.c.l.bf16 %v1078
        %v1655 = vunpack.c.l.bf16 %v1079
        %v1656 = vunpack.c.l.bf16 %v1080
        %v1657 = vunpack.c.l.bf16 %v1081
        %v1658 = vunpack.c.l.bf16 %v1082
        %v1659 = vunpack.c.l.bf16 %v1083
        %v1660 = vunpack.c.l.bf16 %v1084
        %v1661 = vunpack.c.l.bf16 %v1085
        %v1662 = vunpack.c.l.bf16 %v1086
        %v1663 = vunpack.c.l.bf16 %v1087
        %v1664 = vunpack.c.l.bf16 %v1088
        %v1665 = vunpack.c.l.bf16 %v1089
        %v1666 = vunpack.c.l.bf16 %v1090
        %v1667 = vunpack.c.l.bf16 %v1091
        %v1668 = vunpack.c.l.bf16 %v1092
        %v1669 = vunpack.c.l.bf16 %v1093
        %v1670 = vunpack.c.l.bf16 %v1094
        %v1671 = vunpack.c.l.bf16 %v1095
        %v1672 = vunpack.c.l.bf16 %v1096
        %v1673 = vunpack.c.l.bf16 %v1097
        %v1674 = vunpack.c.l.bf16 %v1098
        %v1675 = vunpack.c.l.bf16 %v1099
        %v1676 = vunpack.c.l.bf16 %v1100
        %v1677 = vunpack.c.l.bf16 %v1101
        %v1678 = vunpack.c.l.bf16 %v1102
        %v1679 = vunpack.c.l.bf16 %v1103
        %v1680 = vunpack.c.l.bf16 %v1104
        %v1681 = vunpack.c.l.bf16 %v1105
        %v1682 = vunpack.c.l.bf16 %v1106
        %v1683 = vunpack.c.l.bf16 %v1107
        %v1684 = vunpack.c.l.bf16 %v1108
        %v1685 = vunpack.c.l.bf16 %v1109
        %v1695 = vcombine.high %v525, %v525
        %v1697 = vunpack.c.l.s4 1983009808
        %v1698 = vunpack.c.0.s8 %v1697
        %v1699 = vlaneseq
        %v1700 = vshrl.u32 %v1699, 7
        %v1701 = vsub.s32 %v1698, %v1700
        %v1702 = vrot.slane %v525, %v1701
        %v1704 = vunpack.c.l.s4 1983009808
        %v1705 = vunpack.c.0.s8 %v1704
        %v1706 = vlaneseq
        %v1707 = vshrl.u32 %v1706, 7
        %v1708 = vsub.s32 %v1705, %v1707
        %v1709 = vrot.slane %v1695, %v1708
        %v1710 = vcombine.high %v1702, %v1702
        %v1711 = vcombine.high %v1709, %v1709
        %v1712 = vcombine.high %v526, %v526
        %v1714 = vunpack.c.l.s4 1983009808
        %v1715 = vunpack.c.0.s8 %v1714
        %v1716 = vlaneseq
        %v1717 = vshrl.u32 %v1716, 7
        %v1718 = vsub.s32 %v1715, %v1717
        %v1719 = vrot.slane %v526, %v1718
        %v1721 = vunpack.c.l.s4 1983009808
        %v1722 = vunpack.c.0.s8 %v1721
        %v1723 = vlaneseq
        %v1724 = vshrl.u32 %v1723, 7
        %v1725 = vsub.s32 %v1722, %v1724
        %v1726 = vrot.slane %v1712, %v1725
        %v1727 = vcombine.high %v1719, %v1719
        %v1728 = vcombine.high %v1726, %v1726
        %v1729 = vcombine.high %v527, %v527
        %v1731 = vunpack.c.l.s4 1983009808
        %v1732 = vunpack.c.0.s8 %v1731
        %v1733 = vlaneseq
        %v1734 = vshrl.u32 %v1733, 7
        %v1735 = vsub.s32 %v1732, %v1734
        %v1736 = vrot.slane %v527, %v1735
        %v1738 = vunpack.c.l.s4 1983009808
        %v1739 = vunpack.c.0.s8 %v1738
        %v1740 = vlaneseq
        %v1741 = vshrl.u32 %v1740, 7
        %v1742 = vsub.s32 %v1739, %v1741
        %v1743 = vrot.slane %v1729, %v1742
        %v1744 = vcombine.high %v1736, %v1736
        %v1745 = vcombine.high %v1743, %v1743
        %v1746 = vcombine.high %v528, %v528
        %v1748 = vunpack.c.l.s4 1983009808
        %v1749 = vunpack.c.0.s8 %v1748
        %v1750 = vlaneseq
        %v1751 = vshrl.u32 %v1750, 7
        %v1752 = vsub.s32 %v1749, %v1751
        %v1753 = vrot.slane %v528, %v1752
        %v1755 = vunpack.c.l.s4 1983009808
        %v1756 = vunpack.c.0.s8 %v1755
        %v1757 = vlaneseq
        %v1758 = vshrl.u32 %v1757, 7
        %v1759 = vsub.s32 %v1756, %v1758
        %v1760 = vrot.slane %v1746, %v1759
        %v1761 = vcombine.high %v1753, %v1753
        %v1762 = vcombine.high %v1760, %v1760
        %v1763 = vcombine.high %v529, %v529
        %v1765 = vunpack.c.l.s4 1983009808
        %v1766 = vunpack.c.0.s8 %v1765
        %v1767 = vlaneseq
        %v1768 = vshrl.u32 %v1767, 7
        %v1769 = vsub.s32 %v1766, %v1768
        %v1770 = vrot.slane %v529, %v1769
        %v1772 = vunpack.c.l.s4 1983009808
        %v1773 = vunpack.c.0.s8 %v1772
        %v1774 = vlaneseq
        %v1775 = vshrl.u32 %v1774, 7
        %v1776 = vsub.s32 %v1773, %v1775
        %v1777 = vrot.slane %v1763, %v1776
        %v1778 = vcombine.high %v1770, %v1770
        %v1779 = vcombine.high %v1777, %v1777
        %v1780 = vcombine.high %v530, %v530
        %v1782 = vunpack.c.l.s4 1983009808
        %v1783 = vunpack.c.0.s8 %v1782
        %v1784 = vlaneseq
        %v1785 = vshrl.u32 %v1784, 7
        %v1786 = vsub.s32 %v1783, %v1785
        %v1787 = vrot.slane %v530, %v1786
        %v1789 = vunpack.c.l.s4 1983009808
        %v1790 = vunpack.c.0.s8 %v1789
        %v1791 = vlaneseq
        %v1792 = vshrl.u32 %v1791, 7
        %v1793 = vsub.s32 %v1790, %v1792
        %v1794 = vrot.slane %v1780, %v1793
        %v1795 = vcombine.high %v1787, %v1787
        %v1796 = vcombine.high %v1794, %v1794
        %v1797 = vcombine.high %v531, %v531
        %v1799 = vunpack.c.l.s4 1983009808
        %v1800 = vunpack.c.0.s8 %v1799
        %v1801 = vlaneseq
        %v1802 = vshrl.u32 %v1801, 7
        %v1803 = vsub.s32 %v1800, %v1802
        %v1804 = vrot.slane %v531, %v1803
        %v1806 = vunpack.c.l.s4 1983009808
        %v1807 = vunpack.c.0.s8 %v1806
        %v1808 = vlaneseq
        %v1809 = vshrl.u32 %v1808, 7
        %v1810 = vsub.s32 %v1807, %v1809
        %v1811 = vrot.slane %v1797, %v1810
        %v1812 = vcombine.high %v1804, %v1804
        %v1813 = vcombine.high %v1811, %v1811
        %v1814 = vcombine.high %v532, %v532
        %v1816 = vunpack.c.l.s4 1983009808
        %v1817 = vunpack.c.0.s8 %v1816
        %v1818 = vlaneseq
        %v1819 = vshrl.u32 %v1818, 7
        %v1820 = vsub.s32 %v1817, %v1819
        %v1821 = vrot.slane %v532, %v1820
        %v1823 = vunpack.c.l.s4 1983009808
        %v1824 = vunpack.c.0.s8 %v1823
        %v1825 = vlaneseq
        %v1826 = vshrl.u32 %v1825, 7
        %v1827 = vsub.s32 %v1824, %v1826
        %v1828 = vrot.slane %v1814, %v1827
        %v1829 = vcombine.high %v1821, %v1821
        %v1830 = vcombine.high %v1828, %v1828
        %v1831 = vcombine.high %v533, %v533
        %v1833 = vunpack.c.l.s4 1983009808
        %v1834 = vunpack.c.0.s8 %v1833
        %v1835 = vlaneseq
        %v1836 = vshrl.u32 %v1835, 7
        %v1837 = vsub.s32 %v1834, %v1836
        %v1838 = vrot.slane %v533, %v1837
        %v1840 = vunpack.c.l.s4 1983009808
        %v1841 = vunpack.c.0.s8 %v1840
        %v1842 = vlaneseq
        %v1843 = vshrl.u32 %v1842, 7
        %v1844 = vsub.s32 %v1841, %v1843
        %v1845 = vrot.slane %v1831, %v1844
        %v1846 = vcombine.high %v1838, %v1838
        %v1847 = vcombine.high %v1845, %v1845
        %1884 = vmatprep.subr.mxu0 0.0
        %1885 = vmatpush1.msra.mxu0 %v1110
        %1886 = vmatprep.subr.mxu0 0.0
        %1887 = vmatpush1.msra.mxu0 %v1111
        %1888 = vmatprep.subr.mxu0 0.0
        %1889 = vmatpush1.msra.mxu0 %v1112
        %1890 = vmatprep.subr.mxu0 0.0
        %1891 = vmatpush1.msra.mxu0 %v1113
        %1892 = vmatprep.subr.mxu0 0.0
        %1893 = vmatpush1.msra.mxu0 %v1114
        %1894 = vmatprep.subr.mxu0 0.0
        %1895 = vmatpush1.msra.mxu0 %v1115
        %1896 = vmatprep.subr.mxu0 0.0
        %1897 = vmatpush1.msra.mxu0 %v1116
        %1898 = vmatprep.subr.mxu0 0.0
        %1899 = vmatpush1.msra.mxu0 %v1117
        %1900 = vmatprep.subr.mxu0 0.0
        %1901 = vmatpush1.msra.mxu0 %v1118
        %1902 = vmatprep.subr.mxu0 0.0
        %1903 = vmatpush1.msra.mxu0 %v1119
        %1904 = vmatprep.subr.mxu0 0.0
        %1905 = vmatpush1.msra.mxu0 %v1120
        %1906 = vmatprep.subr.mxu0 0.0
        %1907 = vmatpush1.msra.mxu0 %v1121
        %1908 = vmatprep.subr.mxu0 0.0
        %1909 = vmatpush1.msra.mxu0 %v1122
        %1910 = vmatprep.subr.mxu0 0.0
        %1911 = vmatpush1.msra.mxu0 %v1123
        %1912 = vmatprep.subr.mxu0 0.0
        %1913 = vmatpush1.msra.mxu0 %v1124
        %1914 = vmatprep.subr.mxu0 0.0
        %1915 = vmatpush1.msra.mxu0 %v1125
        %1916 = vmatprep.subr.mxu0 0.0
        %1917 = vmatpush1.msra.mxu0 %v1126
        %1918 = vmatprep.subr.mxu0 0.0
        %1919 = vmatpush1.msra.mxu0 %v1127
        %1920 = vmatprep.subr.mxu0 0.0
        %1921 = vmatpush1.msra.mxu0 %v1128
        %1922 = vmatprep.subr.mxu0 0.0
        %1923 = vmatpush1.msra.mxu0 %v1129
        %1924 = vmatprep.subr.mxu0 0.0
        %1925 = vmatpush1.msra.mxu0 %v1130
        %1926 = vmatprep.subr.mxu0 0.0
        %1927 = vmatpush1.msra.mxu0 %v1131
        %1928 = vmatprep.subr.mxu0 0.0
        %1929 = vmatpush1.msra.mxu0 %v1132
        %1930 = vmatprep.subr.mxu0 0.0
        %1931 = vmatpush1.msra.mxu0 %v1133
        %1932 = vmatprep.subr.mxu0 0.0
        %1933 = vmatpush1.msra.mxu0 %v1134
        %1934 = vmatprep.subr.mxu0 0.0
        %1935 = vmatpush1.msra.mxu0 %v1135
        %1936 = vmatprep.subr.mxu0 0.0
        %1937 = vmatpush1.msra.mxu0 %v1136
        %1938 = vmatprep.subr.mxu0 0.0
        %1939 = vmatpush1.msra.mxu0 %v1137
        %1940 = vmatprep.subr.mxu0 0.0
        %1941 = vmatpush1.msra.mxu0 %v1138
        %1942 = vmatprep.subr.mxu0 0.0
        %1943 = vmatpush1.msra.mxu0 %v1139
        %1944 = vmatprep.subr.mxu0 0.0
        %1945 = vmatpush1.msra.mxu0 %v1140
        %1946 = vmatprep.subr.mxu0 0.0
        %1947 = vmatpush1.msra.mxu0 %v1141
        %1948 = vmatprep.mubr.f32.mxu0 %v1710
        %1949 = vmatmul.mubr.f32.gmra.mrb[0].mxu0 %v1702
        %v1950 = vpop.f32.mrb[0].mxu0
        %v1951 = vadd.f32 0.0, %v1950
        %v1952 = vpop.f32.mrb[0].mxu0
        %1953 = vdwg.mxu0
        %1954 = vmatprep.subr.mxu0 0.0
        %1955 = vmatpush1.msra.mxu0 %v1142
        %1956 = vmatprep.subr.mxu0 0.0
        %1957 = vmatpush1.msra.mxu0 %v1143
        %1958 = vmatprep.subr.mxu0 0.0
        %1959 = vmatpush1.msra.mxu0 %v1144
        %1960 = vmatprep.subr.mxu0 0.0
        %1961 = vmatpush1.msra.mxu0 %v1145
        %1962 = vmatprep.subr.mxu0 0.0
        %1963 = vmatpush1.msra.mxu0 %v1146
        %1964 = vmatprep.subr.mxu0 0.0
        %1965 = vmatpush1.msra.mxu0 %v1147
        %1966 = vmatprep.subr.mxu0 0.0
        %1967 = vmatpush1.msra.mxu0 %v1148
        %1968 = vmatprep.subr.mxu0 0.0
        %1969 = vmatpush1.msra.mxu0 %v1149
        %1970 = vmatprep.subr.mxu0 0.0
        %1971 = vmatpush1.msra.mxu0 %v1150
        %1972 = vmatprep.subr.mxu0 0.0
        %1973 = vmatpush1.msra.mxu0 %v1151
        %1974 = vmatprep.subr.mxu0 0.0
        %1975 = vmatpush1.msra.mxu0 %v1152
        %1976 = vmatprep.subr.mxu0 0.0
        %1977 = vmatpush1.msra.mxu0 %v1153
        %1978 = vmatprep.subr.mxu0 0.0
        %1979 = vmatpush1.msra.mxu0 %v1154
        %1980 = vmatprep.subr.mxu0 0.0
        %1981 = vmatpush1.msra.mxu0 %v1155
        %1982 = vmatprep.subr.mxu0 0.0
        %1983 = vmatpush1.msra.mxu0 %v1156
        %1984 = vmatprep.subr.mxu0 0.0
        %1985 = vmatpush1.msra.mxu0 %v1157
        %1986 = vmatprep.subr.mxu0 0.0
        %1987 = vmatpush1.msra.mxu0 %v1158
        %1988 = vmatprep.subr.mxu0 0.0
        %1989 = vmatpush1.msra.mxu0 %v1159
        %1990 = vmatprep.subr.mxu0 0.0
        %1991 = vmatpush1.msra.mxu0 %v1160
        %1992 = vmatprep.subr.mxu0 0.0
        %1993 = vmatpush1.msra.mxu0 %v1161
        %1994 = vmatprep.subr.mxu0 0.0
        %1995 = vmatpush1.msra.mxu0 %v1162
        %1996 = vmatprep.subr.mxu0 0.0
        %1997 = vmatpush1.msra.mxu0 %v1163
        %1998 = vmatprep.subr.mxu0 0.0
        %1999 = vmatpush1.msra.mxu0 %v1164
        %2000 = vmatprep.subr.mxu0 0.0
        %2001 = vmatpush1.msra.mxu0 %v1165
        %2002 = vmatprep.subr.mxu0 0.0
        %2003 = vmatpush1.msra.mxu0 %v1166
        %2004 = vmatprep.subr.mxu0 0.0
        %2005 = vmatpush1.msra.mxu0 %v1167
        %2006 = vmatprep.subr.mxu0 0.0
        %2007 = vmatpush1.msra.mxu0 %v1168
        %2008 = vmatprep.subr.mxu0 0.0
        %2009 = vmatpush1.msra.mxu0 %v1169
        %2010 = vmatprep.subr.mxu0 0.0
        %2011 = vmatpush1.msra.mxu0 %v1170
        %2012 = vmatprep.subr.mxu0 0.0
        %2013 = vmatpush1.msra.mxu0 %v1171
        %2014 = vmatprep.subr.mxu0 0.0
        %2015 = vmatpush1.msra.mxu0 %v1172
        %2016 = vmatprep.subr.mxu0 0.0
        %2017 = vmatpush1.msra.mxu0 %v1173
        %2018 = vmatprep.mubr.f32.mxu0 %v1711
        %2019 = vmatmul.mubr.f32.gmra.mrb[0].mxu0 %v1709
        %v2020 = vpop.f32.mrb[0].mxu0
        %v2021 = vadd.f32 %v1951, %v2020
        %v2022 = vpop.f32.mrb[0].mxu0
        %2023 = vdwg.mxu0
        %2024 = vmatprep.subr.mxu0 0.0
        %2025 = vmatpush1.msra.mxu0 %v1174
        %2026 = vmatprep.subr.mxu0 0.0
        %2027 = vmatpush1.msra.mxu0 %v1175
        %2028 = vmatprep.subr.mxu0 0.0
        %2029 = vmatpush1.msra.mxu0 %v1176
        %2030 = vmatprep.subr.mxu0 0.0
        %2031 = vmatpush1.msra.mxu0 %v1177
        %2032 = vmatprep.subr.mxu0 0.0
        %2033 = vmatpush1.msra.mxu0 %v1178
        %2034 = vmatprep.subr.mxu0 0.0
        %2035 = vmatpush1.msra.mxu0 %v1179
        %2036 = vmatprep.subr.mxu0 0.0
        %2037 = vmatpush1.msra.mxu0 %v1180
        %2038 = vmatprep.subr.mxu0 0.0
        %2039 = vmatpush1.msra.mxu0 %v1181
        %2040 = vmatprep.subr.mxu0 0.0
        %2041 = vmatpush1.msra.mxu0 %v1182
        %2042 = vmatprep.subr.mxu0 0.0
        %2043 = vmatpush1.msra.mxu0 %v1183
        %2044 = vmatprep.subr.mxu0 0.0
        %2045 = vmatpush1.msra.mxu0 %v1184
        %2046 = vmatprep.subr.mxu0 0.0
        %2047 = vmatpush1.msra.mxu0 %v1185
        %2048 = vmatprep.subr.mxu0 0.0
        %2049 = vmatpush1.msra.mxu0 %v1186
        %2050 = vmatprep.subr.mxu0 0.0
        %2051 = vmatpush1.msra.mxu0 %v1187
        %2052 = vmatprep.subr.mxu0 0.0
        %2053 = vmatpush1.msra.mxu0 %v1188
        %2054 = vmatprep.subr.mxu0 0.0
        %2055 = vmatpush1.msra.mxu0 %v1189
        %2056 = vmatprep.subr.mxu0 0.0
        %2057 = vmatpush1.msra.mxu0 %v1190
        %2058 = vmatprep.subr.mxu0 0.0
        %2059 = vmatpush1.msra.mxu0 %v1191
        %2060 = vmatprep.subr.mxu0 0.0
        %2061 = vmatpush1.msra.mxu0 %v1192
        %2062 = vmatprep.subr.mxu0 0.0
        %2063 = vmatpush1.msra.mxu0 %v1193
        %2064 = vmatprep.subr.mxu0 0.0
        %2065 = vmatpush1.msra.mxu0 %v1194
        %2066 = vmatprep.subr.mxu0 0.0
        %2067 = vmatpush1.msra.mxu0 %v1195
        %2068 = vmatprep.subr.mxu0 0.0
        %2069 = vmatpush1.msra.mxu0 %v1196
        %2070 = vmatprep.subr.mxu0 0.0
        %2071 = vmatpush1.msra.mxu0 %v1197
        %2072 = vmatprep.subr.mxu0 0.0
        %2073 = vmatpush1.msra.mxu0 %v1198
        %2074 = vmatprep.subr.mxu0 0.0
        %2075 = vmatpush1.msra.mxu0 %v1199
        %2076 = vmatprep.subr.mxu0 0.0
        %2077 = vmatpush1.msra.mxu0 %v1200
        %2078 = vmatprep.subr.mxu0 0.0
        %2079 = vmatpush1.msra.mxu0 %v1201
        %2080 = vmatprep.subr.mxu0 0.0
        %2081 = vmatpush1.msra.mxu0 %v1202
        %2082 = vmatprep.subr.mxu0 0.0
        %2083 = vmatpush1.msra.mxu0 %v1203
        %2084 = vmatprep.subr.mxu0 0.0
        %2085 = vmatpush1.msra.mxu0 %v1204
        %2086 = vmatprep.subr.mxu0 0.0
        %2087 = vmatpush1.msra.mxu0 %v1205
        %2088 = vmatprep.mubr.f32.mxu0 %v1727
        %2089 = vmatmul.mubr.f32.gmra.mrb[0].mxu0 %v1719
        %v2090 = vpop.f32.mrb[0].mxu0
        %v2091 = vadd.f32 %v2021, %v2090
        %v2092 = vpop.f32.mrb[0].mxu0
        %2093 = vdwg.mxu0
        %2094 = vmatprep.subr.mxu0 0.0
        %2095 = vmatpush1.msra.mxu0 %v1206
        %2096 = vmatprep.subr.mxu0 0.0
        %2097 = vmatpush1.msra.mxu0 %v1207
        %2098 = vmatprep.subr.mxu0 0.0
        %2099 = vmatpush1.msra.mxu0 %v1208
        %2100 = vmatprep.subr.mxu0 0.0
        %2101 = vmatpush1.msra.mxu0 %v1209
        %2102 = vmatprep.subr.mxu0 0.0
        %2103 = vmatpush1.msra.mxu0 %v1210
        %2104 = vmatprep.subr.mxu0 0.0
        %2105 = vmatpush1.msra.mxu0 %v1211
        %2106 = vmatprep.subr.mxu0 0.0
        %2107 = vmatpush1.msra.mxu0 %v1212
        %2108 = vmatprep.subr.mxu0 0.0
        %2109 = vmatpush1.msra.mxu0 %v1213
        %2110 = vmatprep.subr.mxu0 0.0
        %2111 = vmatpush1.msra.mxu0 %v1214
        %2112 = vmatprep.subr.mxu0 0.0
        %2113 = vmatpush1.msra.mxu0 %v1215
        %2114 = vmatprep.subr.mxu0 0.0
        %2115 = vmatpush1.msra.mxu0 %v1216
        %2116 = vmatprep.subr.mxu0 0.0
        %2117 = vmatpush1.msra.mxu0 %v1217
        %2118 = vmatprep.subr.mxu0 0.0
        %2119 = vmatpush1.msra.mxu0 %v1218
        %2120 = vmatprep.subr.mxu0 0.0
        %2121 = vmatpush1.msra.mxu0 %v1219
        %2122 = vmatprep.subr.mxu0 0.0
        %2123 = vmatpush1.msra.mxu0 %v1220
        %2124 = vmatprep.subr.mxu0 0.0
        %2125 = vmatpush1.msra.mxu0 %v1221
        %2126 = vmatprep.subr.mxu0 0.0
        %2127 = vmatpush1.msra.mxu0 %v1222
        %2128 = vmatprep.subr.mxu0 0.0
        %2129 = vmatpush1.msra.mxu0 %v1223
        %2130 = vmatprep.subr.mxu0 0.0
        %2131 = vmatpush1.msra.mxu0 %v1224
        %2132 = vmatprep.subr.mxu0 0.0
        %2133 = vmatpush1.msra.mxu0 %v1225
        %2134 = vmatprep.subr.mxu0 0.0
        %2135 = vmatpush1.msra.mxu0 %v1226
        %2136 = vmatprep.subr.mxu0 0.0
        %2137 = vmatpush1.msra.mxu0 %v1227
        %2138 = vmatprep.subr.mxu0 0.0
        %2139 = vmatpush1.msra.mxu0 %v1228
        %2140 = vmatprep.subr.mxu0 0.0
        %2141 = vmatpush1.msra.mxu0 %v1229
        %2142 = vmatprep.subr.mxu0 0.0
        %2143 = vmatpush1.msra.mxu0 %v1230
        %2144 = vmatprep.subr.mxu0 0.0
        %2145 = vmatpush1.msra.mxu0 %v1231
        %2146 = vmatprep.subr.mxu0 0.0
        %2147 = vmatpush1.msra.mxu0 %v1232
        %2148 = vmatprep.subr.mxu0 0.0
        %2149 = vmatpush1.msra.mxu0 %v1233
        %2150 = vmatprep.subr.mxu0 0.0
        %2151 = vmatpush1.msra.mxu0 %v1234
        %2152 = vmatprep.subr.mxu0 0.0
        %2153 = vmatpush1.msra.mxu0 %v1235
        %2154 = vmatprep.subr.mxu0 0.0
        %2155 = vmatpush1.msra.mxu0 %v1236
        %2156 = vmatprep.subr.mxu0 0.0
        %2157 = vmatpush1.msra.mxu0 %v1237
        %2158 = vmatprep.mubr.f32.mxu0 %v1728
        %2159 = vmatmul.mubr.f32.gmra.mrb[0].mxu0 %v1726
        %v2160 = vpop.f32.mrb[0].mxu0
        %v2161 = vadd.f32 %v2091, %v2160
        %v2162 = vpop.f32.mrb[0].mxu0
        %2163 = vdwg.mxu0
        %2164 = vmatprep.subr.mxu0 0.0
        %2165 = vmatpush1.msra.mxu0 %v1238
        %2166 = vmatprep.subr.mxu0 0.0
        %2167 = vmatpush1.msra.mxu0 %v1239
        %2168 = vmatprep.subr.mxu0 0.0
        %2169 = vmatpush1.msra.mxu0 %v1240
        %2170 = vmatprep.subr.mxu0 0.0
        %2171 = vmatpush1.msra.mxu0 %v1241
        %2172 = vmatprep.subr.mxu0 0.0
        %2173 = vmatpush1.msra.mxu0 %v1242
        %2174 = vmatprep.subr.mxu0 0.0
        %2175 = vmatpush1.msra.mxu0 %v1243
        %2176 = vmatprep.subr.mxu0 0.0
        %2177 = vmatpush1.msra.mxu0 %v1244
        %2178 = vmatprep.subr.mxu0 0.0
        %2179 = vmatpush1.msra.mxu0 %v1245
        %2180 = vmatprep.subr.mxu0 0.0
        %2181 = vmatpush1.msra.mxu0 %v1246
        %2182 = vmatprep.subr.mxu0 0.0
        %2183 = vmatpush1.msra.mxu0 %v1247
        %2184 = vmatprep.subr.mxu0 0.0
        %2185 = vmatpush1.msra.mxu0 %v1248
        %2186 = vmatprep.subr.mxu0 0.0
        %2187 = vmatpush1.msra.mxu0 %v1249
        %2188 = vmatprep.subr.mxu0 0.0
        %2189 = vmatpush1.msra.mxu0 %v1250
        %2190 = vmatprep.subr.mxu0 0.0
        %2191 = vmatpush1.msra.mxu0 %v1251
        %2192 = vmatprep.subr.mxu0 0.0
        %2193 = vmatpush1.msra.mxu0 %v1252
        %2194 = vmatprep.subr.mxu0 0.0
        %2195 = vmatpush1.msra.mxu0 %v1253
        %2196 = vmatprep.subr.mxu0 0.0
        %2197 = vmatpush1.msra.mxu0 %v1254
        %2198 = vmatprep.subr.mxu0 0.0
        %2199 = vmatpush1.msra.mxu0 %v1255
        %2200 = vmatprep.subr.mxu0 0.0
        %2201 = vmatpush1.msra.mxu0 %v1256
        %2202 = vmatprep.subr.mxu0 0.0
        %2203 = vmatpush1.msra.mxu0 %v1257
        %2204 = vmatprep.subr.mxu0 0.0
        %2205 = vmatpush1.msra.mxu0 %v1258
        %2206 = vmatprep.subr.mxu0 0.0
        %2207 = vmatpush1.msra.mxu0 %v1259
        %2208 = vmatprep.subr.mxu0 0.0
        %2209 = vmatpush1.msra.mxu0 %v1260
        %2210 = vmatprep.subr.mxu0 0.0
        %2211 = vmatpush1.msra.mxu0 %v1261
        %2212 = vmatprep.subr.mxu0 0.0
        %2213 = vmatpush1.msra.mxu0 %v1262
        %2214 = vmatprep.subr.mxu0 0.0
        %2215 = vmatpush1.msra.mxu0 %v1263
        %2216 = vmatprep.subr.mxu0 0.0
        %2217 = vmatpush1.msra.mxu0 %v1264
        %2218 = vmatprep.subr.mxu0 0.0
        %2219 = vmatpush1.msra.mxu0 %v1265
        %2220 = vmatprep.subr.mxu0 0.0
        %2221 = vmatpush1.msra.mxu0 %v1266
        %2222 = vmatprep.subr.mxu0 0.0
        %2223 = vmatpush1.msra.mxu0 %v1267
        %2224 = vmatprep.subr.mxu0 0.0
        %2225 = vmatpush1.msra.mxu0 %v1268
        %2226 = vmatprep.subr.mxu0 0.0
        %2227 = vmatpush1.msra.mxu0 %v1269
        %2228 = vmatprep.mubr.f32.mxu0 %v1744
        %2229 = vmatmul.mubr.f32.gmra.mrb[0].mxu0 %v1736
        %v2230 = vpop.f32.mrb[0].mxu0
        %v2231 = vadd.f32 %v2161, %v2230
        %v2232 = vpop.f32.mrb[0].mxu0
        %2233 = vdwg.mxu0
        %2234 = vmatprep.subr.mxu0 0.0
        %2235 = vmatpush1.msra.mxu0 %v1270
        %2236 = vmatprep.subr.mxu0 0.0
        %2237 = vmatpush1.msra.mxu0 %v1271
        %2238 = vmatprep.subr.mxu0 0.0
        %2239 = vmatpush1.msra.mxu0 %v1272
        %2240 = vmatprep.subr.mxu0 0.0
        %2241 = vmatpush1.msra.mxu0 %v1273
        %2242 = vmatprep.subr.mxu0 0.0
        %2243 = vmatpush1.msra.mxu0 %v1274
        %2244 = vmatprep.subr.mxu0 0.0
        %2245 = vmatpush1.msra.mxu0 %v1275
        %2246 = vmatprep.subr.mxu0 0.0
        %2247 = vmatpush1.msra.mxu0 %v1276
        %2248 = vmatprep.subr.mxu0 0.0
        %2249 = vmatpush1.msra.mxu0 %v1277
        %2250 = vmatprep.subr.mxu0 0.0
        %2251 = vmatpush1.msra.mxu0 %v1278
        %2252 = vmatprep.subr.mxu0 0.0
        %2253 = vmatpush1.msra.mxu0 %v1279
        %2254 = vmatprep.subr.mxu0 0.0
        %2255 = vmatpush1.msra.mxu0 %v1280
        %2256 = vmatprep.subr.mxu0 0.0
        %2257 = vmatpush1.msra.mxu0 %v1281
        %2258 = vmatprep.subr.mxu0 0.0
        %2259 = vmatpush1.msra.mxu0 %v1282
        %2260 = vmatprep.subr.mxu0 0.0
        %2261 = vmatpush1.msra.mxu0 %v1283
        %2262 = vmatprep.subr.mxu0 0.0
        %2263 = vmatpush1.msra.mxu0 %v1284
        %2264 = vmatprep.subr.mxu0 0.0
        %2265 = vmatpush1.msra.mxu0 %v1285
        %2266 = vmatprep.subr.mxu0 0.0
        %2267 = vmatpush1.msra.mxu0 %v1286
        %2268 = vmatprep.subr.mxu0 0.0
        %2269 = vmatpush1.msra.mxu0 %v1287
        %2270 = vmatprep.subr.mxu0 0.0
        %2271 = vmatpush1.msra.mxu0 %v1288
        %2272 = vmatprep.subr.mxu0 0.0
        %2273 = vmatpush1.msra.mxu0 %v1289
        %2274 = vmatprep.subr.mxu0 0.0
        %2275 = vmatpush1.msra.mxu0 %v1290
        %2276 = vmatprep.subr.mxu0 0.0
        %2277 = vmatpush1.msra.mxu0 %v1291
        %2278 = vmatprep.subr.mxu0 0.0
        %2279 = vmatpush1.msra.mxu0 %v1292
        %2280 = vmatprep.subr.mxu0 0.0
        %2281 = vmatpush1.msra.mxu0 %v1293
        %2282 = vmatprep.subr.mxu0 0.0
        %2283 = vmatpush1.msra.mxu0 %v1294
        %2284 = vmatprep.subr.mxu0 0.0
        %2285 = vmatpush1.msra.mxu0 %v1295
        %2286 = vmatprep.subr.mxu0 0.0
        %2287 = vmatpush1.msra.mxu0 %v1296
        %2288 = vmatprep.subr.mxu0 0.0
        %2289 = vmatpush1.msra.mxu0 %v1297
        %2290 = vmatprep.subr.mxu0 0.0
        %2291 = vmatpush1.msra.mxu0 %v1298
        %2292 = vmatprep.subr.mxu0 0.0
        %2293 = vmatpush1.msra.mxu0 %v1299
        %2294 = vmatprep.subr.mxu0 0.0
        %2295 = vmatpush1.msra.mxu0 %v1300
        %2296 = vmatprep.subr.mxu0 0.0
        %2297 = vmatpush1.msra.mxu0 %v1301
        %2298 = vmatprep.mubr.f32.mxu0 %v1745
        %2299 = vmatmul.mubr.f32.gmra.mrb[0].mxu0 %v1743
        %v2300 = vpop.f32.mrb[0].mxu0
        %v2301 = vadd.f32 %v2231, %v2300
        %v2302 = vpop.f32.mrb[0].mxu0
        %2303 = vdwg.mxu0
        %2304 = vmatprep.subr.mxu0 0.0
        %2305 = vmatpush1.msra.mxu0 %v1302
        %2306 = vmatprep.subr.mxu0 0.0
        %2307 = vmatpush1.msra.mxu0 %v1303
        %2308 = vmatprep.subr.mxu0 0.0
        %2309 = vmatpush1.msra.mxu0 %v1304
        %2310 = vmatprep.subr.mxu0 0.0
        %2311 = vmatpush1.msra.mxu0 %v1305
        %2312 = vmatprep.subr.mxu0 0.0
        %2313 = vmatpush1.msra.mxu0 %v1306
        %2314 = vmatprep.subr.mxu0 0.0
        %2315 = vmatpush1.msra.mxu0 %v1307
        %2316 = vmatprep.subr.mxu0 0.0
        %2317 = vmatpush1.msra.mxu0 %v1308
        %2318 = vmatprep.subr.mxu0 0.0
        %2319 = vmatpush1.msra.mxu0 %v1309
        %2320 = vmatprep.subr.mxu0 0.0
        %2321 = vmatpush1.msra.mxu0 %v1310
        %2322 = vmatprep.subr.mxu0 0.0
        %2323 = vmatpush1.msra.mxu0 %v1311
        %2324 = vmatprep.subr.mxu0 0.0
        %2325 = vmatpush1.msra.mxu0 %v1312
        %2326 = vmatprep.subr.mxu0 0.0
        %2327 = vmatpush1.msra.mxu0 %v1313
        %2328 = vmatprep.subr.mxu0 0.0
        %2329 = vmatpush1.msra.mxu0 %v1314
        %2330 = vmatprep.subr.mxu0 0.0
        %2331 = vmatpush1.msra.mxu0 %v1315
        %2332 = vmatprep.subr.mxu0 0.0
        %2333 = vmatpush1.msra.mxu0 %v1316
        %2334 = vmatprep.subr.mxu0 0.0
        %2335 = vmatpush1.msra.mxu0 %v1317
        %2336 = vmatprep.subr.mxu0 0.0
        %2337 = vmatpush1.msra.mxu0 %v1318
        %2338 = vmatprep.subr.mxu0 0.0
        %2339 = vmatpush1.msra.mxu0 %v1319
        %2340 = vmatprep.subr.mxu0 0.0
        %2341 = vmatpush1.msra.mxu0 %v1320
        %2342 = vmatprep.subr.mxu0 0.0
        %2343 = vmatpush1.msra.mxu0 %v1321
        %2344 = vmatprep.subr.mxu0 0.0
        %2345 = vmatpush1.msra.mxu0 %v1322
        %2346 = vmatprep.subr.mxu0 0.0
        %2347 = vmatpush1.msra.mxu0 %v1323
        %2348 = vmatprep.subr.mxu0 0.0
        %2349 = vmatpush1.msra.mxu0 %v1324
        %2350 = vmatprep.subr.mxu0 0.0
        %2351 = vmatpush1.msra.mxu0 %v1325
        %2352 = vmatprep.subr.mxu0 0.0
        %2353 = vmatpush1.msra.mxu0 %v1326
        %2354 = vmatprep.subr.mxu0 0.0
        %2355 = vmatpush1.msra.mxu0 %v1327
        %2356 = vmatprep.subr.mxu0 0.0
        %2357 = vmatpush1.msra.mxu0 %v1328
        %2358 = vmatprep.subr.mxu0 0.0
        %2359 = vmatpush1.msra.mxu0 %v1329
        %2360 = vmatprep.subr.mxu0 0.0
        %2361 = vmatpush1.msra.mxu0 %v1330
        %2362 = vmatprep.subr.mxu0 0.0
        %2363 = vmatpush1.msra.mxu0 %v1331
        %2364 = vmatprep.subr.mxu0 0.0
        %2365 = vmatpush1.msra.mxu0 %v1332
        %2366 = vmatprep.subr.mxu0 0.0
        %2367 = vmatpush1.msra.mxu0 %v1333
        %2368 = vmatprep.mubr.f32.mxu0 %v1761
        %2369 = vmatmul.mubr.f32.gmra.mrb[0].mxu0 %v1753
        %v2370 = vpop.f32.mrb[0].mxu0
        %v2371 = vadd.f32 %v2301, %v2370
        %v2372 = vpop.f32.mrb[0].mxu0
        %2373 = vdwg.mxu0
        %2374 = vmatprep.subr.mxu0 0.0
        %2375 = vmatpush1.msra.mxu0 %v1334
        %2376 = vmatprep.subr.mxu0 0.0
        %2377 = vmatpush1.msra.mxu0 %v1335
        %2378 = vmatprep.subr.mxu0 0.0
        %2379 = vmatpush1.msra.mxu0 %v1336
        %2380 = vmatprep.subr.mxu0 0.0
        %2381 = vmatpush1.msra.mxu0 %v1337
        %2382 = vmatprep.subr.mxu0 0.0
        %2383 = vmatpush1.msra.mxu0 %v1338
        %2384 = vmatprep.subr.mxu0 0.0
        %2385 = vmatpush1.msra.mxu0 %v1339
        %2386 = vmatprep.subr.mxu0 0.0
        %2387 = vmatpush1.msra.mxu0 %v1340
        %2388 = vmatprep.subr.mxu0 0.0
        %2389 = vmatpush1.msra.mxu0 %v1341
        %2390 = vmatprep.subr.mxu0 0.0
        %2391 = vmatpush1.msra.mxu0 %v1342
        %2392 = vmatprep.subr.mxu0 0.0
        %2393 = vmatpush1.msra.mxu0 %v1343
        %2394 = vmatprep.subr.mxu0 0.0
        %2395 = vmatpush1.msra.mxu0 %v1344
        %2396 = vmatprep.subr.mxu0 0.0
        %2397 = vmatpush1.msra.mxu0 %v1345
        %2398 = vmatprep.subr.mxu0 0.0
        %2399 = vmatpush1.msra.mxu0 %v1346
        %2400 = vmatprep.subr.mxu0 0.0
        %2401 = vmatpush1.msra.mxu0 %v1347
        %2402 = vmatprep.subr.mxu0 0.0
        %2403 = vmatpush1.msra.mxu0 %v1348
        %2404 = vmatprep.subr.mxu0 0.0
        %2405 = vmatpush1.msra.mxu0 %v1349
        %2406 = vmatprep.subr.mxu0 0.0
        %2407 = vmatpush1.msra.mxu0 %v1350
        %2408 = vmatprep.subr.mxu0 0.0
        %2409 = vmatpush1.msra.mxu0 %v1351
        %2410 = vmatprep.subr.mxu0 0.0
        %2411 = vmatpush1.msra.mxu0 %v1352
        %2412 = vmatprep.subr.mxu0 0.0
        %2413 = vmatpush1.msra.mxu0 %v1353
        %2414 = vmatprep.subr.mxu0 0.0
        %2415 = vmatpush1.msra.mxu0 %v1354
        %2416 = vmatprep.subr.mxu0 0.0
        %2417 = vmatpush1.msra.mxu0 %v1355
        %2418 = vmatprep.subr.mxu0 0.0
        %2419 = vmatpush1.msra.mxu0 %v1356
        %2420 = vmatprep.subr.mxu0 0.0
        %2421 = vmatpush1.msra.mxu0 %v1357
        %2422 = vmatprep.subr.mxu0 0.0
        %2423 = vmatpush1.msra.mxu0 %v1358
        %2424 = vmatprep.subr.mxu0 0.0
        %2425 = vmatpush1.msra.mxu0 %v1359
        %2426 = vmatprep.subr.mxu0 0.0
        %2427 = vmatpush1.msra.mxu0 %v1360
        %2428 = vmatprep.subr.mxu0 0.0
        %2429 = vmatpush1.msra.mxu0 %v1361
        %2430 = vmatprep.subr.mxu0 0.0
        %2431 = vmatpush1.msra.mxu0 %v1362
        %2432 = vmatprep.subr.mxu0 0.0
        %2433 = vmatpush1.msra.mxu0 %v1363
        %2434 = vmatprep.subr.mxu0 0.0
        %2435 = vmatpush1.msra.mxu0 %v1364
        %2436 = vmatprep.subr.mxu0 0.0
        %2437 = vmatpush1.msra.mxu0 %v1365
        %2438 = vmatprep.mubr.f32.mxu0 %v1762
        %2439 = vmatmul.mubr.f32.gmra.mrb[0].mxu0 %v1760
        %v2440 = vpop.f32.mrb[0].mxu0
        %v2441 = vadd.f32 %v2371, %v2440
        %v2442 = vpop.f32.mrb[0].mxu0
        %2443 = vdwg.mxu0
        %2444 = vmatprep.subr.mxu0 0.0
        %2445 = vmatpush1.msra.mxu0 %v1366
        %2446 = vmatprep.subr.mxu0 0.0
        %2447 = vmatpush1.msra.mxu0 %v1367
        %2448 = vmatprep.subr.mxu0 0.0
        %2449 = vmatpush1.msra.mxu0 %v1368
        %2450 = vmatprep.subr.mxu0 0.0
        %2451 = vmatpush1.msra.mxu0 %v1369
        %2452 = vmatprep.subr.mxu0 0.0
        %2453 = vmatpush1.msra.mxu0 %v1370
        %2454 = vmatprep.subr.mxu0 0.0
        %2455 = vmatpush1.msra.mxu0 %v1371
        %2456 = vmatprep.subr.mxu0 0.0
        %2457 = vmatpush1.msra.mxu0 %v1372
        %2458 = vmatprep.subr.mxu0 0.0
        %2459 = vmatpush1.msra.mxu0 %v1373
        %2460 = vmatprep.subr.mxu0 0.0
        %2461 = vmatpush1.msra.mxu0 %v1374
        %2462 = vmatprep.subr.mxu0 0.0
        %2463 = vmatpush1.msra.mxu0 %v1375
        %2464 = vmatprep.subr.mxu0 0.0
        %2465 = vmatpush1.msra.mxu0 %v1376
        %2466 = vmatprep.subr.mxu0 0.0
        %2467 = vmatpush1.msra.mxu0 %v1377
        %2468 = vmatprep.subr.mxu0 0.0
        %2469 = vmatpush1.msra.mxu0 %v1378
        %2470 = vmatprep.subr.mxu0 0.0
        %2471 = vmatpush1.msra.mxu0 %v1379
        %2472 = vmatprep.subr.mxu0 0.0
        %2473 = vmatpush1.msra.mxu0 %v1380
        %2474 = vmatprep.subr.mxu0 0.0
        %2475 = vmatpush1.msra.mxu0 %v1381
        %2476 = vmatprep.subr.mxu0 0.0
        %2477 = vmatpush1.msra.mxu0 %v1382
        %2478 = vmatprep.subr.mxu0 0.0
        %2479 = vmatpush1.msra.mxu0 %v1383
        %2480 = vmatprep.subr.mxu0 0.0
        %2481 = vmatpush1.msra.mxu0 %v1384
        %2482 = vmatprep.subr.mxu0 0.0
        %2483 = vmatpush1.msra.mxu0 %v1385
        %2484 = vmatprep.subr.mxu0 0.0
        %2485 = vmatpush1.msra.mxu0 %v1386
        %2486 = vmatprep.subr.mxu0 0.0
        %2487 = vmatpush1.msra.mxu0 %v1387
        %2488 = vmatprep.subr.mxu0 0.0
        %2489 = vmatpush1.msra.mxu0 %v1388
        %2490 = vmatprep.subr.mxu0 0.0
        %2491 = vmatpush1.msra.mxu0 %v1389
        %2492 = vmatprep.subr.mxu0 0.0
        %2493 = vmatpush1.msra.mxu0 %v1390
        %2494 = vmatprep.subr.mxu0 0.0
        %2495 = vmatpush1.msra.mxu0 %v1391
        %2496 = vmatprep.subr.mxu0 0.0
        %2497 = vmatpush1.msra.mxu0 %v1392
        %2498 = vmatprep.subr.mxu0 0.0
        %2499 = vmatpush1.msra.mxu0 %v1393
        %2500 = vmatprep.subr.mxu0 0.0
        %2501 = vmatpush1.msra.mxu0 %v1394
        %2502 = vmatprep.subr.mxu0 0.0
        %2503 = vmatpush1.msra.mxu0 %v1395
        %2504 = vmatprep.subr.mxu0 0.0
        %2505 = vmatpush1.msra.mxu0 %v1396
        %2506 = vmatprep.subr.mxu0 0.0
        %2507 = vmatpush1.msra.mxu0 %v1397
        %2508 = vmatprep.mubr.f32.mxu0 %v1778
        %2509 = vmatmul.mubr.f32.gmra.mrb[0].mxu0 %v1770
        %v2510 = vpop.f32.mrb[0].mxu0
        %v2511 = vadd.f32 %v2441, %v2510
        %v2512 = vpop.f32.mrb[0].mxu0
        %2513 = vdwg.mxu0
        %2514 = vmatprep.subr.mxu0 0.0
        %2515 = vmatpush1.msra.mxu0 %v1398
        %2516 = vmatprep.subr.mxu0 0.0
        %2517 = vmatpush1.msra.mxu0 %v1399
        %2518 = vmatprep.subr.mxu0 0.0
        %2519 = vmatpush1.msra.mxu0 %v1400
        %2520 = vmatprep.subr.mxu0 0.0
        %2521 = vmatpush1.msra.mxu0 %v1401
        %2522 = vmatprep.subr.mxu0 0.0
        %2523 = vmatpush1.msra.mxu0 %v1402
        %2524 = vmatprep.subr.mxu0 0.0
        %2525 = vmatpush1.msra.mxu0 %v1403
        %2526 = vmatprep.subr.mxu0 0.0
        %2527 = vmatpush1.msra.mxu0 %v1404
        %2528 = vmatprep.subr.mxu0 0.0
        %2529 = vmatpush1.msra.mxu0 %v1405
        %2530 = vmatprep.subr.mxu0 0.0
        %2531 = vmatpush1.msra.mxu0 %v1406
        %2532 = vmatprep.subr.mxu0 0.0
        %2533 = vmatpush1.msra.mxu0 %v1407
        %2534 = vmatprep.subr.mxu0 0.0
        %2535 = vmatpush1.msra.mxu0 %v1408
        %2536 = vmatprep.subr.mxu0 0.0
        %2537 = vmatpush1.msra.mxu0 %v1409
        %2538 = vmatprep.subr.mxu0 0.0
        %2539 = vmatpush1.msra.mxu0 %v1410
        %2540 = vmatprep.subr.mxu0 0.0
        %2541 = vmatpush1.msra.mxu0 %v1411
        %2542 = vmatprep.subr.mxu0 0.0
        %2543 = vmatpush1.msra.mxu0 %v1412
        %2544 = vmatprep.subr.mxu0 0.0
        %2545 = vmatpush1.msra.mxu0 %v1413
        %2546 = vmatprep.subr.mxu0 0.0
        %2547 = vmatpush1.msra.mxu0 %v1414
        %2548 = vmatprep.subr.mxu0 0.0
        %2549 = vmatpush1.msra.mxu0 %v1415
        %2550 = vmatprep.subr.mxu0 0.0
        %2551 = vmatpush1.msra.mxu0 %v1416
        %2552 = vmatprep.subr.mxu0 0.0
        %2553 = vmatpush1.msra.mxu0 %v1417
        %2554 = vmatprep.subr.mxu0 0.0
        %2555 = vmatpush1.msra.mxu0 %v1418
        %2556 = vmatprep.subr.mxu0 0.0
        %2557 = vmatpush1.msra.mxu0 %v1419
        %2558 = vmatprep.subr.mxu0 0.0
        %2559 = vmatpush1.msra.mxu0 %v1420
        %2560 = vmatprep.subr.mxu0 0.0
        %2561 = vmatpush1.msra.mxu0 %v1421
        %2562 = vmatprep.subr.mxu0 0.0
        %2563 = vmatpush1.msra.mxu0 %v1422
        %2564 = vmatprep.subr.mxu0 0.0
        %2565 = vmatpush1.msra.mxu0 %v1423
        %2566 = vmatprep.subr.mxu0 0.0
        %2567 = vmatpush1.msra.mxu0 %v1424
        %2568 = vmatprep.subr.mxu0 0.0
        %2569 = vmatpush1.msra.mxu0 %v1425
        %2570 = vmatprep.subr.mxu0 0.0
        %2571 = vmatpush1.msra.mxu0 %v1426
        %2572 = vmatprep.subr.mxu0 0.0
        %2573 = vmatpush1.msra.mxu0 %v1427
        %2574 = vmatprep.subr.mxu0 0.0
        %2575 = vmatpush1.msra.mxu0 %v1428
        %2576 = vmatprep.subr.mxu0 0.0
        %2577 = vmatpush1.msra.mxu0 %v1429
        %2578 = vmatprep.mubr.f32.mxu0 %v1779
        %2579 = vmatmul.mubr.f32.gmra.mrb[0].mxu0 %v1777
        %v2580 = vpop.f32.mrb[0].mxu0
        %v2581 = vadd.f32 %v2511, %v2580
        %v2582 = vpop.f32.mrb[0].mxu0
        %2583 = vdwg.mxu0
        %2584 = vmatprep.subr.mxu0 0.0
        %2585 = vmatpush1.msra.mxu0 %v1430
        %2586 = vmatprep.subr.mxu0 0.0
        %2587 = vmatpush1.msra.mxu0 %v1431
        %2588 = vmatprep.subr.mxu0 0.0
        %2589 = vmatpush1.msra.mxu0 %v1432
        %2590 = vmatprep.subr.mxu0 0.0
        %2591 = vmatpush1.msra.mxu0 %v1433
        %2592 = vmatprep.subr.mxu0 0.0
        %2593 = vmatpush1.msra.mxu0 %v1434
        %2594 = vmatprep.subr.mxu0 0.0
        %2595 = vmatpush1.msra.mxu0 %v1435
        %2596 = vmatprep.subr.mxu0 0.0
        %2597 = vmatpush1.msra.mxu0 %v1436
        %2598 = vmatprep.subr.mxu0 0.0
        %2599 = vmatpush1.msra.mxu0 %v1437
        %2600 = vmatprep.subr.mxu0 0.0
        %2601 = vmatpush1.msra.mxu0 %v1438
        %2602 = vmatprep.subr.mxu0 0.0
        %2603 = vmatpush1.msra.mxu0 %v1439
        %2604 = vmatprep.subr.mxu0 0.0
        %2605 = vmatpush1.msra.mxu0 %v1440
        %2606 = vmatprep.subr.mxu0 0.0
        %2607 = vmatpush1.msra.mxu0 %v1441
        %2608 = vmatprep.subr.mxu0 0.0
        %2609 = vmatpush1.msra.mxu0 %v1442
        %2610 = vmatprep.subr.mxu0 0.0
        %2611 = vmatpush1.msra.mxu0 %v1443
        %2612 = vmatprep.subr.mxu0 0.0
        %2613 = vmatpush1.msra.mxu0 %v1444
        %2614 = vmatprep.subr.mxu0 0.0
        %2615 = vmatpush1.msra.mxu0 %v1445
        %2616 = vmatprep.subr.mxu0 0.0
        %2617 = vmatpush1.msra.mxu0 %v1446
        %2618 = vmatprep.subr.mxu0 0.0
        %2619 = vmatpush1.msra.mxu0 %v1447
        %2620 = vmatprep.subr.mxu0 0.0
        %2621 = vmatpush1.msra.mxu0 %v1448
        %2622 = vmatprep.subr.mxu0 0.0
        %2623 = vmatpush1.msra.mxu0 %v1449
        %2624 = vmatprep.subr.mxu0 0.0
        %2625 = vmatpush1.msra.mxu0 %v1450
        %2626 = vmatprep.subr.mxu0 0.0
        %2627 = vmatpush1.msra.mxu0 %v1451
        %2628 = vmatprep.subr.mxu0 0.0
        %2629 = vmatpush1.msra.mxu0 %v1452
        %2630 = vmatprep.subr.mxu0 0.0
        %2631 = vmatpush1.msra.mxu0 %v1453
        %2632 = vmatprep.subr.mxu0 0.0
        %2633 = vmatpush1.msra.mxu0 %v1454
        %2634 = vmatprep.subr.mxu0 0.0
        %2635 = vmatpush1.msra.mxu0 %v1455
        %2636 = vmatprep.subr.mxu0 0.0
        %2637 = vmatpush1.msra.mxu0 %v1456
        %2638 = vmatprep.subr.mxu0 0.0
        %2639 = vmatpush1.msra.mxu0 %v1457
        %2640 = vmatprep.subr.mxu0 0.0
        %2641 = vmatpush1.msra.mxu0 %v1458
        %2642 = vmatprep.subr.mxu0 0.0
        %2643 = vmatpush1.msra.mxu0 %v1459
        %2644 = vmatprep.subr.mxu0 0.0
        %2645 = vmatpush1.msra.mxu0 %v1460
        %2646 = vmatprep.subr.mxu0 0.0
        %2647 = vmatpush1.msra.mxu0 %v1461
        %2648 = vmatprep.mubr.f32.mxu0 %v1795
        %2649 = vmatmul.mubr.f32.gmra.mrb[0].mxu0 %v1787
        %v2650 = vpop.f32.mrb[0].mxu0
        %v2651 = vadd.f32 %v2581, %v2650
        %v2652 = vpop.f32.mrb[0].mxu0
        %2653 = vdwg.mxu0
        %2654 = vmatprep.subr.mxu0 0.0
        %2655 = vmatpush1.msra.mxu0 %v1462
        %2656 = vmatprep.subr.mxu0 0.0
        %2657 = vmatpush1.msra.mxu0 %v1463
        %2658 = vmatprep.subr.mxu0 0.0
        %2659 = vmatpush1.msra.mxu0 %v1464
        %2660 = vmatprep.subr.mxu0 0.0
        %2661 = vmatpush1.msra.mxu0 %v1465
        %2662 = vmatprep.subr.mxu0 0.0
        %2663 = vmatpush1.msra.mxu0 %v1466
        %2664 = vmatprep.subr.mxu0 0.0
        %2665 = vmatpush1.msra.mxu0 %v1467
        %2666 = vmatprep.subr.mxu0 0.0
        %2667 = vmatpush1.msra.mxu0 %v1468
        %2668 = vmatprep.subr.mxu0 0.0
        %2669 = vmatpush1.msra.mxu0 %v1469
        %2670 = vmatprep.subr.mxu0 0.0
        %2671 = vmatpush1.msra.mxu0 %v1470
        %2672 = vmatprep.subr.mxu0 0.0
        %2673 = vmatpush1.msra.mxu0 %v1471
        %2674 = vmatprep.subr.mxu0 0.0
        %2675 = vmatpush1.msra.mxu0 %v1472
        %2676 = vmatprep.subr.mxu0 0.0
        %2677 = vmatpush1.msra.mxu0 %v1473
        %2678 = vmatprep.subr.mxu0 0.0
        %2679 = vmatpush1.msra.mxu0 %v1474
        %2680 = vmatprep.subr.mxu0 0.0
        %2681 = vmatpush1.msra.mxu0 %v1475
        %2682 = vmatprep.subr.mxu0 0.0
        %2683 = vmatpush1.msra.mxu0 %v1476
        %2684 = vmatprep.subr.mxu0 0.0
        %2685 = vmatpush1.msra.mxu0 %v1477
        %2686 = vmatprep.subr.mxu0 0.0
        %2687 = vmatpush1.msra.mxu0 %v1478
        %2688 = vmatprep.subr.mxu0 0.0
        %2689 = vmatpush1.msra.mxu0 %v1479
        %2690 = vmatprep.subr.mxu0 0.0
        %2691 = vmatpush1.msra.mxu0 %v1480
        %2692 = vmatprep.subr.mxu0 0.0
        %2693 = vmatpush1.msra.mxu0 %v1481
        %2694 = vmatprep.subr.mxu0 0.0
        %2695 = vmatpush1.msra.mxu0 %v1482
        %2696 = vmatprep.subr.mxu0 0.0
        %2697 = vmatpush1.msra.mxu0 %v1483
        %2698 = vmatprep.subr.mxu0 0.0
        %2699 = vmatpush1.msra.mxu0 %v1484
        %2700 = vmatprep.subr.mxu0 0.0
        %2701 = vmatpush1.msra.mxu0 %v1485
        %2702 = vmatprep.subr.mxu0 0.0
        %2703 = vmatpush1.msra.mxu0 %v1486
        %2704 = vmatprep.subr.mxu0 0.0
        %2705 = vmatpush1.msra.mxu0 %v1487
        %2706 = vmatprep.subr.mxu0 0.0
        %2707 = vmatpush1.msra.mxu0 %v1488
        %2708 = vmatprep.subr.mxu0 0.0
        %2709 = vmatpush1.msra.mxu0 %v1489
        %2710 = vmatprep.subr.mxu0 0.0
        %2711 = vmatpush1.msra.mxu0 %v1490
        %2712 = vmatprep.subr.mxu0 0.0
        %2713 = vmatpush1.msra.mxu0 %v1491
        %2714 = vmatprep.subr.mxu0 0.0
        %2715 = vmatpush1.msra.mxu0 %v1492
        %2716 = vmatprep.subr.mxu0 0.0
        %2717 = vmatpush1.msra.mxu0 %v1493
        %2718 = vmatprep.mubr.f32.mxu0 %v1796
        %2719 = vmatmul.mubr.f32.gmra.mrb[0].mxu0 %v1794
        %v2720 = vpop.f32.mrb[0].mxu0
        %v2721 = vadd.f32 %v2651, %v2720
        %v2722 = vpop.f32.mrb[0].mxu0
        %2723 = vdwg.mxu0
        %2724 = vmatprep.subr.mxu0 0.0
        %2725 = vmatpush1.msra.mxu0 %v1494
        %2726 = vmatprep.subr.mxu0 0.0
        %2727 = vmatpush1.msra.mxu0 %v1495
        %2728 = vmatprep.subr.mxu0 0.0
        %2729 = vmatpush1.msra.mxu0 %v1496
        %2730 = vmatprep.subr.mxu0 0.0
        %2731 = vmatpush1.msra.mxu0 %v1497
        %2732 = vmatprep.subr.mxu0 0.0
        %2733 = vmatpush1.msra.mxu0 %v1498
        %2734 = vmatprep.subr.mxu0 0.0
        %2735 = vmatpush1.msra.mxu0 %v1499
        %2736 = vmatprep.subr.mxu0 0.0
        %2737 = vmatpush1.msra.mxu0 %v1500
        %2738 = vmatprep.subr.mxu0 0.0
        %2739 = vmatpush1.msra.mxu0 %v1501
        %2740 = vmatprep.subr.mxu0 0.0
        %2741 = vmatpush1.msra.mxu0 %v1502
        %2742 = vmatprep.subr.mxu0 0.0
        %2743 = vmatpush1.msra.mxu0 %v1503
        %2744 = vmatprep.subr.mxu0 0.0
        %2745 = vmatpush1.msra.mxu0 %v1504
        %2746 = vmatprep.subr.mxu0 0.0
        %2747 = vmatpush1.msra.mxu0 %v1505
        %2748 = vmatprep.subr.mxu0 0.0
        %2749 = vmatpush1.msra.mxu0 %v1506
        %2750 = vmatprep.subr.mxu0 0.0
        %2751 = vmatpush1.msra.mxu0 %v1507
        %2752 = vmatprep.subr.mxu0 0.0
        %2753 = vmatpush1.msra.mxu0 %v1508
        %2754 = vmatprep.subr.mxu0 0.0
        %2755 = vmatpush1.msra.mxu0 %v1509
        %2756 = vmatprep.subr.mxu0 0.0
        %2757 = vmatpush1.msra.mxu0 %v1510
        %2758 = vmatprep.subr.mxu0 0.0
        %2759 = vmatpush1.msra.mxu0 %v1511
        %2760 = vmatprep.subr.mxu0 0.0
        %2761 = vmatpush1.msra.mxu0 %v1512
        %2762 = vmatprep.subr.mxu0 0.0
        %2763 = vmatpush1.msra.mxu0 %v1513
        %2764 = vmatprep.subr.mxu0 0.0
        %2765 = vmatpush1.msra.mxu0 %v1514
        %2766 = vmatprep.subr.mxu0 0.0
        %2767 = vmatpush1.msra.mxu0 %v1515
        %2768 = vmatprep.subr.mxu0 0.0
        %2769 = vmatpush1.msra.mxu0 %v1516
        %2770 = vmatprep.subr.mxu0 0.0
        %2771 = vmatpush1.msra.mxu0 %v1517
        %2772 = vmatprep.subr.mxu0 0.0
        %2773 = vmatpush1.msra.mxu0 %v1518
        %2774 = vmatprep.subr.mxu0 0.0
        %2775 = vmatpush1.msra.mxu0 %v1519
        %2776 = vmatprep.subr.mxu0 0.0
        %2777 = vmatpush1.msra.mxu0 %v1520
        %2778 = vmatprep.subr.mxu0 0.0
        %2779 = vmatpush1.msra.mxu0 %v1521
        %2780 = vmatprep.subr.mxu0 0.0
        %2781 = vmatpush1.msra.mxu0 %v1522
        %2782 = vmatprep.subr.mxu0 0.0
        %2783 = vmatpush1.msra.mxu0 %v1523
        %2784 = vmatprep.subr.mxu0 0.0
        %2785 = vmatpush1.msra.mxu0 %v1524
        %2786 = vmatprep.subr.mxu0 0.0
        %2787 = vmatpush1.msra.mxu0 %v1525
        %2788 = vmatprep.mubr.f32.mxu0 %v1812
        %2789 = vmatmul.mubr.f32.gmra.mrb[0].mxu0 %v1804
        %v2790 = vpop.f32.mrb[0].mxu0
        %v2791 = vadd.f32 %v2721, %v2790
        %v2792 = vpop.f32.mrb[0].mxu0
        %2793 = vdwg.mxu0
        %2794 = vmatprep.subr.mxu0 0.0
        %2795 = vmatpush1.msra.mxu0 %v1526
        %2796 = vmatprep.subr.mxu0 0.0
        %2797 = vmatpush1.msra.mxu0 %v1527
        %2798 = vmatprep.subr.mxu0 0.0
        %2799 = vmatpush1.msra.mxu0 %v1528
        %2800 = vmatprep.subr.mxu0 0.0
        %2801 = vmatpush1.msra.mxu0 %v1529
        %2802 = vmatprep.subr.mxu0 0.0
        %2803 = vmatpush1.msra.mxu0 %v1530
        %2804 = vmatprep.subr.mxu0 0.0
        %2805 = vmatpush1.msra.mxu0 %v1531
        %2806 = vmatprep.subr.mxu0 0.0
        %2807 = vmatpush1.msra.mxu0 %v1532
        %2808 = vmatprep.subr.mxu0 0.0
        %2809 = vmatpush1.msra.mxu0 %v1533
        %2810 = vmatprep.subr.mxu0 0.0
        %2811 = vmatpush1.msra.mxu0 %v1534
        %2812 = vmatprep.subr.mxu0 0.0
        %2813 = vmatpush1.msra.mxu0 %v1535
        %2814 = vmatprep.subr.mxu0 0.0
        %2815 = vmatpush1.msra.mxu0 %v1536
        %2816 = vmatprep.subr.mxu0 0.0
        %2817 = vmatpush1.msra.mxu0 %v1537
        %2818 = vmatprep.subr.mxu0 0.0
        %2819 = vmatpush1.msra.mxu0 %v1538
        %2820 = vmatprep.subr.mxu0 0.0
        %2821 = vmatpush1.msra.mxu0 %v1539
        %2822 = vmatprep.subr.mxu0 0.0
        %2823 = vmatpush1.msra.mxu0 %v1540
        %2824 = vmatprep.subr.mxu0 0.0
        %2825 = vmatpush1.msra.mxu0 %v1541
        %2826 = vmatprep.subr.mxu0 0.0
        %2827 = vmatpush1.msra.mxu0 %v1542
        %2828 = vmatprep.subr.mxu0 0.0
        %2829 = vmatpush1.msra.mxu0 %v1543
        %2830 = vmatprep.subr.mxu0 0.0
        %2831 = vmatpush1.msra.mxu0 %v1544
        %2832 = vmatprep.subr.mxu0 0.0
        %2833 = vmatpush1.msra.mxu0 %v1545
        %2834 = vmatprep.subr.mxu0 0.0
        %2835 = vmatpush1.msra.mxu0 %v1546
        %2836 = vmatprep.subr.mxu0 0.0
        %2837 = vmatpush1.msra.mxu0 %v1547
        %2838 = vmatprep.subr.mxu0 0.0
        %2839 = vmatpush1.msra.mxu0 %v1548
        %2840 = vmatprep.subr.mxu0 0.0
        %2841 = vmatpush1.msra.mxu0 %v1549
        %2842 = vmatprep.subr.mxu0 0.0
        %2843 = vmatpush1.msra.mxu0 %v1550
        %2844 = vmatprep.subr.mxu0 0.0
        %2845 = vmatpush1.msra.mxu0 %v1551
        %2846 = vmatprep.subr.mxu0 0.0
        %2847 = vmatpush1.msra.mxu0 %v1552
        %2848 = vmatprep.subr.mxu0 0.0
        %2849 = vmatpush1.msra.mxu0 %v1553
        %2850 = vmatprep.subr.mxu0 0.0
        %2851 = vmatpush1.msra.mxu0 %v1554
        %2852 = vmatprep.subr.mxu0 0.0
        %2853 = vmatpush1.msra.mxu0 %v1555
        %2854 = vmatprep.subr.mxu0 0.0
        %2855 = vmatpush1.msra.mxu0 %v1556
        %2856 = vmatprep.subr.mxu0 0.0
        %2857 = vmatpush1.msra.mxu0 %v1557
        %2858 = vmatprep.mubr.f32.mxu0 %v1813
        %2859 = vmatmul.mubr.f32.gmra.mrb[0].mxu0 %v1811
        %v2860 = vpop.f32.mrb[0].mxu0
        %v2861 = vadd.f32 %v2791, %v2860
        %v2862 = vpop.f32.mrb[0].mxu0
        %2863 = vdwg.mxu0
        %2864 = vmatprep.subr.mxu0 0.0
        %2865 = vmatpush1.msra.mxu0 %v1558
        %2866 = vmatprep.subr.mxu0 0.0
        %2867 = vmatpush1.msra.mxu0 %v1559
        %2868 = vmatprep.subr.mxu0 0.0
        %2869 = vmatpush1.msra.mxu0 %v1560
        %2870 = vmatprep.subr.mxu0 0.0
        %2871 = vmatpush1.msra.mxu0 %v1561
        %2872 = vmatprep.subr.mxu0 0.0
        %2873 = vmatpush1.msra.mxu0 %v1562
        %2874 = vmatprep.subr.mxu0 0.0
        %2875 = vmatpush1.msra.mxu0 %v1563
        %2876 = vmatprep.subr.mxu0 0.0
        %2877 = vmatpush1.msra.mxu0 %v1564
        %2878 = vmatprep.subr.mxu0 0.0
        %2879 = vmatpush1.msra.mxu0 %v1565
        %2880 = vmatprep.subr.mxu0 0.0
        %2881 = vmatpush1.msra.mxu0 %v1566
        %2882 = vmatprep.subr.mxu0 0.0
        %2883 = vmatpush1.msra.mxu0 %v1567
        %2884 = vmatprep.subr.mxu0 0.0
        %2885 = vmatpush1.msra.mxu0 %v1568
        %2886 = vmatprep.subr.mxu0 0.0
        %2887 = vmatpush1.msra.mxu0 %v1569
        %2888 = vmatprep.subr.mxu0 0.0
        %2889 = vmatpush1.msra.mxu0 %v1570
        %2890 = vmatprep.subr.mxu0 0.0
        %2891 = vmatpush1.msra.mxu0 %v1571
        %2892 = vmatprep.subr.mxu0 0.0
        %2893 = vmatpush1.msra.mxu0 %v1572
        %2894 = vmatprep.subr.mxu0 0.0
        %2895 = vmatpush1.msra.mxu0 %v1573
        %2896 = vmatprep.subr.mxu0 0.0
        %2897 = vmatpush1.msra.mxu0 %v1574
        %2898 = vmatprep.subr.mxu0 0.0
        %2899 = vmatpush1.msra.mxu0 %v1575
        %2900 = vmatprep.subr.mxu0 0.0
        %2901 = vmatpush1.msra.mxu0 %v1576
        %2902 = vmatprep.subr.mxu0 0.0
        %2903 = vmatpush1.msra.mxu0 %v1577
        %2904 = vmatprep.subr.mxu0 0.0
        %2905 = vmatpush1.msra.mxu0 %v1578
        %2906 = vmatprep.subr.mxu0 0.0
        %2907 = vmatpush1.msra.mxu0 %v1579
        %2908 = vmatprep.subr.mxu0 0.0
        %2909 = vmatpush1.msra.mxu0 %v1580
        %2910 = vmatprep.subr.mxu0 0.0
        %2911 = vmatpush1.msra.mxu0 %v1581
        %2912 = vmatprep.subr.mxu0 0.0
        %2913 = vmatpush1.msra.mxu0 %v1582
        %2914 = vmatprep.subr.mxu0 0.0
        %2915 = vmatpush1.msra.mxu0 %v1583
        %2916 = vmatprep.subr.mxu0 0.0
        %2917 = vmatpush1.msra.mxu0 %v1584
        %2918 = vmatprep.subr.mxu0 0.0
        %2919 = vmatpush1.msra.mxu0 %v1585
        %2920 = vmatprep.subr.mxu0 0.0
        %2921 = vmatpush1.msra.mxu0 %v1586
        %2922 = vmatprep.subr.mxu0 0.0
        %2923 = vmatpush1.msra.mxu0 %v1587
        %2924 = vmatprep.subr.mxu0 0.0
        %2925 = vmatpush1.msra.mxu0 %v1588
        %2926 = vmatprep.subr.mxu0 0.0
        %2927 = vmatpush1.msra.mxu0 %v1589
        %2928 = vmatprep.mubr.f32.mxu0 %v1829
        %2929 = vmatmul.mubr.f32.gmra.mrb[0].mxu0 %v1821
        %v2930 = vpop.f32.mrb[0].mxu0
        %v2931 = vadd.f32 %v2861, %v2930
        %v2932 = vpop.f32.mrb[0].mxu0
        %2933 = vdwg.mxu0
        %2934 = vmatprep.subr.mxu0 0.0
        %2935 = vmatpush1.msra.mxu0 %v1590
        %2936 = vmatprep.subr.mxu0 0.0
        %2937 = vmatpush1.msra.mxu0 %v1591
        %2938 = vmatprep.subr.mxu0 0.0
        %2939 = vmatpush1.msra.mxu0 %v1592
        %2940 = vmatprep.subr.mxu0 0.0
        %2941 = vmatpush1.msra.mxu0 %v1593
        %2942 = vmatprep.subr.mxu0 0.0
        %2943 = vmatpush1.msra.mxu0 %v1594
        %2944 = vmatprep.subr.mxu0 0.0
        %2945 = vmatpush1.msra.mxu0 %v1595
        %2946 = vmatprep.subr.mxu0 0.0
        %2947 = vmatpush1.msra.mxu0 %v1596
        %2948 = vmatprep.subr.mxu0 0.0
        %2949 = vmatpush1.msra.mxu0 %v1597
        %2950 = vmatprep.subr.mxu0 0.0
        %2951 = vmatpush1.msra.mxu0 %v1598
        %2952 = vmatprep.subr.mxu0 0.0
        %2953 = vmatpush1.msra.mxu0 %v1599
        %2954 = vmatprep.subr.mxu0 0.0
        %2955 = vmatpush1.msra.mxu0 %v1600
        %2956 = vmatprep.subr.mxu0 0.0
        %2957 = vmatpush1.msra.mxu0 %v1601
        %2958 = vmatprep.subr.mxu0 0.0
        %2959 = vmatpush1.msra.mxu0 %v1602
        %2960 = vmatprep.subr.mxu0 0.0
        %2961 = vmatpush1.msra.mxu0 %v1603
        %2962 = vmatprep.subr.mxu0 0.0
        %2963 = vmatpush1.msra.mxu0 %v1604
        %2964 = vmatprep.subr.mxu0 0.0
        %2965 = vmatpush1.msra.mxu0 %v1605
        %2966 = vmatprep.subr.mxu0 0.0
        %2967 = vmatpush1.msra.mxu0 %v1606
        %2968 = vmatprep.subr.mxu0 0.0
        %2969 = vmatpush1.msra.mxu0 %v1607
        %2970 = vmatprep.subr.mxu0 0.0
        %2971 = vmatpush1.msra.mxu0 %v1608
        %2972 = vmatprep.subr.mxu0 0.0
        %2973 = vmatpush1.msra.mxu0 %v1609
        %2974 = vmatprep.subr.mxu0 0.0
        %2975 = vmatpush1.msra.mxu0 %v1610
        %2976 = vmatprep.subr.mxu0 0.0
        %2977 = vmatpush1.msra.mxu0 %v1611
        %2978 = vmatprep.subr.mxu0 0.0
        %2979 = vmatpush1.msra.mxu0 %v1612
        %2980 = vmatprep.subr.mxu0 0.0
        %2981 = vmatpush1.msra.mxu0 %v1613
        %2982 = vmatprep.subr.mxu0 0.0
        %2983 = vmatpush1.msra.mxu0 %v1614
        %2984 = vmatprep.subr.mxu0 0.0
        %2985 = vmatpush1.msra.mxu0 %v1615
        %2986 = vmatprep.subr.mxu0 0.0
        %2987 = vmatpush1.msra.mxu0 %v1616
        %2988 = vmatprep.subr.mxu0 0.0
        %2989 = vmatpush1.msra.mxu0 %v1617
        %2990 = vmatprep.subr.mxu0 0.0
        %2991 = vmatpush1.msra.mxu0 %v1618
        %2992 = vmatprep.subr.mxu0 0.0
        %2993 = vmatpush1.msra.mxu0 %v1619
        %2994 = vmatprep.subr.mxu0 0.0
        %2995 = vmatpush1.msra.mxu0 %v1620
        %2996 = vmatprep.subr.mxu0 0.0
        %2997 = vmatpush1.msra.mxu0 %v1621
        %2998 = vmatprep.mubr.f32.mxu0 %v1830
        %2999 = vmatmul.mubr.f32.gmra.mrb[0].mxu0 %v1828
        %v3000 = vpop.f32.mrb[0].mxu0
        %v3001 = vadd.f32 %v2931, %v3000
        %v3002 = vpop.f32.mrb[0].mxu0
        %3003 = vdwg.mxu0
        %3004 = vmatprep.subr.mxu0 0.0
        %3005 = vmatpush1.msra.mxu0 %v1622
        %3006 = vmatprep.subr.mxu0 0.0
        %3007 = vmatpush1.msra.mxu0 %v1623
        %3008 = vmatprep.subr.mxu0 0.0
        %3009 = vmatpush1.msra.mxu0 %v1624
        %3010 = vmatprep.subr.mxu0 0.0
        %3011 = vmatpush1.msra.mxu0 %v1625
        %3012 = vmatprep.subr.mxu0 0.0
        %3013 = vmatpush1.msra.mxu0 %v1626
        %3014 = vmatprep.subr.mxu0 0.0
        %3015 = vmatpush1.msra.mxu0 %v1627
        %3016 = vmatprep.subr.mxu0 0.0
        %3017 = vmatpush1.msra.mxu0 %v1628
        %3018 = vmatprep.subr.mxu0 0.0
        %3019 = vmatpush1.msra.mxu0 %v1629
        %3020 = vmatprep.subr.mxu0 0.0
        %3021 = vmatpush1.msra.mxu0 %v1630
        %3022 = vmatprep.subr.mxu0 0.0
        %3023 = vmatpush1.msra.mxu0 %v1631
        %3024 = vmatprep.subr.mxu0 0.0
        %3025 = vmatpush1.msra.mxu0 %v1632
        %3026 = vmatprep.subr.mxu0 0.0
        %3027 = vmatpush1.msra.mxu0 %v1633
        %3028 = vmatprep.subr.mxu0 0.0
        %3029 = vmatpush1.msra.mxu0 %v1634
        %3030 = vmatprep.subr.mxu0 0.0
        %3031 = vmatpush1.msra.mxu0 %v1635
        %3032 = vmatprep.subr.mxu0 0.0
        %3033 = vmatpush1.msra.mxu0 %v1636
        %3034 = vmatprep.subr.mxu0 0.0
        %3035 = vmatpush1.msra.mxu0 %v1637
        %3036 = vmatprep.subr.mxu0 0.0
        %3037 = vmatpush1.msra.mxu0 %v1638
        %3038 = vmatprep.subr.mxu0 0.0
        %3039 = vmatpush1.msra.mxu0 %v1639
        %3040 = vmatprep.subr.mxu0 0.0
        %3041 = vmatpush1.msra.mxu0 %v1640
        %3042 = vmatprep.subr.mxu0 0.0
        %3043 = vmatpush1.msra.mxu0 %v1641
        %3044 = vmatprep.subr.mxu0 0.0
        %3045 = vmatpush1.msra.mxu0 %v1642
        %3046 = vmatprep.subr.mxu0 0.0
        %3047 = vmatpush1.msra.mxu0 %v1643
        %3048 = vmatprep.subr.mxu0 0.0
        %3049 = vmatpush1.msra.mxu0 %v1644
        %3050 = vmatprep.subr.mxu0 0.0
        %3051 = vmatpush1.msra.mxu0 %v1645
        %3052 = vmatprep.subr.mxu0 0.0
        %3053 = vmatpush1.msra.mxu0 %v1646
        %3054 = vmatprep.subr.mxu0 0.0
        %3055 = vmatpush1.msra.mxu0 %v1647
        %3056 = vmatprep.subr.mxu0 0.0
        %3057 = vmatpush1.msra.mxu0 %v1648
        %3058 = vmatprep.subr.mxu0 0.0
        %3059 = vmatpush1.msra.mxu0 %v1649
        %3060 = vmatprep.subr.mxu0 0.0
        %3061 = vmatpush1.msra.mxu0 %v1650
        %3062 = vmatprep.subr.mxu0 0.0
        %3063 = vmatpush1.msra.mxu0 %v1651
        %3064 = vmatprep.subr.mxu0 0.0
        %3065 = vmatpush1.msra.mxu0 %v1652
        %3066 = vmatprep.subr.mxu0 0.0
        %3067 = vmatpush1.msra.mxu0 %v1653
        %3068 = vmatprep.mubr.f32.mxu0 %v1846
        %3069 = vmatmul.mubr.f32.gmra.mrb[0].mxu0 %v1838
        %v3070 = vpop.f32.mrb[0].mxu0
        %v3071 = vadd.f32 %v3001, %v3070
        %v3072 = vpop.f32.mrb[0].mxu0
        %3073 = vdwg.mxu0
        %3074 = vmatprep.subr.mxu0 0.0
        %3075 = vmatpush1.msra.mxu0 %v1654
        %3076 = vmatprep.subr.mxu0 0.0
        %3077 = vmatpush1.msra.mxu0 %v1655
        %3078 = vmatprep.subr.mxu0 0.0
        %3079 = vmatpush1.msra.mxu0 %v1656
        %3080 = vmatprep.subr.mxu0 0.0
        %3081 = vmatpush1.msra.mxu0 %v1657
        %3082 = vmatprep.subr.mxu0 0.0
        %3083 = vmatpush1.msra.mxu0 %v1658
        %3084 = vmatprep.subr.mxu0 0.0
        %3085 = vmatpush1.msra.mxu0 %v1659
        %3086 = vmatprep.subr.mxu0 0.0
        %3087 = vmatpush1.msra.mxu0 %v1660
        %3088 = vmatprep.subr.mxu0 0.0
        %3089 = vmatpush1.msra.mxu0 %v1661
        %3090 = vmatprep.subr.mxu0 0.0
        %3091 = vmatpush1.msra.mxu0 %v1662
        %3092 = vmatprep.subr.mxu0 0.0
        %3093 = vmatpush1.msra.mxu0 %v1663
        %3094 = vmatprep.subr.mxu0 0.0
        %3095 = vmatpush1.msra.mxu0 %v1664
        %3096 = vmatprep.subr.mxu0 0.0
        %3097 = vmatpush1.msra.mxu0 %v1665
        %3098 = vmatprep.subr.mxu0 0.0
        %3099 = vmatpush1.msra.mxu0 %v1666
        %3100 = vmatprep.subr.mxu0 0.0
        %3101 = vmatpush1.msra.mxu0 %v1667
        %3102 = vmatprep.subr.mxu0 0.0
        %3103 = vmatpush1.msra.mxu0 %v1668
        %3104 = vmatprep.subr.mxu0 0.0
        %3105 = vmatpush1.msra.mxu0 %v1669
        %3106 = vmatprep.subr.mxu0 0.0
        %3107 = vmatpush1.msra.mxu0 %v1670
        %3108 = vmatprep.subr.mxu0 0.0
        %3109 = vmatpush1.msra.mxu0 %v1671
        %3110 = vmatprep.subr.mxu0 0.0
        %3111 = vmatpush1.msra.mxu0 %v1672
        %3112 = vmatprep.subr.mxu0 0.0
        %3113 = vmatpush1.msra.mxu0 %v1673
        %3114 = vmatprep.subr.mxu0 0.0
        %3115 = vmatpush1.msra.mxu0 %v1674
        %3116 = vmatprep.subr.mxu0 0.0
        %3117 = vmatpush1.msra.mxu0 %v1675
        %3118 = vmatprep.subr.mxu0 0.0
        %3119 = vmatpush1.msra.mxu0 %v1676
        %3120 = vmatprep.subr.mxu0 0.0
        %3121 = vmatpush1.msra.mxu0 %v1677
        %3122 = vmatprep.subr.mxu0 0.0
        %3123 = vmatpush1.msra.mxu0 %v1678
        %3124 = vmatprep.subr.mxu0 0.0
        %3125 = vmatpush1.msra.mxu0 %v1679
        %3126 = vmatprep.subr.mxu0 0.0
        %3127 = vmatpush1.msra.mxu0 %v1680
        %3128 = vmatprep.subr.mxu0 0.0
        %3129 = vmatpush1.msra.mxu0 %v1681
        %3130 = vmatprep.subr.mxu0 0.0
        %3131 = vmatpush1.msra.mxu0 %v1682
        %3132 = vmatprep.subr.mxu0 0.0
        %3133 = vmatpush1.msra.mxu0 %v1683
        %3134 = vmatprep.subr.mxu0 0.0
        %3135 = vmatpush1.msra.mxu0 %v1684
        %3136 = vmatprep.subr.mxu0 0.0
        %3137 = vmatpush1.msra.mxu0 %v1685
        %3138 = vmatprep.mubr.f32.mxu0 %v1847
        %3139 = vmatmul.mubr.f32.gmra.mrb[0].mxu0 %v1845
        %v3140 = vpop.f32.mrb[0].mxu0
        %v3141 = vadd.f32 %v3071, %v3140
        %v3142 = vpop.f32.mrb[0].mxu0
        %3143 = vdwg.mxu0
        %v3144 = vadd.f32 %v524, %v3141
        %3145 = vst [vmem:[#allocation2] sm:$0x3] %v3144
        %p3146 = scmp.eq.s32.totalorder %s32, 1
        // Predicated region
        $region105: #{tpu_custom_call.1} parent=59 // pred_check
          %p3147 = pneg %p3146
        $region106: #{tpu_custom_call.1} parent=59 // pred_check_branch
          %3149 = sbr.rel (%p3147) target = $region108
        $region107: #{tpu_custom_call.1} parent=59 // pred_region
          %v3150 = vld [vmem:[#allocation2] sm:$0x3]
          %s3151 = sld [smem:[#allocation3]]
          %v3152 = vstv %s3151
          %v3153 = vmul.f32 %v3152, %v3150
          %s3154 = sld [smem:[#allocation3 + $0x1]]
          %v3155 = vstv %s3154
          %v3156 = vmul.f32 %v3155, %v3150
          %3158 = vrot.lane.b32.xlu0 %v3156, 96
          %v3159 = vpop.permute.xlu0 %3158
          %v3161 = vadd.f32 %v3153, %v3159
          %s3162 = sld [smem:[#allocation3 + $0x2]]
          %v3163 = vstv %s3162
          %v3164 = vmul.f32 %v3163, %v3150
          %3166 = vrot.lane.b32.xlu0 %v3164, 64
          %v3167 = vpop.permute.xlu0 %3166
          %v3169 = vadd.f32 %v3161, %v3167
          %s3170 = sld [smem:[#allocation3 + $0x3]]
          %v3171 = vstv %s3170
          %v3172 = vmul.f32 %v3171, %v3150
          %3174 = vrot.lane.b32.xlu0 %v3172, 32
          %v3175 = vpop.permute.xlu0 %3174
          %v3177 = vadd.f32 %v3169, %v3175
          %v3178 = vld [vmem:[#allocation10] sm:$0x1]
          %v3179 = vmul.f32 %v3152, %v3178
          %s3180 = scalar_lea.vmem [#allocation10], 1
          %v3181 = vld [vmem:[%s3180] sm:$0x1]
          %v3182 = vmul.f32 %v3155, %v3181
          %v3183 = vadd.f32 %v3179, %v3182
          %s3184 = scalar_lea.vmem [#allocation10], 2
          %v3185 = vld [vmem:[%s3184] sm:$0x1]
          %v3186 = vmul.f32 %v3163, %v3185
          %v3187 = vadd.f32 %v3183, %v3186
          %s3188 = scalar_lea.vmem [#allocation10], 3
          %v3189 = vld [vmem:[%s3188] sm:$0x1]
          %v3190 = vmul.f32 %v3171, %v3189
          %v3191 = vadd.f32 %v3187, %v3190
          %v3193 = vlaneseq
          %v3194 = vshrl.u32 %v3193, 7
          %v3195 = vsub.s32 0, %v3194
          %v3196 = vrot.slane %v3191, %v3195
          %v3198 = vadd.f32 %v3177, %v3196
          %v3199 = vmax.f32 %v3198, 0.0
          %v3200 = vld [vmem:[#allocation11] sm:$0xf]
          %v3201 = vld [vmem:[#allocation11 + $0x4] sm:$0xf]
          %v3202 = vld [vmem:[#allocation11 + $0x8] sm:$0xf]
          %v3203 = vld [vmem:[#allocation11 + $0xc] sm:$0xf]
          %v3204 = vld [vmem:[#allocation11 + $0x10] sm:$0xf]
          %v3205 = vld [vmem:[#allocation11 + $0x14] sm:$0xf]
          %v3206 = vld [vmem:[#allocation11 + $0x18] sm:$0xf]
          %v3207 = vld [vmem:[#allocation11 + $0x1c] sm:$0xf]
          %v3208 = vld [vmem:[#allocation11 + $0x20] sm:$0xf]
          %v3209 = vld [vmem:[#allocation11 + $0x24] sm:$0xf]
          %v3210 = vld [vmem:[#allocation11 + $0x28] sm:$0xf]
          %v3211 = vld [vmem:[#allocation11 + $0x2c] sm:$0xf]
          %v3212 = vld [vmem:[#allocation11 + $0x30] sm:$0xf]
          %v3213 = vld [vmem:[#allocation11 + $0x34] sm:$0xf]
          %v3214 = vld [vmem:[#allocation11 + $0x38] sm:$0xf]
          %v3215 = vld [vmem:[#allocation11 + $0x3c] sm:$0xf]
          %v3216 = vld [vmem:[#allocation13] sm:$0x1]
          %v3217 = vld [vmem:[#allocation13 + $0x1] sm:$0x1]
          %v3218 = vld [vmem:[#allocation13 + $0x2] sm:$0x1]
          %v3219 = vld [vmem:[#allocation13 + $0x3] sm:$0x1]
          %v3220 = vunpack.c.l.bf16 %v3200
          %v3221 = vunpack.c.l.bf16 %v3201
          %v3222 = vunpack.c.l.bf16 %v3202
          %v3223 = vunpack.c.l.bf16 %v3203
          %vm3224 = vcmask 261120
          %v3226 = vsel %vm3224, %v3199, 0
          %3228 = vmatprep.subr.mxu0 0.0
          %3229 = vmatpush1.msra.mxu0 %v3220
          %3230 = vmatprep.subr.mxu0 0.0
          %3231 = vmatpush1.msra.mxu0 %v3221
          %3232 = vmatprep.subr.mxu0 0.0
          %3233 = vmatpush1.msra.mxu0 %v3222
          %3234 = vmatprep.subr.mxu0 0.0
          %3235 = vmatpush1.msra.mxu0 %v3223
          %3236 = vmatprep.subr.mxu0 0.0
          %3237 = vmatpush1.msra.mxu0 0.0
          %3238 = vmatprep.subr.mxu0 0.0
          %3239 = vmatpush1.msra.mxu0 0.0
          %3240 = vmatprep.subr.mxu0 0.0
          %3241 = vmatpush1.msra.mxu0 0.0
          %3242 = vmatprep.subr.mxu0 0.0
          %3243 = vmatpush1.msra.mxu0 0.0
          %3244 = vmatprep.subr.mxu0 0.0
          %3245 = vmatpush1.msra.mxu0 0.0
          %3246 = vmatprep.subr.mxu0 0.0
          %3247 = vmatpush1.msra.mxu0 0.0
          %3248 = vmatprep.subr.mxu0 0.0
          %3249 = vmatpush1.msra.mxu0 0.0
          %3250 = vmatprep.subr.mxu0 0.0
          %3251 = vmatpush1.msra.mxu0 0.0
          %3252 = vmatprep.subr.mxu0 0.0
          %3253 = vmatpush1.msra.mxu0 0.0
          %3254 = vmatprep.subr.mxu0 0.0
          %3255 = vmatpush1.msra.mxu0 0.0
          %3256 = vmatprep.subr.mxu0 0.0
          %3257 = vmatpush1.msra.mxu0 0.0
          %3258 = vmatprep.subr.mxu0 0.0
          %3259 = vmatpush1.msra.mxu0 0.0
          %3260 = vmatprep.subr.mxu0 0.0
          %3261 = vmatpush1.msra.mxu0 0.0
          %3262 = vmatprep.subr.mxu0 0.0
          %3263 = vmatpush1.msra.mxu0 0.0
          %3264 = vmatprep.subr.mxu0 0.0
          %3265 = vmatpush1.msra.mxu0 0.0
          %3266 = vmatprep.subr.mxu0 0.0
          %3267 = vmatpush1.msra.mxu0 0.0
          %3268 = vmatprep.subr.mxu0 0.0
          %3269 = vmatpush1.msra.mxu0 0.0
          %3270 = vmatprep.subr.mxu0 0.0
          %3271 = vmatpush1.msra.mxu0 0.0
          %3272 = vmatprep.subr.mxu0 0.0
          %3273 = vmatpush1.msra.mxu0 0.0
          %3274 = vmatprep.subr.mxu0 0.0
          %3275 = vmatpush1.msra.mxu0 0.0
          %3276 = vmatprep.subr.mxu0 0.0
          %3277 = vmatpush1.msra.mxu0 0.0
          %3278 = vmatprep.subr.mxu0 0.0
          %3279 = vmatpush1.msra.mxu0 0.0
          %3280 = vmatprep.subr.mxu0 0.0
          %3281 = vmatpush1.msra.mxu0 0.0
          %3282 = vmatprep.subr.mxu0 0.0
          %3283 = vmatpush1.msra.mxu0 0.0
          %3284 = vmatprep.subr.mxu0 0.0
          %3285 = vmatpush1.msra.mxu0 0.0
          %3286 = vmatprep.subr.mxu0 0.0
          %3287 = vmatpush1.msra.mxu0 0.0
          %3288 = vmatprep.subr.mxu0 0.0
          %3289 = vmatpush1.msra.mxu0 0.0
          %3290 = vmatprep.subr.mxu0 0.0
          %3291 = vmatpush1.msra.mxu0 0.0
          %3292 = vmatprep.mubr.f32.mxu0 0.0
          %3293 = vmatmul.mubr.f32.gmra.mrb[0].mxu0 %v3226
          %v3294 = vpop.f32.mrb[0].mxu0
          %v3295 = vadd.f32 0.0, %v3294
          %v3296 = vpop.f32.mrb[0].mxu0
          %3297 = vdwg.mxu0
          %v3298 = vmul.f32 %v3152, %v3295
          %v3299 = vunpack.c.l.bf16 %v3204
          %v3300 = vunpack.c.l.bf16 %v3205
          %v3301 = vunpack.c.l.bf16 %v3206
          %v3302 = vunpack.c.l.bf16 %v3207
          %3303 = vmatprep.subr.mxu0 0.0
          %3304 = vmatpush1.msra.mxu0 %v3299
          %3305 = vmatprep.subr.mxu0 0.0
          %3306 = vmatpush1.msra.mxu0 %v3300
          %3307 = vmatprep.subr.mxu0 0.0
          %3308 = vmatpush1.msra.mxu0 %v3301
          %3309 = vmatprep.subr.mxu0 0.0
          %3310 = vmatpush1.msra.mxu0 %v3302
          %3311 = vmatprep.subr.mxu0 0.0
          %3312 = vmatpush1.msra.mxu0 0.0
          %3313 = vmatprep.subr.mxu0 0.0
          %3314 = vmatpush1.msra.mxu0 0.0
          %3315 = vmatprep.subr.mxu0 0.0
          %3316 = vmatpush1.msra.mxu0 0.0
          %3317 = vmatprep.subr.mxu0 0.0
          %3318 = vmatpush1.msra.mxu0 0.0
          %3319 = vmatprep.subr.mxu0 0.0
          %3320 = vmatpush1.msra.mxu0 0.0
          %3321 = vmatprep.subr.mxu0 0.0
          %3322 = vmatpush1.msra.mxu0 0.0
          %3323 = vmatprep.subr.mxu0 0.0
          %3324 = vmatpush1.msra.mxu0 0.0
          %3325 = vmatprep.subr.mxu0 0.0
          %3326 = vmatpush1.msra.mxu0 0.0
          %3327 = vmatprep.subr.mxu0 0.0
          %3328 = vmatpush1.msra.mxu0 0.0
          %3329 = vmatprep.subr.mxu0 0.0
          %3330 = vmatpush1.msra.mxu0 0.0
          %3331 = vmatprep.subr.mxu0 0.0
          %3332 = vmatpush1.msra.mxu0 0.0
          %3333 = vmatprep.subr.mxu0 0.0
          %3334 = vmatpush1.msra.mxu0 0.0
          %3335 = vmatprep.subr.mxu0 0.0
          %3336 = vmatpush1.msra.mxu0 0.0
          %3337 = vmatprep.subr.mxu0 0.0
          %3338 = vmatpush1.msra.mxu0 0.0
          %3339 = vmatprep.subr.mxu0 0.0
          %3340 = vmatpush1.msra.mxu0 0.0
          %3341 = vmatprep.subr.mxu0 0.0
          %3342 = vmatpush1.msra.mxu0 0.0
          %3343 = vmatprep.subr.mxu0 0.0
          %3344 = vmatpush1.msra.mxu0 0.0
          %3345 = vmatprep.subr.mxu0 0.0
          %3346 = vmatpush1.msra.mxu0 0.0
          %3347 = vmatprep.subr.mxu0 0.0
          %3348 = vmatpush1.msra.mxu0 0.0
          %3349 = vmatprep.subr.mxu0 0.0
          %3350 = vmatpush1.msra.mxu0 0.0
          %3351 = vmatprep.subr.mxu0 0.0
          %3352 = vmatpush1.msra.mxu0 0.0
          %3353 = vmatprep.subr.mxu0 0.0
          %3354 = vmatpush1.msra.mxu0 0.0
          %3355 = vmatprep.subr.mxu0 0.0
          %3356 = vmatpush1.msra.mxu0 0.0
          %3357 = vmatprep.subr.mxu0 0.0
          %3358 = vmatpush1.msra.mxu0 0.0
          %3359 = vmatprep.subr.mxu0 0.0
          %3360 = vmatpush1.msra.mxu0 0.0
          %3361 = vmatprep.subr.mxu0 0.0
          %3362 = vmatpush1.msra.mxu0 0.0
          %3363 = vmatprep.subr.mxu0 0.0
          %3364 = vmatpush1.msra.mxu0 0.0
          %3365 = vmatprep.subr.mxu0 0.0
          %3366 = vmatpush1.msra.mxu0 0.0
          %3367 = vmatprep.mubr.f32.mxu0 0.0
          %3368 = vmatmul.mubr.f32.gmra.mrb[0].mxu0 %v3226
          %v3369 = vpop.f32.mrb[0].mxu0
          %v3370 = vadd.f32 0.0, %v3369
          %v3371 = vpop.f32.mrb[0].mxu0
          %3372 = vdwg.mxu0
          %v3373 = vmul.f32 %v3155, %v3370
          %v3374 = vadd.f32 %v3298, %v3373
          %v3375 = vunpack.c.l.bf16 %v3208
          %v3376 = vunpack.c.l.bf16 %v3209
          %v3377 = vunpack.c.l.bf16 %v3210
          %v3378 = vunpack.c.l.bf16 %v3211
          %3379 = vmatprep.subr.mxu0 0.0
          %3380 = vmatpush1.msra.mxu0 %v3375
          %3381 = vmatprep.subr.mxu0 0.0
          %3382 = vmatpush1.msra.mxu0 %v3376
          %3383 = vmatprep.subr.mxu0 0.0
          %3384 = vmatpush1.msra.mxu0 %v3377
          %3385 = vmatprep.subr.mxu0 0.0
          %3386 = vmatpush1.msra.mxu0 %v3378
          %3387 = vmatprep.subr.mxu0 0.0
          %3388 = vmatpush1.msra.mxu0 0.0
          %3389 = vmatprep.subr.mxu0 0.0
          %3390 = vmatpush1.msra.mxu0 0.0
          %3391 = vmatprep.subr.mxu0 0.0
          %3392 = vmatpush1.msra.mxu0 0.0
          %3393 = vmatprep.subr.mxu0 0.0
          %3394 = vmatpush1.msra.mxu0 0.0
          %3395 = vmatprep.subr.mxu0 0.0
          %3396 = vmatpush1.msra.mxu0 0.0
          %3397 = vmatprep.subr.mxu0 0.0
          %3398 = vmatpush1.msra.mxu0 0.0
          %3399 = vmatprep.subr.mxu0 0.0
          %3400 = vmatpush1.msra.mxu0 0.0
          %3401 = vmatprep.subr.mxu0 0.0
          %3402 = vmatpush1.msra.mxu0 0.0
          %3403 = vmatprep.subr.mxu0 0.0
          %3404 = vmatpush1.msra.mxu0 0.0
          %3405 = vmatprep.subr.mxu0 0.0
          %3406 = vmatpush1.msra.mxu0 0.0
          %3407 = vmatprep.subr.mxu0 0.0
          %3408 = vmatpush1.msra.mxu0 0.0
          %3409 = vmatprep.subr.mxu0 0.0
          %3410 = vmatpush1.msra.mxu0 0.0
          %3411 = vmatprep.subr.mxu0 0.0
          %3412 = vmatpush1.msra.mxu0 0.0
          %3413 = vmatprep.subr.mxu0 0.0
          %3414 = vmatpush1.msra.mxu0 0.0
          %3415 = vmatprep.subr.mxu0 0.0
          %3416 = vmatpush1.msra.mxu0 0.0
          %3417 = vmatprep.subr.mxu0 0.0
          %3418 = vmatpush1.msra.mxu0 0.0
          %3419 = vmatprep.subr.mxu0 0.0
          %3420 = vmatpush1.msra.mxu0 0.0
          %3421 = vmatprep.subr.mxu0 0.0
          %3422 = vmatpush1.msra.mxu0 0.0
          %3423 = vmatprep.subr.mxu0 0.0
          %3424 = vmatpush1.msra.mxu0 0.0
          %3425 = vmatprep.subr.mxu0 0.0
          %3426 = vmatpush1.msra.mxu0 0.0
          %3427 = vmatprep.subr.mxu0 0.0
          %3428 = vmatpush1.msra.mxu0 0.0
          %3429 = vmatprep.subr.mxu0 0.0
          %3430 = vmatpush1.msra.mxu0 0.0
          %3431 = vmatprep.subr.mxu0 0.0
          %3432 = vmatpush1.msra.mxu0 0.0
          %3433 = vmatprep.subr.mxu0 0.0
          %3434 = vmatpush1.msra.mxu0 0.0
          %3435 = vmatprep.subr.mxu0 0.0
          %3436 = vmatpush1.msra.mxu0 0.0
          %3437 = vmatprep.subr.mxu0 0.0
          %3438 = vmatpush1.msra.mxu0 0.0
          %3439 = vmatprep.subr.mxu0 0.0
          %3440 = vmatpush1.msra.mxu0 0.0
          %3441 = vmatprep.subr.mxu0 0.0
          %3442 = vmatpush1.msra.mxu0 0.0
          %3443 = vmatprep.mubr.f32.mxu0 0.0
          %3444 = vmatmul.mubr.f32.gmra.mrb[0].mxu0 %v3226
          %v3445 = vpop.f32.mrb[0].mxu0
          %v3446 = vadd.f32 0.0, %v3445
          %v3447 = vpop.f32.mrb[0].mxu0
          %3448 = vdwg.mxu0
          %v3449 = vmul.f32 %v3163, %v3446
          %v3450 = vadd.f32 %v3374, %v3449
          %v3451 = vunpack.c.l.bf16 %v3212
          %v3452 = vunpack.c.l.bf16 %v3213
          %v3453 = vunpack.c.l.bf16 %v3214
          %v3454 = vunpack.c.l.bf16 %v3215
          %3455 = vmatprep.subr.mxu0 0.0
          %3456 = vmatpush1.msra.mxu0 %v3451
          %3457 = vmatprep.subr.mxu0 0.0
          %3458 = vmatpush1.msra.mxu0 %v3452
          %3459 = vmatprep.subr.mxu0 0.0
          %3460 = vmatpush1.msra.mxu0 %v3453
          %3461 = vmatprep.subr.mxu0 0.0
          %3462 = vmatpush1.msra.mxu0 %v3454
          %3463 = vmatprep.subr.mxu0 0.0
          %3464 = vmatpush1.msra.mxu0 0.0
          %3465 = vmatprep.subr.mxu0 0.0
          %3466 = vmatpush1.msra.mxu0 0.0
          %3467 = vmatprep.subr.mxu0 0.0
          %3468 = vmatpush1.msra.mxu0 0.0
          %3469 = vmatprep.subr.mxu0 0.0
          %3470 = vmatpush1.msra.mxu0 0.0
          %3471 = vmatprep.subr.mxu0 0.0
          %3472 = vmatpush1.msra.mxu0 0.0
          %3473 = vmatprep.subr.mxu0 0.0
          %3474 = vmatpush1.msra.mxu0 0.0
          %3475 = vmatprep.subr.mxu0 0.0
          %3476 = vmatpush1.msra.mxu0 0.0
          %3477 = vmatprep.subr.mxu0 0.0
          %3478 = vmatpush1.msra.mxu0 0.0
          %3479 = vmatprep.subr.mxu0 0.0
          %3480 = vmatpush1.msra.mxu0 0.0
          %3481 = vmatprep.subr.mxu0 0.0
          %3482 = vmatpush1.msra.mxu0 0.0
          %3483 = vmatprep.subr.mxu0 0.0
          %3484 = vmatpush1.msra.mxu0 0.0
          %3485 = vmatprep.subr.mxu0 0.0
          %3486 = vmatpush1.msra.mxu0 0.0
          %3487 = vmatprep.subr.mxu0 0.0
          %3488 = vmatpush1.msra.mxu0 0.0
          %3489 = vmatprep.subr.mxu0 0.0
          %3490 = vmatpush1.msra.mxu0 0.0
          %3491 = vmatprep.subr.mxu0 0.0
          %3492 = vmatpush1.msra.mxu0 0.0
          %3493 = vmatprep.subr.mxu0 0.0
          %3494 = vmatpush1.msra.mxu0 0.0
          %3495 = vmatprep.subr.mxu0 0.0
          %3496 = vmatpush1.msra.mxu0 0.0
          %3497 = vmatprep.subr.mxu0 0.0
          %3498 = vmatpush1.msra.mxu0 0.0
          %3499 = vmatprep.subr.mxu0 0.0
          %3500 = vmatpush1.msra.mxu0 0.0
          %3501 = vmatprep.subr.mxu0 0.0
          %3502 = vmatpush1.msra.mxu0 0.0
          %3503 = vmatprep.subr.mxu0 0.0
          %3504 = vmatpush1.msra.mxu0 0.0
          %3505 = vmatprep.subr.mxu0 0.0
          %3506 = vmatpush1.msra.mxu0 0.0
          %3507 = vmatprep.subr.mxu0 0.0
          %3508 = vmatpush1.msra.mxu0 0.0
          %3509 = vmatprep.subr.mxu0 0.0
          %3510 = vmatpush1.msra.mxu0 0.0
          %3511 = vmatprep.subr.mxu0 0.0
          %3512 = vmatpush1.msra.mxu0 0.0
          %3513 = vmatprep.subr.mxu0 0.0
          %3514 = vmatpush1.msra.mxu0 0.0
          %3515 = vmatprep.subr.mxu0 0.0
          %3516 = vmatpush1.msra.mxu0 0.0
          %3517 = vmatprep.subr.mxu0 0.0
          %3518 = vmatpush1.msra.mxu0 0.0
          %3519 = vmatprep.mubr.f32.mxu0 0.0
          %3520 = vmatmul.mubr.f32.gmra.mrb[0].mxu0 %v3226
          %v3521 = vpop.f32.mrb[0].mxu0
          %v3522 = vadd.f32 0.0, %v3521
          %v3523 = vpop.f32.mrb[0].mxu0
          %3524 = vdwg.mxu0
          %v3525 = vmul.f32 %v3171, %v3522
          %v3526 = vadd.f32 %v3450, %v3525
          %v3527 = vmul.f32 %v3152, %v3216
          %v3528 = vmul.f32 %v3155, %v3217
          %v3529 = vadd.f32 %v3527, %v3528
          %v3530 = vmul.f32 %v3163, %v3218
          %v3531 = vadd.f32 %v3529, %v3530
          %v3532 = vmul.f32 %v3171, %v3219
          %v3533 = vadd.f32 %v3531, %v3532
          %v3535 = vlaneseq
          %v3536 = vshrl.u32 %v3535, 7
          %v3537 = vsub.s32 0, %v3536
          %v3538 = vrot.slane %v3533, %v3537
          %v3540 = vadd.f32 %v3526, %v3538
          %vm3541 = vcmask 254976
          %v3542 = vsel %vm3541, %v3540, 0.0
          %v3543 = vrot.slane %v3542, 4
          %v3544 = vadd.f32 %v3542, %v3543
          %v3545 = vrot.slane %v3544, 2
          %v3546 = vadd.f32 %v3544, %v3545
          %v3547 = vrot.slane %v3546, 1
          %v3548 = vadd.f32 %v3546, %v3547
          %v3549 = vrcp.pop 2.0
          %v3550 = vmul.f32 %v3548, %v3549
          %v3551 = vsub.f32 %v3540, %v3550
          %v3552 = vmul.f32 %v3551, %v3551
          %v3553 = vsel %vm3541, %v3552, 0.0
          %v3554 = vrot.slane %v3553, 4
          %v3555 = vadd.f32 %v3553, %v3554
          %v3556 = vrot.slane %v3555, 2
          %v3557 = vadd.f32 %v3555, %v3556
          %v3558 = vrot.slane %v3557, 1
          %v3559 = vadd.f32 %v3557, %v3558
          %v3560 = vmul.f32 %v3559, %v3549
          %v3561 = vadd.f32 %v3560, 1e-05
          %v3562 = vrsqrt.pop %v3561
          %v3563 = vmul.f32 %v3551, %v3562
          %v3564 = vld [vmem:[#allocation14] sm:$0x1]
          %v3566 = vlaneseq
          %v3567 = vshrl.u32 %v3566, 7
          %v3568 = vsub.s32 0, %v3567
          %v3569 = vrot.slane %v3564, %v3568
          %v3571 = vmul.f32 %v3563, %v3569
          %v3572 = vld [vmem:[#allocation16] sm:$0x1]
          %v3574 = vlaneseq
          %v3575 = vshrl.u32 %v3574, 7
          %v3576 = vsub.s32 0, %v3575
          %v3577 = vrot.slane %v3572, %v3576
          %v3579 = vadd.f32 %v3571, %v3577
          %v3580 = vmax.f32 %v3579, 0.0
          %s3581 = scalar_lea.vmem [#allocation11], 64
          %v3582 = vld [vmem:[%s3581] sm:$0xf]
          %v3583 = vld [vmem:[%s3581 + $0x4] sm:$0xf]
          %v3584 = vld [vmem:[%s3581 + $0x8] sm:$0xf]
          %v3585 = vld [vmem:[%s3581 + $0xc] sm:$0xf]
          %v3586 = vld [vmem:[%s3581 + $0x10] sm:$0xf]
          %v3587 = vld [vmem:[%s3581 + $0x14] sm:$0xf]
          %v3588 = vld [vmem:[%s3581 + $0x18] sm:$0xf]
          %v3589 = vld [vmem:[%s3581 + $0x1c] sm:$0xf]
          %v3590 = vld [vmem:[%s3581 + $0x20] sm:$0xf]
          %v3591 = vld [vmem:[%s3581 + $0x24] sm:$0xf]
          %v3592 = vld [vmem:[%s3581 + $0x28] sm:$0xf]
          %v3593 = vld [vmem:[%s3581 + $0x2c] sm:$0xf]
          %v3594 = vld [vmem:[%s3581 + $0x30] sm:$0xf]
          %v3595 = vld [vmem:[%s3581 + $0x34] sm:$0xf]
          %v3596 = vld [vmem:[%s3581 + $0x38] sm:$0xf]
          %v3597 = vld [vmem:[%s3581 + $0x3c] sm:$0xf]
          %s3598 = scalar_lea.vmem [#allocation13], 4
          %v3599 = vld [vmem:[%s3598] sm:$0x1]
          %v3600 = vld [vmem:[%s3598 + $0x1] sm:$0x1]
          %v3601 = vld [vmem:[%s3598 + $0x2] sm:$0x1]
          %v3602 = vld [vmem:[%s3598 + $0x3] sm:$0x1]
          %v3603 = vunpack.c.l.bf16 %v3582
          %v3604 = vunpack.c.l.bf16 %v3583
          %v3605 = vunpack.c.l.bf16 %v3584
          %v3606 = vunpack.c.l.bf16 %v3585
          %v3608 = vsel %vm3224, %v3580, 0
          %3610 = vmatprep.subr.mxu0 0.0
          %3611 = vmatpush1.msra.mxu0 %v3603
          %3612 = vmatprep.subr.mxu0 0.0
          %3613 = vmatpush1.msra.mxu0 %v3604
          %3614 = vmatprep.subr.mxu0 0.0
          %3615 = vmatpush1.msra.mxu0 %v3605
          %3616 = vmatprep.subr.mxu0 0.0
          %3617 = vmatpush1.msra.mxu0 %v3606
          %3618 = vmatprep.subr.mxu0 0.0
          %3619 = vmatpush1.msra.mxu0 0.0
          %3620 = vmatprep.subr.mxu0 0.0
          %3621 = vmatpush1.msra.mxu0 0.0
          %3622 = vmatprep.subr.mxu0 0.0
          %3623 = vmatpush1.msra.mxu0 0.0
          %3624 = vmatprep.subr.mxu0 0.0
          %3625 = vmatpush1.msra.mxu0 0.0
          %3626 = vmatprep.subr.mxu0 0.0
          %3627 = vmatpush1.msra.mxu0 0.0
          %3628 = vmatprep.subr.mxu0 0.0
          %3629 = vmatpush1.msra.mxu0 0.0
          %3630 = vmatprep.subr.mxu0 0.0
          %3631 = vmatpush1.msra.mxu0 0.0
          %3632 = vmatprep.subr.mxu0 0.0
          %3633 = vmatpush1.msra.mxu0 0.0
          %3634 = vmatprep.subr.mxu0 0.0
          %3635 = vmatpush1.msra.mxu0 0.0
          %3636 = vmatprep.subr.mxu0 0.0
          %3637 = vmatpush1.msra.mxu0 0.0
          %3638 = vmatprep.subr.mxu0 0.0
          %3639 = vmatpush1.msra.mxu0 0.0
          %3640 = vmatprep.subr.mxu0 0.0
          %3641 = vmatpush1.msra.mxu0 0.0
          %3642 = vmatprep.subr.mxu0 0.0
          %3643 = vmatpush1.msra.mxu0 0.0
          %3644 = vmatprep.subr.mxu0 0.0
          %3645 = vmatpush1.msra.mxu0 0.0
          %3646 = vmatprep.subr.mxu0 0.0
          %3647 = vmatpush1.msra.mxu0 0.0
          %3648 = vmatprep.subr.mxu0 0.0
          %3649 = vmatpush1.msra.mxu0 0.0
          %3650 = vmatprep.subr.mxu0 0.0
          %3651 = vmatpush1.msra.mxu0 0.0
          %3652 = vmatprep.subr.mxu0 0.0
          %3653 = vmatpush1.msra.mxu0 0.0
          %3654 = vmatprep.subr.mxu0 0.0
          %3655 = vmatpush1.msra.mxu0 0.0
          %3656 = vmatprep.subr.mxu0 0.0
          %3657 = vmatpush1.msra.mxu0 0.0
          %3658 = vmatprep.subr.mxu0 0.0
          %3659 = vmatpush1.msra.mxu0 0.0
          %3660 = vmatprep.subr.mxu0 0.0
          %3661 = vmatpush1.msra.mxu0 0.0
          %3662 = vmatprep.subr.mxu0 0.0
          %3663 = vmatpush1.msra.mxu0 0.0
          %3664 = vmatprep.subr.mxu0 0.0
          %3665 = vmatpush1.msra.mxu0 0.0
          %3666 = vmatprep.subr.mxu0 0.0
          %3667 = vmatpush1.msra.mxu0 0.0
          %3668 = vmatprep.subr.mxu0 0.0
          %3669 = vmatpush1.msra.mxu0 0.0
          %3670 = vmatprep.subr.mxu0 0.0
          %3671 = vmatpush1.msra.mxu0 0.0
          %3672 = vmatprep.subr.mxu0 0.0
          %3673 = vmatpush1.msra.mxu0 0.0
          %3674 = vmatprep.mubr.f32.mxu0 0.0
          %3675 = vmatmul.mubr.f32.gmra.mrb[0].mxu0 %v3608
          %v3676 = vpop.f32.mrb[0].mxu0
          %v3677 = vadd.f32 0.0, %v3676
          %v3678 = vpop.f32.mrb[0].mxu0
          %3679 = vdwg.mxu0
          %v3680 = vmul.f32 %v3152, %v3677
          %v3681 = vunpack.c.l.bf16 %v3586
          %v3682 = vunpack.c.l.bf16 %v3587
          %v3683 = vunpack.c.l.bf16 %v3588
          %v3684 = vunpack.c.l.bf16 %v3589
          %3685 = vmatprep.subr.mxu0 0.0
          %3686 = vmatpush1.msra.mxu0 %v3681
          %3687 = vmatprep.subr.mxu0 0.0
          %3688 = vmatpush1.msra.mxu0 %v3682
          %3689 = vmatprep.subr.mxu0 0.0
          %3690 = vmatpush1.msra.mxu0 %v3683
          %3691 = vmatprep.subr.mxu0 0.0
          %3692 = vmatpush1.msra.mxu0 %v3684
          %3693 = vmatprep.subr.mxu0 0.0
          %3694 = vmatpush1.msra.mxu0 0.0
          %3695 = vmatprep.subr.mxu0 0.0
          %3696 = vmatpush1.msra.mxu0 0.0
          %3697 = vmatprep.subr.mxu0 0.0
          %3698 = vmatpush1.msra.mxu0 0.0
          %3699 = vmatprep.subr.mxu0 0.0
          %3700 = vmatpush1.msra.mxu0 0.0
          %3701 = vmatprep.subr.mxu0 0.0
          %3702 = vmatpush1.msra.mxu0 0.0
          %3703 = vmatprep.subr.mxu0 0.0
          %3704 = vmatpush1.msra.mxu0 0.0
          %3705 = vmatprep.subr.mxu0 0.0
          %3706 = vmatpush1.msra.mxu0 0.0
          %3707 = vmatprep.subr.mxu0 0.0
          %3708 = vmatpush1.msra.mxu0 0.0
          %3709 = vmatprep.subr.mxu0 0.0
          %3710 = vmatpush1.msra.mxu0 0.0
          %3711 = vmatprep.subr.mxu0 0.0
          %3712 = vmatpush1.msra.mxu0 0.0
          %3713 = vmatprep.subr.mxu0 0.0
          %3714 = vmatpush1.msra.mxu0 0.0
          %3715 = vmatprep.subr.mxu0 0.0
          %3716 = vmatpush1.msra.mxu0 0.0
          %3717 = vmatprep.subr.mxu0 0.0
          %3718 = vmatpush1.msra.mxu0 0.0
          %3719 = vmatprep.subr.mxu0 0.0
          %3720 = vmatpush1.msra.mxu0 0.0
          %3721 = vmatprep.subr.mxu0 0.0
          %3722 = vmatpush1.msra.mxu0 0.0
          %3723 = vmatprep.subr.mxu0 0.0
          %3724 = vmatpush1.msra.mxu0 0.0
          %3725 = vmatprep.subr.mxu0 0.0
          %3726 = vmatpush1.msra.mxu0 0.0
          %3727 = vmatprep.subr.mxu0 0.0
          %3728 = vmatpush1.msra.mxu0 0.0
          %3729 = vmatprep.subr.mxu0 0.0
          %3730 = vmatpush1.msra.mxu0 0.0
          %3731 = vmatprep.subr.mxu0 0.0
          %3732 = vmatpush1.msra.mxu0 0.0
          %3733 = vmatprep.subr.mxu0 0.0
          %3734 = vmatpush1.msra.mxu0 0.0
          %3735 = vmatprep.subr.mxu0 0.0
          %3736 = vmatpush1.msra.mxu0 0.0
          %3737 = vmatprep.subr.mxu0 0.0
          %3738 = vmatpush1.msra.mxu0 0.0
          %3739 = vmatprep.subr.mxu0 0.0
          %3740 = vmatpush1.msra.mxu0 0.0
          %3741 = vmatprep.subr.mxu0 0.0
          %3742 = vmatpush1.msra.mxu0 0.0
          %3743 = vmatprep.subr.mxu0 0.0
          %3744 = vmatpush1.msra.mxu0 0.0
          %3745 = vmatprep.subr.mxu0 0.0
          %3746 = vmatpush1.msra.mxu0 0.0
          %3747 = vmatprep.subr.mxu0 0.0
          %3748 = vmatpush1.msra.mxu0 0.0
          %3749 = vmatprep.mubr.f32.mxu0 0.0
          %3750 = vmatmul.mubr.f32.gmra.mrb[0].mxu0 %v3608
          %v3751 = vpop.f32.mrb[0].mxu0
          %v3752 = vadd.f32 0.0, %v3751
          %v3753 = vpop.f32.mrb[0].mxu0
          %3754 = vdwg.mxu0
          %v3755 = vmul.f32 %v3155, %v3752
          %v3756 = vadd.f32 %v3680, %v3755
          %v3757 = vunpack.c.l.bf16 %v3590
          %v3758 = vunpack.c.l.bf16 %v3591
          %v3759 = vunpack.c.l.bf16 %v3592
          %v3760 = vunpack.c.l.bf16 %v3593
          %3761 = vmatprep.subr.mxu0 0.0
          %3762 = vmatpush1.msra.mxu0 %v3757
          %3763 = vmatprep.subr.mxu0 0.0
          %3764 = vmatpush1.msra.mxu0 %v3758
          %3765 = vmatprep.subr.mxu0 0.0
          %3766 = vmatpush1.msra.mxu0 %v3759
          %3767 = vmatprep.subr.mxu0 0.0
          %3768 = vmatpush1.msra.mxu0 %v3760
          %3769 = vmatprep.subr.mxu0 0.0
          %3770 = vmatpush1.msra.mxu0 0.0
          %3771 = vmatprep.subr.mxu0 0.0
          %3772 = vmatpush1.msra.mxu0 0.0
          %3773 = vmatprep.subr.mxu0 0.0
          %3774 = vmatpush1.msra.mxu0 0.0
          %3775 = vmatprep.subr.mxu0 0.0
          %3776 = vmatpush1.msra.mxu0 0.0
          %3777 = vmatprep.subr.mxu0 0.0
          %3778 = vmatpush1.msra.mxu0 0.0
          %3779 = vmatprep.subr.mxu0 0.0
          %3780 = vmatpush1.msra.mxu0 0.0
          %3781 = vmatprep.subr.mxu0 0.0
          %3782 = vmatpush1.msra.mxu0 0.0
          %3783 = vmatprep.subr.mxu0 0.0
          %3784 = vmatpush1.msra.mxu0 0.0
          %3785 = vmatprep.subr.mxu0 0.0
          %3786 = vmatpush1.msra.mxu0 0.0
          %3787 = vmatprep.subr.mxu0 0.0
          %3788 = vmatpush1.msra.mxu0 0.0
          %3789 = vmatprep.subr.mxu0 0.0
          %3790 = vmatpush1.msra.mxu0 0.0
          %3791 = vmatprep.subr.mxu0 0.0
          %3792 = vmatpush1.msra.mxu0 0.0
          %3793 = vmatprep.subr.mxu0 0.0
          %3794 = vmatpush1.msra.mxu0 0.0
          %3795 = vmatprep.subr.mxu0 0.0
          %3796 = vmatpush1.msra.mxu0 0.0
          %3797 = vmatprep.subr.mxu0 0.0
          %3798 = vmatpush1.msra.mxu0 0.0
          %3799 = vmatprep.subr.mxu0 0.0
          %3800 = vmatpush1.msra.mxu0 0.0
          %3801 = vmatprep.subr.mxu0 0.0
          %3802 = vmatpush1.msra.mxu0 0.0
          %3803 = vmatprep.subr.mxu0 0.0
          %3804 = vmatpush1.msra.mxu0 0.0
          %3805 = vmatprep.subr.mxu0 0.0
          %3806 = vmatpush1.msra.mxu0 0.0
          %3807 = vmatprep.subr.mxu0 0.0
          %3808 = vmatpush1.msra.mxu0 0.0
          %3809 = vmatprep.subr.mxu0 0.0
          %3810 = vmatpush1.msra.mxu0 0.0
          %3811 = vmatprep.subr.mxu0 0.0
          %3812 = vmatpush1.msra.mxu0 0.0
          %3813 = vmatprep.subr.mxu0 0.0
          %3814 = vmatpush1.msra.mxu0 0.0
          %3815 = vmatprep.subr.mxu0 0.0
          %3816 = vmatpush1.msra.mxu0 0.0
          %3817 = vmatprep.subr.mxu0 0.0
          %3818 = vmatpush1.msra.mxu0 0.0
          %3819 = vmatprep.subr.mxu0 0.0
          %3820 = vmatpush1.msra.mxu0 0.0
          %3821 = vmatprep.subr.mxu0 0.0
          %3822 = vmatpush1.msra.mxu0 0.0
          %3823 = vmatprep.subr.mxu0 0.0
          %3824 = vmatpush1.msra.mxu0 0.0
          %3825 = vmatprep.mubr.f32.mxu0 0.0
          %3826 = vmatmul.mubr.f32.gmra.mrb[0].mxu0 %v3608
          %v3827 = vpop.f32.mrb[0].mxu0
          %v3828 = vadd.f32 0.0, %v3827
          %v3829 = vpop.f32.mrb[0].mxu0
          %3830 = vdwg.mxu0
          %v3831 = vmul.f32 %v3163, %v3828
          %v3832 = vadd.f32 %v3756, %v3831
          %v3833 = vunpack.c.l.bf16 %v3594
          %v3834 = vunpack.c.l.bf16 %v3595
          %v3835 = vunpack.c.l.bf16 %v3596
          %v3836 = vunpack.c.l.bf16 %v3597
          %3837 = vmatprep.subr.mxu0 0.0
          %3838 = vmatpush1.msra.mxu0 %v3833
          %3839 = vmatprep.subr.mxu0 0.0
          %3840 = vmatpush1.msra.mxu0 %v3834
          %3841 = vmatprep.subr.mxu0 0.0
          %3842 = vmatpush1.msra.mxu0 %v3835
          %3843 = vmatprep.subr.mxu0 0.0
          %3844 = vmatpush1.msra.mxu0 %v3836
          %3845 = vmatprep.subr.mxu0 0.0
          %3846 = vmatpush1.msra.mxu0 0.0
          %3847 = vmatprep.subr.mxu0 0.0
          %3848 = vmatpush1.msra.mxu0 0.0
          %3849 = vmatprep.subr.mxu0 0.0
          %3850 = vmatpush1.msra.mxu0 0.0
          %3851 = vmatprep.subr.mxu0 0.0
          %3852 = vmatpush1.msra.mxu0 0.0
          %3853 = vmatprep.subr.mxu0 0.0
          %3854 = vmatpush1.msra.mxu0 0.0
          %3855 = vmatprep.subr.mxu0 0.0
          %3856 = vmatpush1.msra.mxu0 0.0
          %3857 = vmatprep.subr.mxu0 0.0
          %3858 = vmatpush1.msra.mxu0 0.0
          %3859 = vmatprep.subr.mxu0 0.0
          %3860 = vmatpush1.msra.mxu0 0.0
          %3861 = vmatprep.subr.mxu0 0.0
          %3862 = vmatpush1.msra.mxu0 0.0
          %3863 = vmatprep.subr.mxu0 0.0
          %3864 = vmatpush1.msra.mxu0 0.0
          %3865 = vmatprep.subr.mxu0 0.0
          %3866 = vmatpush1.msra.mxu0 0.0
          %3867 = vmatprep.subr.mxu0 0.0
          %3868 = vmatpush1.msra.mxu0 0.0
          %3869 = vmatprep.subr.mxu0 0.0
          %3870 = vmatpush1.msra.mxu0 0.0
          %3871 = vmatprep.subr.mxu0 0.0
          %3872 = vmatpush1.msra.mxu0 0.0
          %3873 = vmatprep.subr.mxu0 0.0
          %3874 = vmatpush1.msra.mxu0 0.0
          %3875 = vmatprep.subr.mxu0 0.0
          %3876 = vmatpush1.msra.mxu0 0.0
          %3877 = vmatprep.subr.mxu0 0.0
          %3878 = vmatpush1.msra.mxu0 0.0
          %3879 = vmatprep.subr.mxu0 0.0
          %3880 = vmatpush1.msra.mxu0 0.0
          %3881 = vmatprep.subr.mxu0 0.0
          %3882 = vmatpush1.msra.mxu0 0.0
          %3883 = vmatprep.subr.mxu0 0.0
          %3884 = vmatpush1.msra.mxu0 0.0
          %3885 = vmatprep.subr.mxu0 0.0
          %3886 = vmatpush1.msra.mxu0 0.0
          %3887 = vmatprep.subr.mxu0 0.0
          %3888 = vmatpush1.msra.mxu0 0.0
          %3889 = vmatprep.subr.mxu0 0.0
          %3890 = vmatpush1.msra.mxu0 0.0
          %3891 = vmatprep.subr.mxu0 0.0
          %3892 = vmatpush1.msra.mxu0 0.0
          %3893 = vmatprep.subr.mxu0 0.0
          %3894 = vmatpush1.msra.mxu0 0.0
          %3895 = vmatprep.subr.mxu0 0.0
          %3896 = vmatpush1.msra.mxu0 0.0
          %3897 = vmatprep.subr.mxu0 0.0
          %3898 = vmatpush1.msra.mxu0 0.0
          %3899 = vmatprep.subr.mxu0 0.0
          %3900 = vmatpush1.msra.mxu0 0.0
          %3901 = vmatprep.mubr.f32.mxu0 0.0
          %3902 = vmatmul.mubr.f32.gmra.mrb[0].mxu0 %v3608
          %v3903 = vpop.f32.mrb[0].mxu0
          %v3904 = vadd.f32 0.0, %v3903
          %v3905 = vpop.f32.mrb[0].mxu0
          %3906 = vdwg.mxu0
          %v3907 = vmul.f32 %v3171, %v3904
          %v3908 = vadd.f32 %v3832, %v3907
          %v3909 = vmul.f32 %v3152, %v3599
          %v3910 = vmul.f32 %v3155, %v3600
          %v3911 = vadd.f32 %v3909, %v3910
          %v3912 = vmul.f32 %v3163, %v3601
          %v3913 = vadd.f32 %v3911, %v3912
          %v3914 = vmul.f32 %v3171, %v3602
          %v3915 = vadd.f32 %v3913, %v3914
          %v3917 = vlaneseq
          %v3918 = vshrl.u32 %v3917, 7
          %v3919 = vsub.s32 0, %v3918
          %v3920 = vrot.slane %v3915, %v3919
          %v3922 = vadd.f32 %v3908, %v3920
          %v3923 = vsel %vm3541, %v3922, 0.0
          %v3924 = vrot.slane %v3923, 4
          %v3925 = vadd.f32 %v3923, %v3924
          %v3926 = vrot.slane %v3925, 2
          %v3927 = vadd.f32 %v3925, %v3926
          %v3928 = vrot.slane %v3927, 1
          %v3929 = vadd.f32 %v3927, %v3928
          %v3930 = vmul.f32 %v3929, %v3549
          %v3931 = vsub.f32 %v3922, %v3930
          %v3932 = vmul.f32 %v3931, %v3931
          %v3933 = vsel %vm3541, %v3932, 0.0
          %v3934 = vrot.slane %v3933, 4
          %v3935 = vadd.f32 %v3933, %v3934
          %v3936 = vrot.slane %v3935, 2
          %v3937 = vadd.f32 %v3935, %v3936
          %v3938 = vrot.slane %v3937, 1
          %v3939 = vadd.f32 %v3937, %v3938
          %v3940 = vmul.f32 %v3939, %v3549
          %v3941 = vadd.f32 %v3940, 1e-05
          %v3942 = vrsqrt.pop %v3941
          %v3943 = vmul.f32 %v3931, %v3942
          %s3944 = scalar_lea.vmem [#allocation14], 1
          %v3945 = vld [vmem:[%s3944] sm:$0x1]
          %v3947 = vlaneseq
          %v3948 = vshrl.u32 %v3947, 7
          %v3949 = vsub.s32 0, %v3948
          %v3950 = vrot.slane %v3945, %v3949
          %v3952 = vmul.f32 %v3943, %v3950
          %s3953 = scalar_lea.vmem [#allocation16], 1
          %v3954 = vld [vmem:[%s3953] sm:$0x1]
          %v3956 = vlaneseq
          %v3957 = vshrl.u32 %v3956, 7
          %v3958 = vsub.s32 0, %v3957
          %v3959 = vrot.slane %v3954, %v3958
          %v3961 = vadd.f32 %v3952, %v3959
          %v3962 = vmax.f32 %v3961, 0.0
          %v3963 = vld [vmem:[#allocation17] sm:$0xf]
          %v3964 = vld [vmem:[#allocation17 + $0x4] sm:$0xf]
          %v3965 = vld [vmem:[#allocation17 + $0x8] sm:$0xf]
          %v3966 = vld [vmem:[#allocation17 + $0xc] sm:$0xf]
          %v3967 = vunpack.c.l.bf16 %v3963
          %v3968 = vunpack.c.l.bf16 %v3964
          %v3969 = vunpack.c.l.bf16 %v3965
          %v3970 = vunpack.c.l.bf16 %v3966
          %v3972 = vsel %vm3224, %v3962, 0
          %3974 = vmatprep.subr.mxu0 0.0
          %3975 = vmatpush1.msra.mxu0 %v3967
          %3976 = vmatprep.subr.mxu0 0.0
          %3977 = vmatpush1.msra.mxu0 %v3968
          %3978 = vmatprep.subr.mxu0 0.0
          %3979 = vmatpush1.msra.mxu0 %v3969
          %3980 = vmatprep.subr.mxu0 0.0
          %3981 = vmatpush1.msra.mxu0 %v3970
          %3982 = vmatprep.subr.mxu0 0.0
          %3983 = vmatpush1.msra.mxu0 0.0
          %3984 = vmatprep.subr.mxu0 0.0
          %3985 = vmatpush1.msra.mxu0 0.0
          %3986 = vmatprep.subr.mxu0 0.0
          %3987 = vmatpush1.msra.mxu0 0.0
          %3988 = vmatprep.subr.mxu0 0.0
          %3989 = vmatpush1.msra.mxu0 0.0
          %3990 = vmatprep.subr.mxu0 0.0
          %3991 = vmatpush1.msra.mxu0 0.0
          %3992 = vmatprep.subr.mxu0 0.0
          %3993 = vmatpush1.msra.mxu0 0.0
          %3994 = vmatprep.subr.mxu0 0.0
          %3995 = vmatpush1.msra.mxu0 0.0
          %3996 = vmatprep.subr.mxu0 0.0
          %3997 = vmatpush1.msra.mxu0 0.0
          %3998 = vmatprep.subr.mxu0 0.0
          %3999 = vmatpush1.msra.mxu0 0.0
          %4000 = vmatprep.subr.mxu0 0.0
          %4001 = vmatpush1.msra.mxu0 0.0
          %4002 = vmatprep.subr.mxu0 0.0
          %4003 = vmatpush1.msra.mxu0 0.0
          %4004 = vmatprep.subr.mxu0 0.0
          %4005 = vmatpush1.msra.mxu0 0.0
          %4006 = vmatprep.subr.mxu0 0.0
          %4007 = vmatpush1.msra.mxu0 0.0
          %4008 = vmatprep.subr.mxu0 0.0
          %4009 = vmatpush1.msra.mxu0 0.0
          %4010 = vmatprep.subr.mxu0 0.0
          %4011 = vmatpush1.msra.mxu0 0.0
          %4012 = vmatprep.subr.mxu0 0.0
          %4013 = vmatpush1.msra.mxu0 0.0
          %4014 = vmatprep.subr.mxu0 0.0
          %4015 = vmatpush1.msra.mxu0 0.0
          %4016 = vmatprep.subr.mxu0 0.0
          %4017 = vmatpush1.msra.mxu0 0.0
          %4018 = vmatprep.subr.mxu0 0.0
          %4019 = vmatpush1.msra.mxu0 0.0
          %4020 = vmatprep.subr.mxu0 0.0
          %4021 = vmatpush1.msra.mxu0 0.0
          %4022 = vmatprep.subr.mxu0 0.0
          %4023 = vmatpush1.msra.mxu0 0.0
          %4024 = vmatprep.subr.mxu0 0.0
          %4025 = vmatpush1.msra.mxu0 0.0
          %4026 = vmatprep.subr.mxu0 0.0
          %4027 = vmatpush1.msra.mxu0 0.0
          %4028 = vmatprep.subr.mxu0 0.0
          %4029 = vmatpush1.msra.mxu0 0.0
          %4030 = vmatprep.subr.mxu0 0.0
          %4031 = vmatpush1.msra.mxu0 0.0
          %4032 = vmatprep.subr.mxu0 0.0
          %4033 = vmatpush1.msra.mxu0 0.0
          %4034 = vmatprep.subr.mxu0 0.0
          %4035 = vmatpush1.msra.mxu0 0.0
          %4036 = vmatprep.subr.mxu0 0.0
          %4037 = vmatpush1.msra.mxu0 0.0
          %4038 = vmatprep.mubr.f32.mxu0 0.0
          %4039 = vmatmul.mubr.f32.gmra.mrb[0].mxu0 %v3972
          %v4040 = vpop.f32.mrb[0].mxu0
          %v4041 = vadd.f32 0.0, %v4040
          %v4042 = vpop.f32.mrb[0].mxu0
          %4043 = vdwg.mxu0
          %v4044 = vmul.f32 %v3152, %v4041
          %s4045 = scalar_lea.vmem [#allocation17], 16
          %v4046 = vld [vmem:[%s4045] sm:$0xf]
          %v4047 = vld [vmem:[%s4045 + $0x4] sm:$0xf]
          %v4048 = vld [vmem:[%s4045 + $0x8] sm:$0xf]
          %v4049 = vld [vmem:[%s4045 + $0xc] sm:$0xf]
          %v4050 = vunpack.c.l.bf16 %v4046
          %v4051 = vunpack.c.l.bf16 %v4047
          %v4052 = vunpack.c.l.bf16 %v4048
          %v4053 = vunpack.c.l.bf16 %v4049
          %4054 = vmatprep.subr.mxu0 0.0
          %4055 = vmatpush1.msra.mxu0 %v4050
          %4056 = vmatprep.subr.mxu0 0.0
          %4057 = vmatpush1.msra.mxu0 %v4051
          %4058 = vmatprep.subr.mxu0 0.0
          %4059 = vmatpush1.msra.mxu0 %v4052
          %4060 = vmatprep.subr.mxu0 0.0
          %4061 = vmatpush1.msra.mxu0 %v4053
          %4062 = vmatprep.subr.mxu0 0.0
          %4063 = vmatpush1.msra.mxu0 0.0
          %4064 = vmatprep.subr.mxu0 0.0
          %4065 = vmatpush1.msra.mxu0 0.0
          %4066 = vmatprep.subr.mxu0 0.0
          %4067 = vmatpush1.msra.mxu0 0.0
          %4068 = vmatprep.subr.mxu0 0.0
          %4069 = vmatpush1.msra.mxu0 0.0
          %4070 = vmatprep.subr.mxu0 0.0
          %4071 = vmatpush1.msra.mxu0 0.0
          %4072 = vmatprep.subr.mxu0 0.0
          %4073 = vmatpush1.msra.mxu0 0.0
          %4074 = vmatprep.subr.mxu0 0.0
          %4075 = vmatpush1.msra.mxu0 0.0
          %4076 = vmatprep.subr.mxu0 0.0
          %4077 = vmatpush1.msra.mxu0 0.0
          %4078 = vmatprep.subr.mxu0 0.0
          %4079 = vmatpush1.msra.mxu0 0.0
          %4080 = vmatprep.subr.mxu0 0.0
          %4081 = vmatpush1.msra.mxu0 0.0
          %4082 = vmatprep.subr.mxu0 0.0
          %4083 = vmatpush1.msra.mxu0 0.0
          %4084 = vmatprep.subr.mxu0 0.0
          %4085 = vmatpush1.msra.mxu0 0.0
          %4086 = vmatprep.subr.mxu0 0.0
          %4087 = vmatpush1.msra.mxu0 0.0
          %4088 = vmatprep.subr.mxu0 0.0
          %4089 = vmatpush1.msra.mxu0 0.0
          %4090 = vmatprep.subr.mxu0 0.0
          %4091 = vmatpush1.msra.mxu0 0.0
          %4092 = vmatprep.subr.mxu0 0.0
          %4093 = vmatpush1.msra.mxu0 0.0
          %4094 = vmatprep.subr.mxu0 0.0
          %4095 = vmatpush1.msra.mxu0 0.0
          %4096 = vmatprep.subr.mxu0 0.0
          %4097 = vmatpush1.msra.mxu0 0.0
          %4098 = vmatprep.subr.mxu0 0.0
          %4099 = vmatpush1.msra.mxu0 0.0
          %4100 = vmatprep.subr.mxu0 0.0
          %4101 = vmatpush1.msra.mxu0 0.0
          %4102 = vmatprep.subr.mxu0 0.0
          %4103 = vmatpush1.msra.mxu0 0.0
          %4104 = vmatprep.subr.mxu0 0.0
          %4105 = vmatpush1.msra.mxu0 0.0
          %4106 = vmatprep.subr.mxu0 0.0
          %4107 = vmatpush1.msra.mxu0 0.0
          %4108 = vmatprep.subr.mxu0 0.0
          %4109 = vmatpush1.msra.mxu0 0.0
          %4110 = vmatprep.subr.mxu0 0.0
          %4111 = vmatpush1.msra.mxu0 0.0
          %4112 = vmatprep.subr.mxu0 0.0
          %4113 = vmatpush1.msra.mxu0 0.0
          %4114 = vmatprep.subr.mxu0 0.0
          %4115 = vmatpush1.msra.mxu0 0.0
          %4116 = vmatprep.subr.mxu0 0.0
          %4117 = vmatpush1.msra.mxu0 0.0
          %4118 = vmatprep.mubr.f32.mxu0 0.0
          %4119 = vmatmul.mubr.f32.gmra.mrb[0].mxu0 %v3972
          %v4120 = vpop.f32.mrb[0].mxu0
          %v4121 = vadd.f32 0.0, %v4120
          %v4122 = vpop.f32.mrb[0].mxu0
          %4123 = vdwg.mxu0
          %v4124 = vmul.f32 %v3155, %v4121
          %v4125 = vadd.f32 %v4044, %v4124
          %s4126 = scalar_lea.vmem [#allocation17], 32
          %v4127 = vld [vmem:[%s4126] sm:$0xf]
          %v4128 = vld [vmem:[%s4126 + $0x4] sm:$0xf]
          %v4129 = vld [vmem:[%s4126 + $0x8] sm:$0xf]
          %v4130 = vld [vmem:[%s4126 + $0xc] sm:$0xf]
          %v4131 = vunpack.c.l.bf16 %v4127
          %v4132 = vunpack.c.l.bf16 %v4128
          %v4133 = vunpack.c.l.bf16 %v4129
          %v4134 = vunpack.c.l.bf16 %v4130
          %4135 = vmatprep.subr.mxu0 0.0
          %4136 = vmatpush1.msra.mxu0 %v4131
          %4137 = vmatprep.subr.mxu0 0.0
          %4138 = vmatpush1.msra.mxu0 %v4132
          %4139 = vmatprep.subr.mxu0 0.0
          %4140 = vmatpush1.msra.mxu0 %v4133
          %4141 = vmatprep.subr.mxu0 0.0
          %4142 = vmatpush1.msra.mxu0 %v4134
          %4143 = vmatprep.subr.mxu0 0.0
          %4144 = vmatpush1.msra.mxu0 0.0
          %4145 = vmatprep.subr.mxu0 0.0
          %4146 = vmatpush1.msra.mxu0 0.0
          %4147 = vmatprep.subr.mxu0 0.0
          %4148 = vmatpush1.msra.mxu0 0.0
          %4149 = vmatprep.subr.mxu0 0.0
          %4150 = vmatpush1.msra.mxu0 0.0
          %4151 = vmatprep.subr.mxu0 0.0
          %4152 = vmatpush1.msra.mxu0 0.0
          %4153 = vmatprep.subr.mxu0 0.0
          %4154 = vmatpush1.msra.mxu0 0.0
          %4155 = vmatprep.subr.mxu0 0.0
          %4156 = vmatpush1.msra.mxu0 0.0
          %4157 = vmatprep.subr.mxu0 0.0
          %4158 = vmatpush1.msra.mxu0 0.0
          %4159 = vmatprep.subr.mxu0 0.0
          %4160 = vmatpush1.msra.mxu0 0.0
          %4161 = vmatprep.subr.mxu0 0.0
          %4162 = vmatpush1.msra.mxu0 0.0
          %4163 = vmatprep.subr.mxu0 0.0
          %4164 = vmatpush1.msra.mxu0 0.0
          %4165 = vmatprep.subr.mxu0 0.0
          %4166 = vmatpush1.msra.mxu0 0.0
          %4167 = vmatprep.subr.mxu0 0.0
          %4168 = vmatpush1.msra.mxu0 0.0
          %4169 = vmatprep.subr.mxu0 0.0
          %4170 = vmatpush1.msra.mxu0 0.0
          %4171 = vmatprep.subr.mxu0 0.0
          %4172 = vmatpush1.msra.mxu0 0.0
          %4173 = vmatprep.subr.mxu0 0.0
          %4174 = vmatpush1.msra.mxu0 0.0
          %4175 = vmatprep.subr.mxu0 0.0
          %4176 = vmatpush1.msra.mxu0 0.0
          %4177 = vmatprep.subr.mxu0 0.0
          %4178 = vmatpush1.msra.mxu0 0.0
          %4179 = vmatprep.subr.mxu0 0.0
          %4180 = vmatpush1.msra.mxu0 0.0
          %4181 = vmatprep.subr.mxu0 0.0
          %4182 = vmatpush1.msra.mxu0 0.0
          %4183 = vmatprep.subr.mxu0 0.0
          %4184 = vmatpush1.msra.mxu0 0.0
          %4185 = vmatprep.subr.mxu0 0.0
          %4186 = vmatpush1.msra.mxu0 0.0
          %4187 = vmatprep.subr.mxu0 0.0
          %4188 = vmatpush1.msra.mxu0 0.0
          %4189 = vmatprep.subr.mxu0 0.0
          %4190 = vmatpush1.msra.mxu0 0.0
          %4191 = vmatprep.subr.mxu0 0.0
          %4192 = vmatpush1.msra.mxu0 0.0
          %4193 = vmatprep.subr.mxu0 0.0
          %4194 = vmatpush1.msra.mxu0 0.0
          %4195 = vmatprep.subr.mxu0 0.0
          %4196 = vmatpush1.msra.mxu0 0.0
          %4197 = vmatprep.subr.mxu0 0.0
          %4198 = vmatpush1.msra.mxu0 0.0
          %4199 = vmatprep.mubr.f32.mxu0 0.0
          %4200 = vmatmul.mubr.f32.gmra.mrb[0].mxu0 %v3972
          %v4201 = vpop.f32.mrb[0].mxu0
          %v4202 = vadd.f32 0.0, %v4201
          %v4203 = vpop.f32.mrb[0].mxu0
          %4204 = vdwg.mxu0
          %v4205 = vmul.f32 %v3163, %v4202
          %v4206 = vadd.f32 %v4125, %v4205
          %s4207 = scalar_lea.vmem [#allocation17], 48
          %v4208 = vld [vmem:[%s4207] sm:$0xf]
          %v4209 = vld [vmem:[%s4207 + $0x4] sm:$0xf]
          %v4210 = vld [vmem:[%s4207 + $0x8] sm:$0xf]
          %v4211 = vld [vmem:[%s4207 + $0xc] sm:$0xf]
          %v4212 = vunpack.c.l.bf16 %v4208
          %v4213 = vunpack.c.l.bf16 %v4209
          %v4214 = vunpack.c.l.bf16 %v4210
          %v4215 = vunpack.c.l.bf16 %v4211
          %4216 = vmatprep.subr.mxu0 0.0
          %4217 = vmatpush1.msra.mxu0 %v4212
          %4218 = vmatprep.subr.mxu0 0.0
          %4219 = vmatpush1.msra.mxu0 %v4213
          %4220 = vmatprep.subr.mxu0 0.0
          %4221 = vmatpush1.msra.mxu0 %v4214
          %4222 = vmatprep.subr.mxu0 0.0
          %4223 = vmatpush1.msra.mxu0 %v4215
          %4224 = vmatprep.subr.mxu0 0.0
          %4225 = vmatpush1.msra.mxu0 0.0
          %4226 = vmatprep.subr.mxu0 0.0
          %4227 = vmatpush1.msra.mxu0 0.0
          %4228 = vmatprep.subr.mxu0 0.0
          %4229 = vmatpush1.msra.mxu0 0.0
          %4230 = vmatprep.subr.mxu0 0.0
          %4231 = vmatpush1.msra.mxu0 0.0
          %4232 = vmatprep.subr.mxu0 0.0
          %4233 = vmatpush1.msra.mxu0 0.0
          %4234 = vmatprep.subr.mxu0 0.0
          %4235 = vmatpush1.msra.mxu0 0.0
          %4236 = vmatprep.subr.mxu0 0.0
          %4237 = vmatpush1.msra.mxu0 0.0
          %4238 = vmatprep.subr.mxu0 0.0
          %4239 = vmatpush1.msra.mxu0 0.0
          %4240 = vmatprep.subr.mxu0 0.0
          %4241 = vmatpush1.msra.mxu0 0.0
          %4242 = vmatprep.subr.mxu0 0.0
          %4243 = vmatpush1.msra.mxu0 0.0
          %4244 = vmatprep.subr.mxu0 0.0
          %4245 = vmatpush1.msra.mxu0 0.0
          %4246 = vmatprep.subr.mxu0 0.0
          %4247 = vmatpush1.msra.mxu0 0.0
          %4248 = vmatprep.subr.mxu0 0.0
          %4249 = vmatpush1.msra.mxu0 0.0
          %4250 = vmatprep.subr.mxu0 0.0
          %4251 = vmatpush1.msra.mxu0 0.0
          %4252 = vmatprep.subr.mxu0 0.0
          %4253 = vmatpush1.msra.mxu0 0.0
          %4254 = vmatprep.subr.mxu0 0.0
          %4255 = vmatpush1.msra.mxu0 0.0
          %4256 = vmatprep.subr.mxu0 0.0
          %4257 = vmatpush1.msra.mxu0 0.0
          %4258 = vmatprep.subr.mxu0 0.0
          %4259 = vmatpush1.msra.mxu0 0.0
          %4260 = vmatprep.subr.mxu0 0.0
          %4261 = vmatpush1.msra.mxu0 0.0
          %4262 = vmatprep.subr.mxu0 0.0
          %4263 = vmatpush1.msra.mxu0 0.0
          %4264 = vmatprep.subr.mxu0 0.0
          %4265 = vmatpush1.msra.mxu0 0.0
          %4266 = vmatprep.subr.mxu0 0.0
          %4267 = vmatpush1.msra.mxu0 0.0
          %4268 = vmatprep.subr.mxu0 0.0
          %4269 = vmatpush1.msra.mxu0 0.0
          %4270 = vmatprep.subr.mxu0 0.0
          %4271 = vmatpush1.msra.mxu0 0.0
          %4272 = vmatprep.subr.mxu0 0.0
          %4273 = vmatpush1.msra.mxu0 0.0
          %4274 = vmatprep.subr.mxu0 0.0
          %4275 = vmatpush1.msra.mxu0 0.0
          %4276 = vmatprep.subr.mxu0 0.0
          %4277 = vmatpush1.msra.mxu0 0.0
          %4278 = vmatprep.subr.mxu0 0.0
          %4279 = vmatpush1.msra.mxu0 0.0
          %4280 = vmatprep.mubr.f32.mxu0 0.0
          %4281 = vmatmul.mubr.f32.gmra.mrb[0].mxu0 %v3972
          %v4282 = vpop.f32.mrb[0].mxu0
          %v4283 = vadd.f32 0.0, %v4282
          %v4284 = vpop.f32.mrb[0].mxu0
          %4285 = vdwg.mxu0
          %v4286 = vmul.f32 %v3171, %v4283
          %v4287 = vadd.f32 %v4206, %v4286
          %v4288 = vld [vmem:[#allocation19] sm:$0x1]
          %v4289 = vmul.f32 %v3152, %v4288
          %s4290 = scalar_lea.vmem [#allocation19], 1
          %v4291 = vld [vmem:[%s4290] sm:$0x1]
          %v4292 = vmul.f32 %v3155, %v4291
          %v4293 = vadd.f32 %v4289, %v4292
          %s4294 = scalar_lea.vmem [#allocation19], 2
          %v4295 = vld [vmem:[%s4294] sm:$0x1]
          %v4296 = vmul.f32 %v3163, %v4295
          %v4297 = vadd.f32 %v4293, %v4296
          %s4298 = scalar_lea.vmem [#allocation19], 3
          %v4299 = vld [vmem:[%s4298] sm:$0x1]
          %v4300 = vmul.f32 %v3171, %v4299
          %v4301 = vadd.f32 %v4297, %v4300
          %v4303 = vlaneseq
          %v4304 = vshrl.u32 %v4303, 7
          %v4305 = vsub.s32 0, %v4304
          %v4306 = vrot.slane %v4301, %v4305
          %v4308 = vadd.f32 %v4287, %v4306
          %4309 = vst [vmem:[#allocation20] sm:$0x3] %v4308
        $region108: #{tpu_custom_call.1} parent=59 // pred_fallthru
          _
        // Predicated region
        $region109: #{tpu_custom_call.1} parent=59 // pred_check
          %p4310 = pneg %p265
        $region110: #{tpu_custom_call.1} parent=59 // pred_check_branch
          %4312 = sbr.rel (%p4310) target = $region112
        $region111: #{tpu_custom_call.1} parent=59 // pred_region
          %s4314 = ssub.s32 32, 32
          %4315 = vsyncadd [#allocation5], %s4314
          %s4317 = sshll.u32 [#allocation20], 4
          %s4318 = int_to_ptr.vmem [resolvable:$true] %s4317
          %4320 = dma.vmem_to_hbm [thread:$0]  %s4318, 32, %s10, [#allocation5]
        $region112: #{tpu_custom_call.1} parent=59 // pred_fallthru
          _
        // Predicated region
        $region113: #{tpu_custom_call.1} parent=59 // pred_check
          %p4321 = pneg %p265
        $region114: #{tpu_custom_call.1} parent=59 // pred_check_branch
          %4323 = sbr.rel (%p4321) target = $region116
        $region115: #{tpu_custom_call.1} parent=59 // pred_region
          %4324 = dma.done [#allocation5], 32
        $region116: #{tpu_custom_call.1} parent=59 // pred_fallthru
          _
      $region60: #{tpu_custom_call.1} parent=5 // pred_fallthru
        _
      %p4325 = scmp.le.s32.totalorder 2, %s27
      // Predicated region
      $region117: #{tpu_custom_call.1} parent=5 // pred_check
        %p4326 = pneg %p4325
      $region118: #{tpu_custom_call.1} parent=5 // pred_check_branch
        %4328 = sbr.rel (%p4326) target = $region120
      $region119: #{tpu_custom_call.1} parent=5 // pred_region
        %s4329 = ssub.s32 %s27, 2
      $region120: #{tpu_custom_call.1} parent=5 // pred_fallthru
        _
    $region6: #{tpu_custom_call.1} parent=1 // loop_footer
      %s31 = sadd.s32 1, %s27
    $region7: #{tpu_custom_call.1} parent=1 // loop_footer_branch
      %26 = sbr.rel target = $region3
    $region8: #{tpu_custom_call.1} parent=1 // loop_exit
      _
    %4330 = vsyncpa [#allocation4], 1
    %s4331 = scalar_lea.sflag [#allocation4], 1
    %4332 = vsyncpa %s4331, 1
    %4333 = vsyncpa [#allocation9], 1
    %s4334 = scalar_lea.sflag [#allocation9], 1
    %4335 = vsyncpa %s4334, 1
    %4336 = vsyncpa [#allocation12], 1
    %4337 = vsyncpa [#allocation15], 1
    %4338 = vsyncpa [#allocation18], 1
    %4339 = vsyncpa [#allocation5], 1
    %s4340 = scalar_lea.sflag [#allocation5], 1
    %4341 = vsyncpa %s4340, 1
    %4342 = vsyncpa [#allocation6], 1
    %s4343 = scalar_lea.sflag [#allocation6], 1
    %4344 = vsyncpa %s4343, 1

</llo_original>
